<compile_context>
chip_gen: v7x
topology: tpu7x:2x2x1
jax: 0.10.0
libtpu: 0.0.40
codegen_flags: <defaults>
</compile_context>

<pallas_src>
import functools

import jax
import jax.numpy as jnp
import numpy as np
from jax.experimental import pallas as pl
from jax.experimental.pallas import tpu as pltpu


def decoder_half_kernel(B, S, E, H, L,
                        x_ref, wqkv_ref, bqkv_ref, wo_ref, bo_ref,
                        g_ref, bt_ref, wout_ref, bout_ref, o_ref):
    """Whole ESMDecoderHalf forward in one kernel invocation (no grid).

    All weights are tiny and fully VMEM-resident; the layer loop is a static
    Python `for` (layers are strictly serial and L is small).  The attention
    score scale is pre-folded into the Q weights/bias on the host.
    """
    Dh = E // H

    # Activations with batch folded into the matmul M dimension.
    y = x_ref[...].reshape(B * S, E)                       # (B*S, E)

    for l in range(L):  # static; use lax.fori_loop + dynamic ref index if L grows
        # --- fused QKV projection over all B*S rows (one MXU push) -----------
        qkv = (jnp.dot(y, wqkv_ref[l], preferred_element_type=jnp.float32)
               + bqkv_ref[l])                              # (B*S, 3E)
        q = qkv[:, :E]                                     # 1/sqrt(Dh) pre-folded
        k = qkv[:, E:2 * E]
        v = qkv[:, 2 * E:]

        # --- per-head attention, batched over B via 3-D einsums --------------
        head_ctx = []
        for h in range(H):                                 # static, H small
            cs = slice(h * Dh, (h + 1) * Dh)
            qh = q[:, cs].reshape(B, S, Dh)
            kh = k[:, cs].reshape(B, S, Dh)
            vh = v[:, cs].reshape(B, S, Dh)
            s = jnp.einsum("bqd,bkd->bqk", qh, kh,
                           preferred_element_type=jnp.float32)   # (B, S, S)
            s = s - jnp.max(s, axis=-1, keepdims=True)
            p = jnp.exp(s)
            d = jnp.sum(p, axis=-1, keepdims=True)
            # EUP approx reciprocal + one Newton-Raphson step (~f32 accurate,
            # keeps the divide off the VPU critical path).
            r = pl.reciprocal(d, approx=True)
            r = r * (2.0 - d * r)
            p = p * r
            ch = jnp.einsum("bqk,bkd->bqd", p, vh,
                            preferred_element_type=jnp.float32)  # (B, S, Dh)
            head_ctx.append(ch.reshape(B * S, Dh))
        ctx = jnp.concatenate(head_ctx, axis=-1)           # (B*S, E)

        # --- output projection + residual + one-pass LayerNorm ---------------
        attn = (jnp.dot(ctx, wo_ref[l], preferred_element_type=jnp.float32)
                + bo_ref[l])                               # (B*S, E)
        yr = y + attn
        mu = jnp.mean(yr, axis=-1, keepdims=True)
        ms = jnp.mean(yr * yr, axis=-1, keepdims=True)
        var = ms - mu * mu                                 # biased, as nn.LayerNorm
        y = (yr - mu) * jax.lax.rsqrt(var + 1e-5) * g_ref[l] + bt_ref[l]
        # TODO(synk): nn.Dropout(p=0.4) is identity in eval mode; training-mode
        # RNG dropout omitted.

    # --- head: project to 1 column first, then mean over seq -----------------
    proj = jnp.dot(y, wout_ref[...], preferred_element_type=jnp.float32)  # (B*S, 1)
    o_ref[...] = jnp.mean(proj.reshape(B, S, 1), axis=1) + bout_ref[...]  # (B, 1)


def make_params(key, num_layers, embed):
    keys = jax.random.split(key, 10)

    def rnd(k, shape, scale=0.05):
        return scale * jax.random.normal(k, shape, dtype=jnp.float32)

    return dict(
        wq=rnd(keys[0], (num_layers, embed, embed)),
        wk=rnd(keys[1], (num_layers, embed, embed)),
        wv=rnd(keys[2], (num_layers, embed, embed)),
        wo=rnd(keys[3], (num_layers, embed, embed)),
        bq=rnd(keys[4], (num_layers, 1, embed)),
        bk=rnd(keys[5], (num_layers, 1, embed)),
        bv=rnd(keys[6], (num_layers, 1, embed)),
        bo=rnd(keys[7], (num_layers, 1, embed)),
        gamma=jnp.ones((num_layers, 1, embed), jnp.float32),
        beta=jnp.zeros((num_layers, 1, embed), jnp.float32),
        wout=rnd(keys[8], (1, embed)),
        bout=rnd(keys[9], (1, 1)),
    )


def prepare_params(params, num_heads):
    """One-time host-side weight prep (call once, reuse across forwards).

    * QKV fused into one pre-transposed (L, E, 3E) weight and (L, 1, 3E) bias.
    * 1/sqrt(head_dim) attention scale folded into the Q weight & bias.
    * All projection weights pre-transposed so the kernel never transposes.
    """
    E = params["wq"].shape[-1]
    scale = 1.0 / float(np.sqrt(E // num_heads))
    wqkv = jnp.concatenate(
        [jnp.transpose(params["wq"] * scale, (0, 2, 1)),
         jnp.transpose(params["wk"], (0, 2, 1)),
         jnp.transpose(params["wv"], (0, 2, 1))],
        axis=-1)                                                  # (L, E, 3E)
    bqkv = jnp.concatenate(
        [params["bq"] * scale, params["bk"], params["bv"]],
        axis=-1)                                                  # (L, 1, 3E)
    return dict(
        wqkv=wqkv,
        bqkv=bqkv,
        wo=jnp.transpose(params["wo"], (0, 2, 1)),                # (L, E, E)
        bo=params["bo"],
        gamma=params["gamma"],
        beta=params["beta"],
        wout=params["wout"].T,                                    # (E, 1)
        bout=params["bout"],
    )


@functools.partial(jax.jit, static_argnames=("num_heads",))
def esm_decoder_half(x, prepped, num_heads):
    B, S, E = x.shape
    L = prepped["wqkv"].shape[0]

    kernel = functools.partial(decoder_half_kernel, B, S, E, num_heads, L)
    vmem_spec = pl.BlockSpec(memory_space=pltpu.MemorySpace.VMEM)

    # Single grid-less invocation: total (lane-padded) operand footprint is
    # well under 0.5 MiB; 8 MiB scoped VMEM documents the budget and leaves
    # ample headroom for compiler scratch (far below v7x's 64 MiB physical).
    return pl.pallas_call(
        kernel,
        out_shape=jax.ShapeDtypeStruct((B, 1), jnp.float32),
        in_specs=[vmem_spec] * 9,
        out_specs=vmem_spec,
        compiler_params=pltpu.CompilerParams(vmem_limit_bytes=8 * 1024 * 1024),
    )(x, prepped["wqkv"], prepped["bqkv"], prepped["wo"], prepped["bo"],
      prepped["gamma"], prepped["beta"], prepped["wout"], prepped["bout"])


def reference(x, p, num_heads):
    """Pure-JAX reference matching PyTorch ESMDecoderHalf (eval mode)."""
    B, S, E = x.shape
    L = p["wq"].shape[0]
    Dh = E // num_heads
    scale = 1.0 / float(np.sqrt(Dh))
    y = x
    for l in range(L):
        q = jnp.einsum("bse,fe->bsf", y, p["wq"][l]) + p["bq"][l]
        k = jnp.einsum("bse,fe->bsf", y, p["wk"][l]) + p["bk"][l]
        v = jnp.einsum("bse,fe->bsf", y, p["wv"][l]) + p["bv"][l]
        qh = q.reshape(B, S, num_heads, Dh)
        kh = k.reshape(B, S, num_heads, Dh)
        vh = v.reshape(B, S, num_heads, Dh)
        s = jnp.einsum("bqhd,bkhd->bhqk", qh, kh) * scale
        pr = jax.nn.softmax(s, axis=-1)
        ctx = jnp.einsum("bhqk,bkhd->bqhd", pr, vh).reshape(B, S, E)
        attn = jnp.einsum("bse,fe->bsf", ctx, p["wo"][l]) + p["bo"][l]
        y = y + attn
        mu = y.mean(-1, keepdims=True)
        var = ((y - mu) ** 2).mean(-1, keepdims=True)
        y = (y - mu) / jnp.sqrt(var + 1e-5) * p["gamma"][l] + p["beta"][l]
    m = y.mean(axis=1)
    return m @ p["wout"].T + p["bout"]


if __name__ == "__main__":
    # Small shapes consistent with the module: (batch=2, seq=8, embed=32),
    # 2 layers, 4 heads (embed must divide by num_heads).
    B, S, E = 2, 8, 32
    NUM_LAYERS, NUM_HEADS = 2, 4

    key = jax.random.PRNGKey(0)
    kx, kp = jax.random.split(key)
    x = jax.random.normal(kx, (B, S, E), dtype=jnp.float32)
    params = make_params(kp, NUM_LAYERS, E)

    # Weight prep hoisted out of the forward path: done once, reused per call.
    prepped = prepare_params(params, NUM_HEADS)

    out = jax.block_until_ready(esm_decoder_half(x, prepped, num_heads=NUM_HEADS))
    ref = jax.block_until_ready(reference(x, params, NUM_HEADS))

    assert out.shape == (B, 1)
    np.testing.assert_allclose(np.asarray(out), np.asarray(ref),
                               rtol=1e-4, atol=1e-4)
    print("KERNEL_OK")
</pallas_src>

<mosaic_0001>
module attributes {stable_mosaic.version = 11 : i64} {
  func.func @decoder_half_kernel(%arg0: memref<2x8x32xf32, #tpu.memory_space<vmem>>, %arg1: memref<2x32x96xf32, #tpu.memory_space<vmem>>, %arg2: memref<2x1x96xf32, #tpu.memory_space<vmem>>, %arg3: memref<2x32x32xf32, #tpu.memory_space<vmem>>, %arg4: memref<2x1x32xf32, #tpu.memory_space<vmem>>, %arg5: memref<2x1x32xf32, #tpu.memory_space<vmem>>, %arg6: memref<2x1x32xf32, #tpu.memory_space<vmem>>, %arg7: memref<32x1xf32, #tpu.memory_space<vmem>>, %arg8: memref<1x1xf32, #tpu.memory_space<vmem>>, %arg9: memref<2x1xf32, #tpu.memory_space<vmem>>) attributes {dimension_semantics = [], scalar_prefetch = 0 : i64, scratch_operands = 0 : i64, tpu.core_type = #tpu.core_type<tc>} {
    %c0 = arith.constant 0 : index
    %c0_0 = arith.constant 0 : index
    %c0_1 = arith.constant 0 : index
    %0 = vector.load %arg0[%c0, %c0_0, %c0_1] : memref<2x8x32xf32, #tpu.memory_space<vmem>>, vector<2x8x32xf32>
    %1 = vector.shape_cast %0 : vector<2x8x32xf32> to vector<16x32xf32>
    %c0_2 = arith.constant 0 : index
    %c0_3 = arith.constant 0 : index
    %c0_4 = arith.constant 0 : index
    %2 = vector.load %arg1[%c0_2, %c0_3, %c0_4] : memref<2x32x96xf32, #tpu.memory_space<vmem>>, vector<1x32x96xf32>
    %3 = vector.shape_cast %2 : vector<1x32x96xf32> to vector<32x96xf32>
    %cst = arith.constant dense<0.000000e+00> : vector<16x96xf32>
    %4 = tpu.matmul %1, %3, %cst {dimension_numbers = #tpu.dot_dimension_numbers<[1], [0], [0], [1], [0, 0, 1, 1], [], []>} : vector<16x32xf32>, vector<32x96xf32>, vector<16x96xf32> -> vector<16x96xf32>
    %c0_5 = arith.constant 0 : index
    %c0_6 = arith.constant 0 : index
    %c0_7 = arith.constant 0 : index
    %5 = vector.load %arg2[%c0_5, %c0_6, %c0_7] : memref<2x1x96xf32, #tpu.memory_space<vmem>>, vector<1x1x96xf32>
    %6 = vector.shape_cast %5 : vector<1x1x96xf32> to vector<1x96xf32>
    %7 = vector.broadcast %6 : vector<1x96xf32> to vector<16x96xf32>
    %8 = arith.addf %4, %7 : vector<16x96xf32>
    %9 = vector.extract_strided_slice %8 {offsets = [0, 0], sizes = [16, 32], strides = [1, 1]} : vector<16x96xf32> to vector<16x32xf32>
    %10 = vector.extract_strided_slice %8 {offsets = [0, 32], sizes = [16, 32], strides = [1, 1]} : vector<16x96xf32> to vector<16x32xf32>
    %11 = vector.extract_strided_slice %8 {offsets = [0, 64], sizes = [16, 32], strides = [1, 1]} : vector<16x96xf32> to vector<16x32xf32>
    %12 = vector.extract_strided_slice %9 {offsets = [0, 0], sizes = [16, 8], strides = [1, 1]} : vector<16x32xf32> to vector<16x8xf32>
    %13 = vector.shape_cast %12 : vector<16x8xf32> to vector<2x8x8xf32>
    %14 = vector.extract_strided_slice %10 {offsets = [0, 0], sizes = [16, 8], strides = [1, 1]} : vector<16x32xf32> to vector<16x8xf32>
    %15 = vector.shape_cast %14 : vector<16x8xf32> to vector<2x8x8xf32>
    %16 = vector.extract_strided_slice %11 {offsets = [0, 0], sizes = [16, 8], strides = [1, 1]} : vector<16x32xf32> to vector<16x8xf32>
    %17 = vector.shape_cast %16 : vector<16x8xf32> to vector<2x8x8xf32>
    "tpu.trace_start"() <{level = 10 : i32, message = "bqd,bkd->bqk"}> : () -> ()
    %cst_8 = arith.constant dense<0.000000e+00> : vector<2x8x8xf32>
    %18 = tpu.matmul %13, %15, %cst_8 {dimension_numbers = #tpu.dot_dimension_numbers<[2], [2], [1], [1], [0, 0, 0, 1, 1, 1], [0], [0]>} : vector<2x8x8xf32>, vector<2x8x8xf32>, vector<2x8x8xf32> -> vector<2x8x8xf32>
    "tpu.trace_stop"() : () -> ()
    %cst_9 = arith.constant dense<0xFF800000> : vector<2x8xf32>
    %19 = vector.multi_reduction <maximumf>, %18, %cst_9 [2] : vector<2x8x8xf32> to vector<2x8xf32>
    %20 = vector.shape_cast %19 : vector<2x8xf32> to vector<2x8x1xf32>
    %21 = vector.broadcast %20 : vector<2x8x1xf32> to vector<2x8x8xf32>
    %22 = arith.subf %18, %21 : vector<2x8x8xf32>
    %23 = math.exp %22 : vector<2x8x8xf32>
    %cst_10 = arith.constant dense<0.000000e+00> : vector<2x8xf32>
    %24 = vector.multi_reduction <add>, %23, %cst_10 [2] : vector<2x8x8xf32> to vector<2x8xf32>
    %25 = vector.shape_cast %24 : vector<2x8xf32> to vector<2x8x1xf32>
    %26 = tpu.reciprocal %25 {approx = true} : vector<2x8x1xf32> -> vector<2x8x1xf32>
    %27 = arith.mulf %25, %26 : vector<2x8x1xf32>
    %cst_11 = arith.constant 2.000000e+00 : f32
    %28 = vector.broadcast %cst_11 : f32 to vector<2x8x1xf32>
    %29 = arith.subf %28, %27 : vector<2x8x1xf32>
    %30 = arith.mulf %26, %29 : vector<2x8x1xf32>
    %31 = vector.broadcast %30 : vector<2x8x1xf32> to vector<2x8x8xf32>
    %32 = arith.mulf %23, %31 : vector<2x8x8xf32>
    "tpu.trace_start"() <{level = 10 : i32, message = "bqk,bkd->bqd"}> : () -> ()
    %cst_12 = arith.constant dense<0.000000e+00> : vector<2x8x8xf32>
    %33 = tpu.matmul %32, %17, %cst_12 {dimension_numbers = #tpu.dot_dimension_numbers<[2], [1], [1], [2], [0, 0, 0, 1, 1, 2], [0], [0]>} : vector<2x8x8xf32>, vector<2x8x8xf32>, vector<2x8x8xf32> -> vector<2x8x8xf32>
    "tpu.trace_stop"() : () -> ()
    %34 = vector.shape_cast %33 : vector<2x8x8xf32> to vector<16x8xf32>
    %35 = vector.extract_strided_slice %9 {offsets = [0, 8], sizes = [16, 8], strides = [1, 1]} : vector<16x32xf32> to vector<16x8xf32>
    %36 = vector.shape_cast %35 : vector<16x8xf32> to vector<2x8x8xf32>
    %37 = vector.extract_strided_slice %10 {offsets = [0, 8], sizes = [16, 8], strides = [1, 1]} : vector<16x32xf32> to vector<16x8xf32>
    %38 = vector.shape_cast %37 : vector<16x8xf32> to vector<2x8x8xf32>
    %39 = vector.extract_strided_slice %11 {offsets = [0, 8], sizes = [16, 8], strides = [1, 1]} : vector<16x32xf32> to vector<16x8xf32>
    %40 = vector.shape_cast %39 : vector<16x8xf32> to vector<2x8x8xf32>
    "tpu.trace_start"() <{level = 10 : i32, message = "bqd,bkd->bqk"}> : () -> ()
    %cst_13 = arith.constant dense<0.000000e+00> : vector<2x8x8xf32>
    %41 = tpu.matmul %36, %38, %cst_13 {dimension_numbers = #tpu.dot_dimension_numbers<[2], [2], [1], [1], [0, 0, 0, 1, 1, 1], [0], [0]>} : vector<2x8x8xf32>, vector<2x8x8xf32>, vector<2x8x8xf32> -> vector<2x8x8xf32>
    "tpu.trace_stop"() : () -> ()
    %cst_14 = arith.constant dense<0xFF800000> : vector<2x8xf32>
    %42 = vector.multi_reduction <maximumf>, %41, %cst_14 [2] : vector<2x8x8xf32> to vector<2x8xf32>
    %43 = vector.shape_cast %42 : vector<2x8xf32> to vector<2x8x1xf32>
    %44 = vector.broadcast %43 : vector<2x8x1xf32> to vector<2x8x8xf32>
    %45 = arith.subf %41, %44 : vector<2x8x8xf32>
    %46 = math.exp %45 : vector<2x8x8xf32>
    %cst_15 = arith.constant dense<0.000000e+00> : vector<2x8xf32>
    %47 = vector.multi_reduction <add>, %46, %cst_15 [2] : vector<2x8x8xf32> to vector<2x8xf32>
    %48 = vector.shape_cast %47 : vector<2x8xf32> to vector<2x8x1xf32>
    %49 = tpu.reciprocal %48 {approx = true} : vector<2x8x1xf32> -> vector<2x8x1xf32>
    %50 = arith.mulf %48, %49 : vector<2x8x1xf32>
    %cst_16 = arith.constant 2.000000e+00 : f32
    %51 = vector.broadcast %cst_16 : f32 to vector<2x8x1xf32>
    %52 = arith.subf %51, %50 : vector<2x8x1xf32>
    %53 = arith.mulf %49, %52 : vector<2x8x1xf32>
    %54 = vector.broadcast %53 : vector<2x8x1xf32> to vector<2x8x8xf32>
    %55 = arith.mulf %46, %54 : vector<2x8x8xf32>
    "tpu.trace_start"() <{level = 10 : i32, message = "bqk,bkd->bqd"}> : () -> ()
    %cst_17 = arith.constant dense<0.000000e+00> : vector<2x8x8xf32>
    %56 = tpu.matmul %55, %40, %cst_17 {dimension_numbers = #tpu.dot_dimension_numbers<[2], [1], [1], [2], [0, 0, 0, 1, 1, 2], [0], [0]>} : vector<2x8x8xf32>, vector<2x8x8xf32>, vector<2x8x8xf32> -> vector<2x8x8xf32>
    "tpu.trace_stop"() : () -> ()
    %57 = vector.shape_cast %56 : vector<2x8x8xf32> to vector<16x8xf32>
    %58 = vector.extract_strided_slice %9 {offsets = [0, 16], sizes = [16, 8], strides = [1, 1]} : vector<16x32xf32> to vector<16x8xf32>
    %59 = vector.shape_cast %58 : vector<16x8xf32> to vector<2x8x8xf32>
    %60 = vector.extract_strided_slice %10 {offsets = [0, 16], sizes = [16, 8], strides = [1, 1]} : vector<16x32xf32> to vector<16x8xf32>
    %61 = vector.shape_cast %60 : vector<16x8xf32> to vector<2x8x8xf32>
    %62 = vector.extract_strided_slice %11 {offsets = [0, 16], sizes = [16, 8], strides = [1, 1]} : vector<16x32xf32> to vector<16x8xf32>
    %63 = vector.shape_cast %62 : vector<16x8xf32> to vector<2x8x8xf32>
    "tpu.trace_start"() <{level = 10 : i32, message = "bqd,bkd->bqk"}> : () -> ()
    %cst_18 = arith.constant dense<0.000000e+00> : vector<2x8x8xf32>
    %64 = tpu.matmul %59, %61, %cst_18 {dimension_numbers = #tpu.dot_dimension_numbers<[2], [2], [1], [1], [0, 0, 0, 1, 1, 1], [0], [0]>} : vector<2x8x8xf32>, vector<2x8x8xf32>, vector<2x8x8xf32> -> vector<2x8x8xf32>
    "tpu.trace_stop"() : () -> ()
    %cst_19 = arith.constant dense<0xFF800000> : vector<2x8xf32>
    %65 = vector.multi_reduction <maximumf>, %64, %cst_19 [2] : vector<2x8x8xf32> to vector<2x8xf32>
    %66 = vector.shape_cast %65 : vector<2x8xf32> to vector<2x8x1xf32>
    %67 = vector.broadcast %66 : vector<2x8x1xf32> to vector<2x8x8xf32>
    %68 = arith.subf %64, %67 : vector<2x8x8xf32>
    %69 = math.exp %68 : vector<2x8x8xf32>
    %cst_20 = arith.constant dense<0.000000e+00> : vector<2x8xf32>
    %70 = vector.multi_reduction <add>, %69, %cst_20 [2] : vector<2x8x8xf32> to vector<2x8xf32>
    %71 = vector.shape_cast %70 : vector<2x8xf32> to vector<2x8x1xf32>
    %72 = tpu.reciprocal %71 {approx = true} : vector<2x8x1xf32> -> vector<2x8x1xf32>
    %73 = arith.mulf %71, %72 : vector<2x8x1xf32>
    %cst_21 = arith.constant 2.000000e+00 : f32
    %74 = vector.broadcast %cst_21 : f32 to vector<2x8x1xf32>
    %75 = arith.subf %74, %73 : vector<2x8x1xf32>
    %76 = arith.mulf %72, %75 : vector<2x8x1xf32>
    %77 = vector.broadcast %76 : vector<2x8x1xf32> to vector<2x8x8xf32>
    %78 = arith.mulf %69, %77 : vector<2x8x8xf32>
    "tpu.trace_start"() <{level = 10 : i32, message = "bqk,bkd->bqd"}> : () -> ()
    %cst_22 = arith.constant dense<0.000000e+00> : vector<2x8x8xf32>
    %79 = tpu.matmul %78, %63, %cst_22 {dimension_numbers = #tpu.dot_dimension_numbers<[2], [1], [1], [2], [0, 0, 0, 1, 1, 2], [0], [0]>} : vector<2x8x8xf32>, vector<2x8x8xf32>, vector<2x8x8xf32> -> vector<2x8x8xf32>
    "tpu.trace_stop"() : () -> ()
    %80 = vector.shape_cast %79 : vector<2x8x8xf32> to vector<16x8xf32>
    %81 = vector.extract_strided_slice %9 {offsets = [0, 24], sizes = [16, 8], strides = [1, 1]} : vector<16x32xf32> to vector<16x8xf32>
    %82 = vector.shape_cast %81 : vector<16x8xf32> to vector<2x8x8xf32>
    %83 = vector.extract_strided_slice %10 {offsets = [0, 24], sizes = [16, 8], strides = [1, 1]} : vector<16x32xf32> to vector<16x8xf32>
    %84 = vector.shape_cast %83 : vector<16x8xf32> to vector<2x8x8xf32>
    %85 = vector.extract_strided_slice %11 {offsets = [0, 24], sizes = [16, 8], strides = [1, 1]} : vector<16x32xf32> to vector<16x8xf32>
    %86 = vector.shape_cast %85 : vector<16x8xf32> to vector<2x8x8xf32>
    "tpu.trace_start"() <{level = 10 : i32, message = "bqd,bkd->bqk"}> : () -> ()
    %cst_23 = arith.constant dense<0.000000e+00> : vector<2x8x8xf32>
    %87 = tpu.matmul %82, %84, %cst_23 {dimension_numbers = #tpu.dot_dimension_numbers<[2], [2], [1], [1], [0, 0, 0, 1, 1, 1], [0], [0]>} : vector<2x8x8xf32>, vector<2x8x8xf32>, vector<2x8x8xf32> -> vector<2x8x8xf32>
    "tpu.trace_stop"() : () -> ()
    %cst_24 = arith.constant dense<0xFF800000> : vector<2x8xf32>
    %88 = vector.multi_reduction <maximumf>, %87, %cst_24 [2] : vector<2x8x8xf32> to vector<2x8xf32>
    %89 = vector.shape_cast %88 : vector<2x8xf32> to vector<2x8x1xf32>
    %90 = vector.broadcast %89 : vector<2x8x1xf32> to vector<2x8x8xf32>
    %91 = arith.subf %87, %90 : vector<2x8x8xf32>
    %92 = math.exp %91 : vector<2x8x8xf32>
    %cst_25 = arith.constant dense<0.000000e+00> : vector<2x8xf32>
    %93 = vector.multi_reduction <add>, %92, %cst_25 [2] : vector<2x8x8xf32> to vector<2x8xf32>
    %94 = vector.shape_cast %93 : vector<2x8xf32> to vector<2x8x1xf32>
    %95 = tpu.reciprocal %94 {approx = true} : vector<2x8x1xf32> -> vector<2x8x1xf32>
    %96 = arith.mulf %94, %95 : vector<2x8x1xf32>
    %cst_26 = arith.constant 2.000000e+00 : f32
    %97 = vector.broadcast %cst_26 : f32 to vector<2x8x1xf32>
    %98 = arith.subf %97, %96 : vector<2x8x1xf32>
    %99 = arith.mulf %95, %98 : vector<2x8x1xf32>
    %100 = vector.broadcast %99 : vector<2x8x1xf32> to vector<2x8x8xf32>
    %101 = arith.mulf %92, %100 : vector<2x8x8xf32>
    "tpu.trace_start"() <{level = 10 : i32, message = "bqk,bkd->bqd"}> : () -> ()
    %cst_27 = arith.constant dense<0.000000e+00> : vector<2x8x8xf32>
    %102 = tpu.matmul %101, %86, %cst_27 {dimension_numbers = #tpu.dot_dimension_numbers<[2], [1], [1], [2], [0, 0, 0, 1, 1, 2], [0], [0]>} : vector<2x8x8xf32>, vector<2x8x8xf32>, vector<2x8x8xf32> -> vector<2x8x8xf32>
    "tpu.trace_stop"() : () -> ()
    %103 = vector.shape_cast %102 : vector<2x8x8xf32> to vector<16x8xf32>
    %104 = tpu.concatenate %34, %57, %80, %103 in 1 : vector<16x8xf32>, vector<16x8xf32>, vector<16x8xf32>, vector<16x8xf32> -> vector<16x32xf32>
    %c0_28 = arith.constant 0 : index
    %c0_29 = arith.constant 0 : index
    %c0_30 = arith.constant 0 : index
    %105 = vector.load %arg3[%c0_28, %c0_29, %c0_30] : memref<2x32x32xf32, #tpu.memory_space<vmem>>, vector<1x32x32xf32>
    %106 = vector.shape_cast %105 : vector<1x32x32xf32> to vector<32x32xf32>
    %cst_31 = arith.constant dense<0.000000e+00> : vector<16x32xf32>
    %107 = tpu.matmul %104, %106, %cst_31 {dimension_numbers = #tpu.dot_dimension_numbers<[1], [0], [0], [1], [0, 0, 1, 1], [], []>} : vector<16x32xf32>, vector<32x32xf32>, vector<16x32xf32> -> vector<16x32xf32>
    %c0_32 = arith.constant 0 : index
    %c0_33 = arith.constant 0 : index
    %c0_34 = arith.constant 0 : index
    %108 = vector.load %arg4[%c0_32, %c0_33, %c0_34] : memref<2x1x32xf32, #tpu.memory_space<vmem>>, vector<1x1x32xf32>
    %109 = vector.shape_cast %108 : vector<1x1x32xf32> to vector<1x32xf32>
    %110 = vector.broadcast %109 : vector<1x32xf32> to vector<16x32xf32>
    %111 = arith.addf %107, %110 : vector<16x32xf32>
    %112 = arith.addf %1, %111 : vector<16x32xf32>
    %cst_35 = arith.constant dense<0.000000e+00> : vector<16xf32>
    %113 = vector.multi_reduction <add>, %112, %cst_35 [1] : vector<16x32xf32> to vector<16xf32>
    %114 = vector.shape_cast %113 : vector<16xf32> to vector<16x1xf32>
    %cst_36 = arith.constant 3.200000e+01 : f32
    %115 = vector.broadcast %cst_36 : f32 to vector<16x1xf32>
    %116 = arith.divf %114, %115 : vector<16x1xf32>
    %117 = arith.mulf %112, %112 : vector<16x32xf32>
    %cst_37 = arith.constant dense<0.000000e+00> : vector<16xf32>
    %118 = vector.multi_reduction <add>, %117, %cst_37 [1] : vector<16x32xf32> to vector<16xf32>
    %119 = vector.shape_cast %118 : vector<16xf32> to vector<16x1xf32>
    %cst_38 = arith.constant 3.200000e+01 : f32
    %120 = vector.broadcast %cst_38 : f32 to vector<16x1xf32>
    %121 = arith.divf %119, %120 : vector<16x1xf32>
    %122 = arith.mulf %116, %116 : vector<16x1xf32>
    %123 = arith.subf %121, %122 : vector<16x1xf32>
    %124 = vector.broadcast %116 : vector<16x1xf32> to vector<16x32xf32>
    %125 = arith.subf %112, %124 : vector<16x32xf32>
    %cst_39 = arith.constant 9.99999974E-6 : f32
    %126 = vector.broadcast %cst_39 : f32 to vector<16x1xf32>
    %127 = arith.addf %123, %126 : vector<16x1xf32>
    %128 = math.rsqrt %127 : vector<16x1xf32>
    %129 = vector.broadcast %128 : vector<16x1xf32> to vector<16x32xf32>
    %130 = arith.mulf %125, %129 : vector<16x32xf32>
    %c0_40 = arith.constant 0 : index
    %c0_41 = arith.constant 0 : index
    %c0_42 = arith.constant 0 : index
    %131 = vector.load %arg5[%c0_40, %c0_41, %c0_42] : memref<2x1x32xf32, #tpu.memory_space<vmem>>, vector<1x1x32xf32>
    %132 = vector.shape_cast %131 : vector<1x1x32xf32> to vector<1x32xf32>
    %133 = vector.broadcast %132 : vector<1x32xf32> to vector<16x32xf32>
    %134 = arith.mulf %130, %133 : vector<16x32xf32>
    %c0_43 = arith.constant 0 : index
    %c0_44 = arith.constant 0 : index
    %c0_45 = arith.constant 0 : index
    %135 = vector.load %arg6[%c0_43, %c0_44, %c0_45] : memref<2x1x32xf32, #tpu.memory_space<vmem>>, vector<1x1x32xf32>
    %136 = vector.shape_cast %135 : vector<1x1x32xf32> to vector<1x32xf32>
    %137 = vector.broadcast %136 : vector<1x32xf32> to vector<16x32xf32>
    %138 = arith.addf %134, %137 : vector<16x32xf32>
    %c1 = arith.constant 1 : index
    %c0_46 = arith.constant 0 : index
    %c0_47 = arith.constant 0 : index
    %139 = vector.load %arg1[%c1, %c0_46, %c0_47] : memref<2x32x96xf32, #tpu.memory_space<vmem>>, vector<1x32x96xf32>
    %140 = vector.shape_cast %139 : vector<1x32x96xf32> to vector<32x96xf32>
    %cst_48 = arith.constant dense<0.000000e+00> : vector<16x96xf32>
    %141 = tpu.matmul %138, %140, %cst_48 {dimension_numbers = #tpu.dot_dimension_numbers<[1], [0], [0], [1], [0, 0, 1, 1], [], []>} : vector<16x32xf32>, vector<32x96xf32>, vector<16x96xf32> -> vector<16x96xf32>
    %c1_49 = arith.constant 1 : index
    %c0_50 = arith.constant 0 : index
    %c0_51 = arith.constant 0 : index
    %142 = vector.load %arg2[%c1_49, %c0_50, %c0_51] : memref<2x1x96xf32, #tpu.memory_space<vmem>>, vector<1x1x96xf32>
    %143 = vector.shape_cast %142 : vector<1x1x96xf32> to vector<1x96xf32>
    %144 = vector.broadcast %143 : vector<1x96xf32> to vector<16x96xf32>
    %145 = arith.addf %141, %144 : vector<16x96xf32>
    %146 = vector.extract_strided_slice %145 {offsets = [0, 0], sizes = [16, 32], strides = [1, 1]} : vector<16x96xf32> to vector<16x32xf32>
    %147 = vector.extract_strided_slice %145 {offsets = [0, 32], sizes = [16, 32], strides = [1, 1]} : vector<16x96xf32> to vector<16x32xf32>
    %148 = vector.extract_strided_slice %145 {offsets = [0, 64], sizes = [16, 32], strides = [1, 1]} : vector<16x96xf32> to vector<16x32xf32>
    %149 = vector.extract_strided_slice %146 {offsets = [0, 0], sizes = [16, 8], strides = [1, 1]} : vector<16x32xf32> to vector<16x8xf32>
    %150 = vector.shape_cast %149 : vector<16x8xf32> to vector<2x8x8xf32>
    %151 = vector.extract_strided_slice %147 {offsets = [0, 0], sizes = [16, 8], strides = [1, 1]} : vector<16x32xf32> to vector<16x8xf32>
    %152 = vector.shape_cast %151 : vector<16x8xf32> to vector<2x8x8xf32>
    %153 = vector.extract_strided_slice %148 {offsets = [0, 0], sizes = [16, 8], strides = [1, 1]} : vector<16x32xf32> to vector<16x8xf32>
    %154 = vector.shape_cast %153 : vector<16x8xf32> to vector<2x8x8xf32>
    "tpu.trace_start"() <{level = 10 : i32, message = "bqd,bkd->bqk"}> : () -> ()
    %cst_52 = arith.constant dense<0.000000e+00> : vector<2x8x8xf32>
    %155 = tpu.matmul %150, %152, %cst_52 {dimension_numbers = #tpu.dot_dimension_numbers<[2], [2], [1], [1], [0, 0, 0, 1, 1, 1], [0], [0]>} : vector<2x8x8xf32>, vector<2x8x8xf32>, vector<2x8x8xf32> -> vector<2x8x8xf32>
    "tpu.trace_stop"() : () -> ()
    %cst_53 = arith.constant dense<0xFF800000> : vector<2x8xf32>
    %156 = vector.multi_reduction <maximumf>, %155, %cst_53 [2] : vector<2x8x8xf32> to vector<2x8xf32>
    %157 = vector.shape_cast %156 : vector<2x8xf32> to vector<2x8x1xf32>
    %158 = vector.broadcast %157 : vector<2x8x1xf32> to vector<2x8x8xf32>
    %159 = arith.subf %155, %158 : vector<2x8x8xf32>
    %160 = math.exp %159 : vector<2x8x8xf32>
    %cst_54 = arith.constant dense<0.000000e+00> : vector<2x8xf32>
    %161 = vector.multi_reduction <add>, %160, %cst_54 [2] : vector<2x8x8xf32> to vector<2x8xf32>
    %162 = vector.shape_cast %161 : vector<2x8xf32> to vector<2x8x1xf32>
    %163 = tpu.reciprocal %162 {approx = true} : vector<2x8x1xf32> -> vector<2x8x1xf32>
    %164 = arith.mulf %162, %163 : vector<2x8x1xf32>
    %cst_55 = arith.constant 2.000000e+00 : f32
    %165 = vector.broadcast %cst_55 : f32 to vector<2x8x1xf32>
    %166 = arith.subf %165, %164 : vector<2x8x1xf32>
    %167 = arith.mulf %163, %166 : vector<2x8x1xf32>
    %168 = vector.broadcast %167 : vector<2x8x1xf32> to vector<2x8x8xf32>
    %169 = arith.mulf %160, %168 : vector<2x8x8xf32>
    "tpu.trace_start"() <{level = 10 : i32, message = "bqk,bkd->bqd"}> : () -> ()
    %cst_56 = arith.constant dense<0.000000e+00> : vector<2x8x8xf32>
    %170 = tpu.matmul %169, %154, %cst_56 {dimension_numbers = #tpu.dot_dimension_numbers<[2], [1], [1], [2], [0, 0, 0, 1, 1, 2], [0], [0]>} : vector<2x8x8xf32>, vector<2x8x8xf32>, vector<2x8x8xf32> -> vector<2x8x8xf32>
    "tpu.trace_stop"() : () -> ()
    %171 = vector.shape_cast %170 : vector<2x8x8xf32> to vector<16x8xf32>
    %172 = vector.extract_strided_slice %146 {offsets = [0, 8], sizes = [16, 8], strides = [1, 1]} : vector<16x32xf32> to vector<16x8xf32>
    %173 = vector.shape_cast %172 : vector<16x8xf32> to vector<2x8x8xf32>
    %174 = vector.extract_strided_slice %147 {offsets = [0, 8], sizes = [16, 8], strides = [1, 1]} : vector<16x32xf32> to vector<16x8xf32>
    %175 = vector.shape_cast %174 : vector<16x8xf32> to vector<2x8x8xf32>
    %176 = vector.extract_strided_slice %148 {offsets = [0, 8], sizes = [16, 8], strides = [1, 1]} : vector<16x32xf32> to vector<16x8xf32>
    %177 = vector.shape_cast %176 : vector<16x8xf32> to vector<2x8x8xf32>
    "tpu.trace_start"() <{level = 10 : i32, message = "bqd,bkd->bqk"}> : () -> ()
    %cst_57 = arith.constant dense<0.000000e+00> : vector<2x8x8xf32>
    %178 = tpu.matmul %173, %175, %cst_57 {dimension_numbers = #tpu.dot_dimension_numbers<[2], [2], [1], [1], [0, 0, 0, 1, 1, 1], [0], [0]>} : vector<2x8x8xf32>, vector<2x8x8xf32>, vector<2x8x8xf32> -> vector<2x8x8xf32>
    "tpu.trace_stop"() : () -> ()
    %cst_58 = arith.constant dense<0xFF800000> : vector<2x8xf32>
    %179 = vector.multi_reduction <maximumf>, %178, %cst_58 [2] : vector<2x8x8xf32> to vector<2x8xf32>
    %180 = vector.shape_cast %179 : vector<2x8xf32> to vector<2x8x1xf32>
    %181 = vector.broadcast %180 : vector<2x8x1xf32> to vector<2x8x8xf32>
    %182 = arith.subf %178, %181 : vector<2x8x8xf32>
    %183 = math.exp %182 : vector<2x8x8xf32>
    %cst_59 = arith.constant dense<0.000000e+00> : vector<2x8xf32>
    %184 = vector.multi_reduction <add>, %183, %cst_59 [2] : vector<2x8x8xf32> to vector<2x8xf32>
    %185 = vector.shape_cast %184 : vector<2x8xf32> to vector<2x8x1xf32>
    %186 = tpu.reciprocal %185 {approx = true} : vector<2x8x1xf32> -> vector<2x8x1xf32>
    %187 = arith.mulf %185, %186 : vector<2x8x1xf32>
    %cst_60 = arith.constant 2.000000e+00 : f32
    %188 = vector.broadcast %cst_60 : f32 to vector<2x8x1xf32>
    %189 = arith.subf %188, %187 : vector<2x8x1xf32>
    %190 = arith.mulf %186, %189 : vector<2x8x1xf32>
    %191 = vector.broadcast %190 : vector<2x8x1xf32> to vector<2x8x8xf32>
    %192 = arith.mulf %183, %191 : vector<2x8x8xf32>
    "tpu.trace_start"() <{level = 10 : i32, message = "bqk,bkd->bqd"}> : () -> ()
    %cst_61 = arith.constant dense<0.000000e+00> : vector<2x8x8xf32>
    %193 = tpu.matmul %192, %177, %cst_61 {dimension_numbers = #tpu.dot_dimension_numbers<[2], [1], [1], [2], [0, 0, 0, 1, 1, 2], [0], [0]>} : vector<2x8x8xf32>, vector<2x8x8xf32>, vector<2x8x8xf32> -> vector<2x8x8xf32>
    "tpu.trace_stop"() : () -> ()
    %194 = vector.shape_cast %193 : vector<2x8x8xf32> to vector<16x8xf32>
    %195 = vector.extract_strided_slice %146 {offsets = [0, 16], sizes = [16, 8], strides = [1, 1]} : vector<16x32xf32> to vector<16x8xf32>
    %196 = vector.shape_cast %195 : vector<16x8xf32> to vector<2x8x8xf32>
    %197 = vector.extract_strided_slice %147 {offsets = [0, 16], sizes = [16, 8], strides = [1, 1]} : vector<16x32xf32> to vector<16x8xf32>
    %198 = vector.shape_cast %197 : vector<16x8xf32> to vector<2x8x8xf32>
    %199 = vector.extract_strided_slice %148 {offsets = [0, 16], sizes = [16, 8], strides = [1, 1]} : vector<16x32xf32> to vector<16x8xf32>
    %200 = vector.shape_cast %199 : vector<16x8xf32> to vector<2x8x8xf32>
    "tpu.trace_start"() <{level = 10 : i32, message = "bqd,bkd->bqk"}> : () -> ()
    %cst_62 = arith.constant dense<0.000000e+00> : vector<2x8x8xf32>
    %201 = tpu.matmul %196, %198, %cst_62 {dimension_numbers = #tpu.dot_dimension_numbers<[2], [2], [1], [1], [0, 0, 0, 1, 1, 1], [0], [0]>} : vector<2x8x8xf32>, vector<2x8x8xf32>, vector<2x8x8xf32> -> vector<2x8x8xf32>
    "tpu.trace_stop"() : () -> ()
    %cst_63 = arith.constant dense<0xFF800000> : vector<2x8xf32>
    %202 = vector.multi_reduction <maximumf>, %201, %cst_63 [2] : vector<2x8x8xf32> to vector<2x8xf32>
    %203 = vector.shape_cast %202 : vector<2x8xf32> to vector<2x8x1xf32>
    %204 = vector.broadcast %203 : vector<2x8x1xf32> to vector<2x8x8xf32>
    %205 = arith.subf %201, %204 : vector<2x8x8xf32>
    %206 = math.exp %205 : vector<2x8x8xf32>
    %cst_64 = arith.constant dense<0.000000e+00> : vector<2x8xf32>
    %207 = vector.multi_reduction <add>, %206, %cst_64 [2] : vector<2x8x8xf32> to vector<2x8xf32>
    %208 = vector.shape_cast %207 : vector<2x8xf32> to vector<2x8x1xf32>
    %209 = tpu.reciprocal %208 {approx = true} : vector<2x8x1xf32> -> vector<2x8x1xf32>
    %210 = arith.mulf %208, %209 : vector<2x8x1xf32>
    %cst_65 = arith.constant 2.000000e+00 : f32
    %211 = vector.broadcast %cst_65 : f32 to vector<2x8x1xf32>
    %212 = arith.subf %211, %210 : vector<2x8x1xf32>
    %213 = arith.mulf %209, %212 : vector<2x8x1xf32>
    %214 = vector.broadcast %213 : vector<2x8x1xf32> to vector<2x8x8xf32>
    %215 = arith.mulf %206, %214 : vector<2x8x8xf32>
    "tpu.trace_start"() <{level = 10 : i32, message = "bqk,bkd->bqd"}> : () -> ()
    %cst_66 = arith.constant dense<0.000000e+00> : vector<2x8x8xf32>
    %216 = tpu.matmul %215, %200, %cst_66 {dimension_numbers = #tpu.dot_dimension_numbers<[2], [1], [1], [2], [0, 0, 0, 1, 1, 2], [0], [0]>} : vector<2x8x8xf32>, vector<2x8x8xf32>, vector<2x8x8xf32> -> vector<2x8x8xf32>
    "tpu.trace_stop"() : () -> ()
    %217 = vector.shape_cast %216 : vector<2x8x8xf32> to vector<16x8xf32>
    %218 = vector.extract_strided_slice %146 {offsets = [0, 24], sizes = [16, 8], strides = [1, 1]} : vector<16x32xf32> to vector<16x8xf32>
    %219 = vector.shape_cast %218 : vector<16x8xf32> to vector<2x8x8xf32>
    %220 = vector.extract_strided_slice %147 {offsets = [0, 24], sizes = [16, 8], strides = [1, 1]} : vector<16x32xf32> to vector<16x8xf32>
    %221 = vector.shape_cast %220 : vector<16x8xf32> to vector<2x8x8xf32>
    %222 = vector.extract_strided_slice %148 {offsets = [0, 24], sizes = [16, 8], strides = [1, 1]} : vector<16x32xf32> to vector<16x8xf32>
    %223 = vector.shape_cast %222 : vector<16x8xf32> to vector<2x8x8xf32>
    "tpu.trace_start"() <{level = 10 : i32, message = "bqd,bkd->bqk"}> : () -> ()
    %cst_67 = arith.constant dense<0.000000e+00> : vector<2x8x8xf32>
    %224 = tpu.matmul %219, %221, %cst_67 {dimension_numbers = #tpu.dot_dimension_numbers<[2], [2], [1], [1], [0, 0, 0, 1, 1, 1], [0], [0]>} : vector<2x8x8xf32>, vector<2x8x8xf32>, vector<2x8x8xf32> -> vector<2x8x8xf32>
    "tpu.trace_stop"() : () -> ()
    %cst_68 = arith.constant dense<0xFF800000> : vector<2x8xf32>
    %225 = vector.multi_reduction <maximumf>, %224, %cst_68 [2] : vector<2x8x8xf32> to vector<2x8xf32>
    %226 = vector.shape_cast %225 : vector<2x8xf32> to vector<2x8x1xf32>
    %227 = vector.broadcast %226 : vector<2x8x1xf32> to vector<2x8x8xf32>
    %228 = arith.subf %224, %227 : vector<2x8x8xf32>
    %229 = math.exp %228 : vector<2x8x8xf32>
    %cst_69 = arith.constant dense<0.000000e+00> : vector<2x8xf32>
    %230 = vector.multi_reduction <add>, %229, %cst_69 [2] : vector<2x8x8xf32> to vector<2x8xf32>
    %231 = vector.shape_cast %230 : vector<2x8xf32> to vector<2x8x1xf32>
    %232 = tpu.reciprocal %231 {approx = true} : vector<2x8x1xf32> -> vector<2x8x1xf32>
    %233 = arith.mulf %231, %232 : vector<2x8x1xf32>
    %cst_70 = arith.constant 2.000000e+00 : f32
    %234 = vector.broadcast %cst_70 : f32 to vector<2x8x1xf32>
    %235 = arith.subf %234, %233 : vector<2x8x1xf32>
    %236 = arith.mulf %232, %235 : vector<2x8x1xf32>
    %237 = vector.broadcast %236 : vector<2x8x1xf32> to vector<2x8x8xf32>
    %238 = arith.mulf %229, %237 : vector<2x8x8xf32>
    "tpu.trace_start"() <{level = 10 : i32, message = "bqk,bkd->bqd"}> : () -> ()
    %cst_71 = arith.constant dense<0.000000e+00> : vector<2x8x8xf32>
    %239 = tpu.matmul %238, %223, %cst_71 {dimension_numbers = #tpu.dot_dimension_numbers<[2], [1], [1], [2], [0, 0, 0, 1, 1, 2], [0], [0]>} : vector<2x8x8xf32>, vector<2x8x8xf32>, vector<2x8x8xf32> -> vector<2x8x8xf32>
    "tpu.trace_stop"() : () -> ()
    %240 = vector.shape_cast %239 : vector<2x8x8xf32> to vector<16x8xf32>
    %241 = tpu.concatenate %171, %194, %217, %240 in 1 : vector<16x8xf32>, vector<16x8xf32>, vector<16x8xf32>, vector<16x8xf32> -> vector<16x32xf32>
    %c1_72 = arith.constant 1 : index
    %c0_73 = arith.constant 0 : index
    %c0_74 = arith.constant 0 : index
    %242 = vector.load %arg3[%c1_72, %c0_73, %c0_74] : memref<2x32x32xf32, #tpu.memory_space<vmem>>, vector<1x32x32xf32>
    %243 = vector.shape_cast %242 : vector<1x32x32xf32> to vector<32x32xf32>
    %cst_75 = arith.constant dense<0.000000e+00> : vector<16x32xf32>
    %244 = tpu.matmul %241, %243, %cst_75 {dimension_numbers = #tpu.dot_dimension_numbers<[1], [0], [0], [1], [0, 0, 1, 1], [], []>} : vector<16x32xf32>, vector<32x32xf32>, vector<16x32xf32> -> vector<16x32xf32>
    %c1_76 = arith.constant 1 : index
    %c0_77 = arith.constant 0 : index
    %c0_78 = arith.constant 0 : index
    %245 = vector.load %arg4[%c1_76, %c0_77, %c0_78] : memref<2x1x32xf32, #tpu.memory_space<vmem>>, vector<1x1x32xf32>
    %246 = vector.shape_cast %245 : vector<1x1x32xf32> to vector<1x32xf32>
    %247 = vector.broadcast %246 : vector<1x32xf32> to vector<16x32xf32>
    %248 = arith.addf %244, %247 : vector<16x32xf32>
    %249 = arith.addf %138, %248 : vector<16x32xf32>
    %cst_79 = arith.constant dense<0.000000e+00> : vector<16xf32>
    %250 = vector.multi_reduction <add>, %249, %cst_79 [1] : vector<16x32xf32> to vector<16xf32>
    %251 = vector.shape_cast %250 : vector<16xf32> to vector<16x1xf32>
    %cst_80 = arith.constant 3.200000e+01 : f32
    %252 = vector.broadcast %cst_80 : f32 to vector<16x1xf32>
    %253 = arith.divf %251, %252 : vector<16x1xf32>
    %254 = arith.mulf %249, %249 : vector<16x32xf32>
    %cst_81 = arith.constant dense<0.000000e+00> : vector<16xf32>
    %255 = vector.multi_reduction <add>, %254, %cst_81 [1] : vector<16x32xf32> to vector<16xf32>
    %256 = vector.shape_cast %255 : vector<16xf32> to vector<16x1xf32>
    %cst_82 = arith.constant 3.200000e+01 : f32
    %257 = vector.broadcast %cst_82 : f32 to vector<16x1xf32>
    %258 = arith.divf %256, %257 : vector<16x1xf32>
    %259 = arith.mulf %253, %253 : vector<16x1xf32>
    %260 = arith.subf %258, %259 : vector<16x1xf32>
    %261 = vector.broadcast %253 : vector<16x1xf32> to vector<16x32xf32>
    %262 = arith.subf %249, %261 : vector<16x32xf32>
    %cst_83 = arith.constant 9.99999974E-6 : f32
    %263 = vector.broadcast %cst_83 : f32 to vector<16x1xf32>
    %264 = arith.addf %260, %263 : vector<16x1xf32>
    %265 = math.rsqrt %264 : vector<16x1xf32>
    %266 = vector.broadcast %265 : vector<16x1xf32> to vector<16x32xf32>
    %267 = arith.mulf %262, %266 : vector<16x32xf32>
    %c1_84 = arith.constant 1 : index
    %c0_85 = arith.constant 0 : index
    %c0_86 = arith.constant 0 : index
    %268 = vector.load %arg5[%c1_84, %c0_85, %c0_86] : memref<2x1x32xf32, #tpu.memory_space<vmem>>, vector<1x1x32xf32>
    %269 = vector.shape_cast %268 : vector<1x1x32xf32> to vector<1x32xf32>
    %270 = vector.broadcast %269 : vector<1x32xf32> to vector<16x32xf32>
    %271 = arith.mulf %267, %270 : vector<16x32xf32>
    %c1_87 = arith.constant 1 : index
    %c0_88 = arith.constant 0 : index
    %c0_89 = arith.constant 0 : index
    %272 = vector.load %arg6[%c1_87, %c0_88, %c0_89] : memref<2x1x32xf32, #tpu.memory_space<vmem>>, vector<1x1x32xf32>
    %273 = vector.shape_cast %272 : vector<1x1x32xf32> to vector<1x32xf32>
    %274 = vector.broadcast %273 : vector<1x32xf32> to vector<16x32xf32>
    %275 = arith.addf %271, %274 : vector<16x32xf32>
    %c0_90 = arith.constant 0 : index
    %c0_91 = arith.constant 0 : index
    %276 = vector.load %arg7[%c0_90, %c0_91] : memref<32x1xf32, #tpu.memory_space<vmem>>, vector<32x1xf32>
    %cst_92 = arith.constant dense<0.000000e+00> : vector<16x1xf32>
    %277 = tpu.matmul %275, %276, %cst_92 {dimension_numbers = #tpu.dot_dimension_numbers<[1], [0], [0], [1], [0, 0, 1, 1], [], []>} : vector<16x32xf32>, vector<32x1xf32>, vector<16x1xf32> -> vector<16x1xf32>
    %278 = vector.shape_cast %277 : vector<16x1xf32> to vector<2x8x1xf32>
    %cst_93 = arith.constant dense<0.000000e+00> : vector<2x1xf32>
    %279 = vector.multi_reduction <add>, %278, %cst_93 [1] : vector<2x8x1xf32> to vector<2x1xf32>
    %cst_94 = arith.constant 8.000000e+00 : f32
    %280 = vector.broadcast %cst_94 : f32 to vector<2x1xf32>
    %281 = arith.divf %279, %280 : vector<2x1xf32>
    %c0_95 = arith.constant 0 : index
    %c0_96 = arith.constant 0 : index
    %282 = vector.load %arg8[%c0_95, %c0_96] : memref<1x1xf32, #tpu.memory_space<vmem>>, vector<1x1xf32>
    %283 = vector.broadcast %282 : vector<1x1xf32> to vector<2x1xf32>
    %284 = arith.addf %281, %283 : vector<2x1xf32>
    %c0_97 = arith.constant 0 : index
    %c0_98 = arith.constant 0 : index
    %285 = vector.load %arg9[%c0_97, %c0_98] : memref<2x1xf32, #tpu.memory_space<vmem>>, vector<2x1xf32>
    tpu.vector_store %arg9[%c0_97, %c0_98], %284 {strides = array<i32>} : memref<2x1xf32, #tpu.memory_space<vmem>>, vector<2x1xf32>,
    return
  }
}

</mosaic_0001>

<llo_original>
// kernel: esm_decoder_half.1
$region0: #{esm_decoder_half.1}
  #allocation0 [shape = 'u32[]', space=smem, size = 0x4, offset = 0x4, fixed_abs, tag = 'smem constant byte address 0x4 - core index']
  #allocation1 [shape = 'u32[144,128]{1,0:T(1,128)}', space=vmem, size = 0x12000, scoped, tag = 'internal scratch']
  #allocation2 [shape = 'f32[1,1]{1,0:T(1,128)S(1)}', space=vmem, size = 0x200, scoped, tag = 'scoped memory for esm_decoder_half.1']
  %s0 = inlined_call_operand.vmem [shape: f32[2,8,32], index: 0, kind: input, shape index: {}]
  %s1 = inlined_call_operand.hbm [shape: f32[2,32,96], index: 1, kind: input, shape index: {}]
  %s2 = inlined_call_operand.vmem [shape: f32[2,1,96], index: 2, kind: input, shape index: {}]
  %s3 = inlined_call_operand.hbm [shape: f32[2,32,32], index: 3, kind: input, shape index: {}]
  %s4 = inlined_call_operand.vmem [shape: f32[2,1,32], index: 4, kind: input, shape index: {}]
  %s5 = inlined_call_operand.vmem [shape: f32[2,1,32], index: 5, kind: input, shape index: {}]
  %s6 = inlined_call_operand.vmem [shape: f32[2,1,32], index: 6, kind: input, shape index: {}]
  %s7 = inlined_call_operand.vmem [shape: f32[32,1], index: 7, kind: input, shape index: {}]
  %s8 = inlined_call_operand.<no memory space> [shape: f32[1,1], index: 8, kind: input, shape index: {}]
  %s9 = inlined_call_operand.vmem [shape: f32[2,1], index: 9, kind: output, shape index: {}]
  %s10 = sld [smem:[#allocation0]]
  $region54: #{esm_decoder_half.1} parent=0
    _
  %s12 = ssub.s32 1, %s10
  %s13 = scalar_select 0, %s12, %s10
  %v14 = vstv %s8
  %15 = vst [vmem:[#allocation2] sm:$0x1] %v14
  $region1: #{esm_decoder_half.1} parent=0
    #allocation3 [shape = 'u8[32768]{0}', space=vmem, size = 0x8000, scoped, tag = 'input window, operand 1, single buffered']
    #allocation4 [shape = 's32[1]{0}', space=sflag, size = 0x4, scoped, tag = 'scoped memory for esm_decoder_half.1']
    #allocation5 [shape = 'u8[32768]{0}', space=vmem, size = 0x8000, scoped, tag = 'input window, operand 3, single buffered']
    #allocation6 [shape = 's32[1]{0}', space=sflag, size = 0x4, scoped, tag = 'scoped memory for esm_decoder_half.1']
    %16 = vsyncpa [#allocation4], 0
    %17 = vsyncpa [#allocation6], 0
    // Predicated region
    $region2: #{esm_decoder_half.1} parent=1 // pred_check
      _
    $region3: #{esm_decoder_half.1} parent=1 // pred_check_branch
      %19 = sbr.rel (0) target = $region5
    $region4: #{esm_decoder_half.1} parent=1 // pred_region
      _
    $region5: #{esm_decoder_half.1} parent=1 // pred_fallthru
      _
    // Predicated region
    $region6: #{esm_decoder_half.1} parent=1 // pred_check
      _
    $region7: #{esm_decoder_half.1} parent=1 // pred_check_branch
      %21 = sbr.rel (0) target = $region9
    $region8: #{esm_decoder_half.1} parent=1 // pred_region
      %s23 = ssub.s32 1024, 1024
      %24 = vsyncadd [#allocation4], %s23
      %s25 = sshll.u32 [#allocation3], 4
      %s26 = int_to_ptr.vmem [resolvable:$true] %s25
      %31 = dma.hbm_to_vmem [thread:$0]  %s1, 1024, %s26, [#allocation4], 128, 128, 8
    $region9: #{esm_decoder_half.1} parent=1 // pred_fallthru
      _
    // Predicated region
    $region10: #{esm_decoder_half.1} parent=1 // pred_check
      _
    $region11: #{esm_decoder_half.1} parent=1 // pred_check_branch
      %33 = sbr.rel (0) target = $region13
    $region12: #{esm_decoder_half.1} parent=1 // pred_region
      _
    $region13: #{esm_decoder_half.1} parent=1 // pred_fallthru
      _
    // Predicated region
    $region14: #{esm_decoder_half.1} parent=1 // pred_check
      _
    $region15: #{esm_decoder_half.1} parent=1 // pred_check_branch
      %35 = sbr.rel (0) target = $region17
    $region16: #{esm_decoder_half.1} parent=1 // pred_region
      %s37 = ssub.s32 1024, 1024
      %38 = vsyncadd [#allocation6], %s37
      %s39 = sshll.u32 [#allocation5], 4
      %s40 = int_to_ptr.vmem [resolvable:$true] %s39
      %45 = dma.hbm_to_vmem [thread:$0]  %s3, 1024, %s40, [#allocation6], 128, 128, 8
    $region17: #{esm_decoder_half.1} parent=1 // pred_fallthru
      _
    // Predicated region
    $region18: #{esm_decoder_half.1} parent=1 // pred_check
      _
    $region19: #{esm_decoder_half.1} parent=1 // pred_check_branch
      %47 = sbr.rel (0) target = $region21
    $region20: #{esm_decoder_half.1} parent=1 // pred_region
      _
    $region21: #{esm_decoder_half.1} parent=1 // pred_fallthru
      _
    // Predicated region
    $region22: #{esm_decoder_half.1} parent=1 // pred_check
      _
    $region23: #{esm_decoder_half.1} parent=1 // pred_check_branch
      %49 = sbr.rel (0) target = $region25
    $region24: #{esm_decoder_half.1} parent=1 // pred_region
      _
    $region25: #{esm_decoder_half.1} parent=1 // pred_fallthru
      _
    // Predicated region
    $region26: #{esm_decoder_half.1} parent=1 // pred_check
      _
    $region27: #{esm_decoder_half.1} parent=1 // pred_check_branch
      %51 = sbr.rel (0) target = $region29
    $region28: #{esm_decoder_half.1} parent=1 // pred_region
      _
    $region29: #{esm_decoder_half.1} parent=1 // pred_fallthru
      _
    // Predicated region
    $region30: #{esm_decoder_half.1} parent=1 // pred_check
      _
    $region31: #{esm_decoder_half.1} parent=1 // pred_check_branch
      %53 = sbr.rel (0) target = $region33
    $region32: #{esm_decoder_half.1} parent=1 // pred_region
      _
    $region33: #{esm_decoder_half.1} parent=1 // pred_fallthru
      _
    // Predicated region
    $region34: #{esm_decoder_half.1} parent=1 // pred_check
      _
    $region35: #{esm_decoder_half.1} parent=1 // pred_check_branch
      %55 = sbr.rel (0) target = $region37
    $region36: #{esm_decoder_half.1} parent=1 // pred_region
      _
    $region37: #{esm_decoder_half.1} parent=1 // pred_fallthru
      _
    // Predicated region
    $region38: #{esm_decoder_half.1} parent=1 // pred_check
      _
    $region39: #{esm_decoder_half.1} parent=1 // pred_check_branch
      %57 = sbr.rel (0) target = $region41
    $region40: #{esm_decoder_half.1} parent=1 // pred_region
      %58 = dma.done [#allocation4], 1024
    $region41: #{esm_decoder_half.1} parent=1 // pred_fallthru
      _
    // Predicated region
    $region42: #{esm_decoder_half.1} parent=1 // pred_check
      _
    $region43: #{esm_decoder_half.1} parent=1 // pred_check_branch
      %60 = sbr.rel (0) target = $region45
    $region44: #{esm_decoder_half.1} parent=1 // pred_region
      %61 = dma.done [#allocation6], 1024
    $region45: #{esm_decoder_half.1} parent=1 // pred_fallthru
      _
    %v62 = vld [vmem:[%s0] sm:$0xff]
    %v63 = vld [vmem:[%s0 + $0x8] sm:$0xff]
    %v64 = vld [vmem:[#allocation3] sm:$0xff]
    %v65 = vld [vmem:[#allocation3 + $0x8] sm:$0xff]
    %v66 = vld [vmem:[#allocation3 + $0x10] sm:$0xff]
    %v67 = vld [vmem:[#allocation3 + $0x18] sm:$0xff]
    %v68 = vld [vmem:[%s2] sm:$0x1]
    %v70 = vlaneseq
    %v71 = vshrl.u32 %v70, 7
    %v72 = vsub.s32 0, %v71
    %v73 = vrot.slane %v68, %v72
    %vm75 = vcmask 261120
    %v77 = vsel %vm75, %v62, 0
    %v80 = vsel %vm75, %v63, 0
    %82 = vmatprep.subr.mxu0 0.0
    %83 = vmatpush1.msra.mxu0 %v64
    %84 = vmatprep.subr.mxu0 0.0
    %85 = vmatpush1.msra.mxu0 %v65
    %86 = vmatprep.subr.mxu0 0.0
    %87 = vmatpush1.msra.mxu0 %v66
    %88 = vmatprep.subr.mxu0 0.0
    %89 = vmatpush1.msra.mxu0 %v67
    %90 = vmatprep.subr.mxu0 0.0
    %91 = vmatpush1.msra.mxu0 0.0
    %92 = vmatprep.subr.mxu0 0.0
    %93 = vmatpush1.msra.mxu0 0.0
    %94 = vmatprep.subr.mxu0 0.0
    %95 = vmatpush1.msra.mxu0 0.0
    %96 = vmatprep.subr.mxu0 0.0
    %97 = vmatpush1.msra.mxu0 0.0
    %98 = vmatprep.subr.mxu0 0.0
    %99 = vmatpush1.msra.mxu0 0.0
    %100 = vmatprep.subr.mxu0 0.0
    %101 = vmatpush1.msra.mxu0 0.0
    %102 = vmatprep.subr.mxu0 0.0
    %103 = vmatpush1.msra.mxu0 0.0
    %104 = vmatprep.subr.mxu0 0.0
    %105 = vmatpush1.msra.mxu0 0.0
    %106 = vmatprep.subr.mxu0 0.0
    %107 = vmatpush1.msra.mxu0 0.0
    %108 = vmatprep.subr.mxu0 0.0
    %109 = vmatpush1.msra.mxu0 0.0
    %110 = vmatprep.subr.mxu0 0.0
    %111 = vmatpush1.msra.mxu0 0.0
    %112 = vmatprep.subr.mxu0 0.0
    %113 = vmatpush1.msra.mxu0 0.0
    %114 = vmatprep.subr.mxu0 0.0
    %115 = vmatpush1.msra.mxu0 0.0
    %116 = vmatprep.subr.mxu0 0.0
    %117 = vmatpush1.msra.mxu0 0.0
    %118 = vmatprep.subr.mxu0 0.0
    %119 = vmatpush1.msra.mxu0 0.0
    %120 = vmatprep.subr.mxu0 0.0
    %121 = vmatpush1.msra.mxu0 0.0
    %122 = vmatprep.subr.mxu0 0.0
    %123 = vmatpush1.msra.mxu0 0.0
    %124 = vmatprep.subr.mxu0 0.0
    %125 = vmatpush1.msra.mxu0 0.0
    %126 = vmatprep.subr.mxu0 0.0
    %127 = vmatpush1.msra.mxu0 0.0
    %128 = vmatprep.subr.mxu0 0.0
    %129 = vmatpush1.msra.mxu0 0.0
    %130 = vmatprep.subr.mxu0 0.0
    %131 = vmatpush1.msra.mxu0 0.0
    %132 = vmatprep.subr.mxu0 0.0
    %133 = vmatpush1.msra.mxu0 0.0
    %134 = vmatprep.subr.mxu0 0.0
    %135 = vmatpush1.msra.mxu0 0.0
    %136 = vmatprep.subr.mxu0 0.0
    %137 = vmatpush1.msra.mxu0 0.0
    %138 = vmatprep.subr.mxu0 0.0
    %139 = vmatpush1.msra.mxu0 0.0
    %140 = vmatprep.subr.mxu0 0.0
    %141 = vmatpush1.msra.mxu0 0.0
    %142 = vmatprep.subr.mxu0 0.0
    %143 = vmatpush1.msra.mxu0 0.0
    %144 = vmatprep.subr.mxu0 0.0
    %145 = vmatpush1.msra.mxu0 0.0
    %146 = vmatprep.mubr.f32.mxu0 0.0
    %147 = vmatmul.mubr.f32.gmra.mrb[0].mxu0 %v77
    %v148 = vpop.f32.mrb[0].mxu0
    %v149 = vadd.f32 %v73, %v148
    %v150 = vpop.f32.mrb[0].mxu0
    %151 = vmatprep.mubr.f32.mxu0 0.0
    %152 = vmatmul.mubr.f32.gmra.mrb[0].mxu0 %v80
    %v153 = vpop.f32.mrb[0].mxu0
    %v154 = vadd.f32 %v73, %v153
    %v155 = vpop.f32.mrb[0].mxu0
    %156 = vdwg.mxu0
    %158 = vrot.lane.b32.xlu0 %v149, 96
    %v159 = vpop.permute.xlu0 %158
    %vm160 = vcmask 64512
    %v161 = vsel %vm160, %v149, 0
    %v163 = vsel %vm160, %v159, 0
    %165 = vmatprep.subr.mxu0 0.0
    %166 = vmatpush1.xpose.msra.mxu0 %v163
    %167 = vmatprep.subr.mxu0 0.0
    %168 = vmatpush1.xpose.msra.mxu0 0.0
    %169 = vmatprep.subr.mxu0 0.0
    %170 = vmatpush1.xpose.msra.mxu0 0.0
    %171 = vmatprep.subr.mxu0 0.0
    %172 = vmatpush1.xpose.msra.mxu0 0.0
    %173 = vmatprep.subr.mxu0 0.0
    %174 = vmatpush1.xpose.msra.mxu0 0.0
    %175 = vmatprep.subr.mxu0 0.0
    %176 = vmatpush1.xpose.msra.mxu0 0.0
    %177 = vmatprep.subr.mxu0 0.0
    %178 = vmatpush1.xpose.msra.mxu0 0.0
    %179 = vmatprep.subr.mxu0 0.0
    %180 = vmatpush1.xpose.msra.mxu0 0.0
    %181 = vmatprep.subr.mxu0 0.0
    %182 = vmatpush1.xpose.msra.mxu0 0.0
    %183 = vmatprep.subr.mxu0 0.0
    %184 = vmatpush1.xpose.msra.mxu0 0.0
    %185 = vmatprep.subr.mxu0 0.0
    %186 = vmatpush1.xpose.msra.mxu0 0.0
    %187 = vmatprep.subr.mxu0 0.0
    %188 = vmatpush1.xpose.msra.mxu0 0.0
    %189 = vmatprep.subr.mxu0 0.0
    %190 = vmatpush1.xpose.msra.mxu0 0.0
    %191 = vmatprep.subr.mxu0 0.0
    %192 = vmatpush1.xpose.msra.mxu0 0.0
    %193 = vmatprep.subr.mxu0 0.0
    %194 = vmatpush1.xpose.msra.mxu0 0.0
    %195 = vmatprep.subr.mxu0 0.0
    %196 = vmatpush1.xpose.msra.mxu0 0.0
    %197 = vmatprep.subr.mxu0 0.0
    %198 = vmatpush1.xpose.msra.mxu0 0.0
    %199 = vmatprep.subr.mxu0 0.0
    %200 = vmatpush1.xpose.msra.mxu0 0.0
    %201 = vmatprep.subr.mxu0 0.0
    %202 = vmatpush1.xpose.msra.mxu0 0.0
    %203 = vmatprep.subr.mxu0 0.0
    %204 = vmatpush1.xpose.msra.mxu0 0.0
    %205 = vmatprep.subr.mxu0 0.0
    %206 = vmatpush1.xpose.msra.mxu0 0.0
    %207 = vmatprep.subr.mxu0 0.0
    %208 = vmatpush1.xpose.msra.mxu0 0.0
    %209 = vmatprep.subr.mxu0 0.0
    %210 = vmatpush1.xpose.msra.mxu0 0.0
    %211 = vmatprep.subr.mxu0 0.0
    %212 = vmatpush1.xpose.msra.mxu0 0.0
    %213 = vmatprep.subr.mxu0 0.0
    %214 = vmatpush1.xpose.msra.mxu0 0.0
    %215 = vmatprep.subr.mxu0 0.0
    %216 = vmatpush1.xpose.msra.mxu0 0.0
    %217 = vmatprep.subr.mxu0 0.0
    %218 = vmatpush1.xpose.msra.mxu0 0.0
    %219 = vmatprep.subr.mxu0 0.0
    %220 = vmatpush1.xpose.msra.mxu0 0.0
    %221 = vmatprep.subr.mxu0 0.0
    %222 = vmatpush1.xpose.msra.mxu0 0.0
    %223 = vmatprep.subr.mxu0 0.0
    %224 = vmatpush1.xpose.msra.mxu0 0.0
    %225 = vmatprep.subr.mxu0 0.0
    %226 = vmatpush1.xpose.msra.mxu0 0.0
    %227 = vmatprep.subr.mxu0 0.0
    %228 = vmatpush1.xpose.msra.mxu0 0.0
    %229 = vmatprep.mubr.f32.mxu0 0.0
    %230 = vmatmul.mubr.f32.gmra.mrb[0].mxu0 %v161
    %v231 = vpop.f32.mrb[0].mxu0
    %v232 = vadd.f32 0.0, %v231
    %v233 = vpop.f32.mrb[0].mxu0
    %234 = vdwg.mxu0
    %236 = vrot.lane.b32.xlu0 %v154, 96
    %v237 = vpop.permute.xlu0 %236
    %v238 = vsel %vm160, %v154, 0
    %v240 = vsel %vm160, %v237, 0
    %242 = vmatprep.subr.mxu0 0.0
    %243 = vmatpush1.xpose.msra.mxu0 %v240
    %244 = vmatprep.subr.mxu0 0.0
    %245 = vmatpush1.xpose.msra.mxu0 0.0
    %246 = vmatprep.subr.mxu0 0.0
    %247 = vmatpush1.xpose.msra.mxu0 0.0
    %248 = vmatprep.subr.mxu0 0.0
    %249 = vmatpush1.xpose.msra.mxu0 0.0
    %250 = vmatprep.subr.mxu0 0.0
    %251 = vmatpush1.xpose.msra.mxu0 0.0
    %252 = vmatprep.subr.mxu0 0.0
    %253 = vmatpush1.xpose.msra.mxu0 0.0
    %254 = vmatprep.subr.mxu0 0.0
    %255 = vmatpush1.xpose.msra.mxu0 0.0
    %256 = vmatprep.subr.mxu0 0.0
    %257 = vmatpush1.xpose.msra.mxu0 0.0
    %258 = vmatprep.subr.mxu0 0.0
    %259 = vmatpush1.xpose.msra.mxu0 0.0
    %260 = vmatprep.subr.mxu0 0.0
    %261 = vmatpush1.xpose.msra.mxu0 0.0
    %262 = vmatprep.subr.mxu0 0.0
    %263 = vmatpush1.xpose.msra.mxu0 0.0
    %264 = vmatprep.subr.mxu0 0.0
    %265 = vmatpush1.xpose.msra.mxu0 0.0
    %266 = vmatprep.subr.mxu0 0.0
    %267 = vmatpush1.xpose.msra.mxu0 0.0
    %268 = vmatprep.subr.mxu0 0.0
    %269 = vmatpush1.xpose.msra.mxu0 0.0
    %270 = vmatprep.subr.mxu0 0.0
    %271 = vmatpush1.xpose.msra.mxu0 0.0
    %272 = vmatprep.subr.mxu0 0.0
    %273 = vmatpush1.xpose.msra.mxu0 0.0
    %274 = vmatprep.subr.mxu0 0.0
    %275 = vmatpush1.xpose.msra.mxu0 0.0
    %276 = vmatprep.subr.mxu0 0.0
    %277 = vmatpush1.xpose.msra.mxu0 0.0
    %278 = vmatprep.subr.mxu0 0.0
    %279 = vmatpush1.xpose.msra.mxu0 0.0
    %280 = vmatprep.subr.mxu0 0.0
    %281 = vmatpush1.xpose.msra.mxu0 0.0
    %282 = vmatprep.subr.mxu0 0.0
    %283 = vmatpush1.xpose.msra.mxu0 0.0
    %284 = vmatprep.subr.mxu0 0.0
    %285 = vmatpush1.xpose.msra.mxu0 0.0
    %286 = vmatprep.subr.mxu0 0.0
    %287 = vmatpush1.xpose.msra.mxu0 0.0
    %288 = vmatprep.subr.mxu0 0.0
    %289 = vmatpush1.xpose.msra.mxu0 0.0
    %290 = vmatprep.subr.mxu0 0.0
    %291 = vmatpush1.xpose.msra.mxu0 0.0
    %292 = vmatprep.subr.mxu0 0.0
    %293 = vmatpush1.xpose.msra.mxu0 0.0
    %294 = vmatprep.subr.mxu0 0.0
    %295 = vmatpush1.xpose.msra.mxu0 0.0
    %296 = vmatprep.subr.mxu0 0.0
    %297 = vmatpush1.xpose.msra.mxu0 0.0
    %298 = vmatprep.subr.mxu0 0.0
    %299 = vmatpush1.xpose.msra.mxu0 0.0
    %300 = vmatprep.subr.mxu0 0.0
    %301 = vmatpush1.xpose.msra.mxu0 0.0
    %302 = vmatprep.subr.mxu0 0.0
    %303 = vmatpush1.xpose.msra.mxu0 0.0
    %304 = vmatprep.subr.mxu0 0.0
    %305 = vmatpush1.xpose.msra.mxu0 0.0
    %306 = vmatprep.mubr.f32.mxu0 0.0
    %307 = vmatmul.mubr.f32.gmra.mrb[0].mxu0 %v238
    %v308 = vpop.f32.mrb[0].mxu0
    %v309 = vadd.f32 0.0, %v308
    %v310 = vpop.f32.mrb[0].mxu0
    %311 = vdwg.mxu0
    %v312 = vsel %vm160, %v232, -inf
    %313 = vmax.xlane.f32.xlu0 %v312
    %v314 = vpop.xlane.xlu0 %313
    %v315 = vsel %vm160, %v309, -inf
    %316 = vmax.xlane.f32.xlu0 %v315
    %v317 = vpop.xlane.xlu0 %316
    %v318 = vsub.f32 %v232, %v314
    %v319 = vsub.f32 %v309, %v317
    %v320 = vmul.f32 %v318, 1.442695
    %v321 = vpow.pop %v320
    %v322 = vmul.f32 %v319, 1.442695
    %v323 = vpow.pop %v322
    %v324 = vsel %vm160, %v321, 0.0
    %325 = vadd.xlane.f32.xlu0 %v324
    %v326 = vpop.xlane.xlu0 %325
    %v327 = vsel %vm160, %v323, 0.0
    %328 = vadd.xlane.f32.xlu0 %v327
    %v329 = vpop.xlane.xlu0 %328
    %v330 = vrcp.pop %v326
    %v331 = vrcp.pop %v329
    %v332 = vmul.f32 %v326, %v330
    %v333 = vmul.f32 %v329, %v331
    %v334 = vsub.f32 2.0, %v332
    %v335 = vsub.f32 2.0, %v333
    %v336 = vmul.f32 %v330, %v334
    %v337 = vmul.f32 %v331, %v335
    %v338 = vmul.f32 %v321, %v336
    %v339 = vmul.f32 %v323, %v337
    %340 = vrot.lane.b32.xlu0 %v149, 64
    %v341 = vpop.permute.xlu0 %340
    %v344 = vsel %vm160, %v338, 0
    %346 = vmatprep.subr.mxu0 0.0
    %347 = vmatpush1.msra.mxu0 %v341
    %348 = vmatprep.subr.mxu0 0.0
    %349 = vmatpush1.msra.mxu0 0.0
    %350 = vmatprep.subr.mxu0 0.0
    %351 = vmatpush1.msra.mxu0 0.0
    %352 = vmatprep.subr.mxu0 0.0
    %353 = vmatpush1.msra.mxu0 0.0
    %354 = vmatprep.subr.mxu0 0.0
    %355 = vmatpush1.msra.mxu0 0.0
    %356 = vmatprep.subr.mxu0 0.0
    %357 = vmatpush1.msra.mxu0 0.0
    %358 = vmatprep.subr.mxu0 0.0
    %359 = vmatpush1.msra.mxu0 0.0
    %360 = vmatprep.subr.mxu0 0.0
    %361 = vmatpush1.msra.mxu0 0.0
    %362 = vmatprep.subr.mxu0 0.0
    %363 = vmatpush1.msra.mxu0 0.0
    %364 = vmatprep.subr.mxu0 0.0
    %365 = vmatpush1.msra.mxu0 0.0
    %366 = vmatprep.subr.mxu0 0.0
    %367 = vmatpush1.msra.mxu0 0.0
    %368 = vmatprep.subr.mxu0 0.0
    %369 = vmatpush1.msra.mxu0 0.0
    %370 = vmatprep.subr.mxu0 0.0
    %371 = vmatpush1.msra.mxu0 0.0
    %372 = vmatprep.subr.mxu0 0.0
    %373 = vmatpush1.msra.mxu0 0.0
    %374 = vmatprep.subr.mxu0 0.0
    %375 = vmatpush1.msra.mxu0 0.0
    %376 = vmatprep.subr.mxu0 0.0
    %377 = vmatpush1.msra.mxu0 0.0
    %378 = vmatprep.subr.mxu0 0.0
    %379 = vmatpush1.msra.mxu0 0.0
    %380 = vmatprep.subr.mxu0 0.0
    %381 = vmatpush1.msra.mxu0 0.0
    %382 = vmatprep.subr.mxu0 0.0
    %383 = vmatpush1.msra.mxu0 0.0
    %384 = vmatprep.subr.mxu0 0.0
    %385 = vmatpush1.msra.mxu0 0.0
    %386 = vmatprep.subr.mxu0 0.0
    %387 = vmatpush1.msra.mxu0 0.0
    %388 = vmatprep.subr.mxu0 0.0
    %389 = vmatpush1.msra.mxu0 0.0
    %390 = vmatprep.subr.mxu0 0.0
    %391 = vmatpush1.msra.mxu0 0.0
    %392 = vmatprep.subr.mxu0 0.0
    %393 = vmatpush1.msra.mxu0 0.0
    %394 = vmatprep.subr.mxu0 0.0
    %395 = vmatpush1.msra.mxu0 0.0
    %396 = vmatprep.subr.mxu0 0.0
    %397 = vmatpush1.msra.mxu0 0.0
    %398 = vmatprep.subr.mxu0 0.0
    %399 = vmatpush1.msra.mxu0 0.0
    %400 = vmatprep.subr.mxu0 0.0
    %401 = vmatpush1.msra.mxu0 0.0
    %402 = vmatprep.subr.mxu0 0.0
    %403 = vmatpush1.msra.mxu0 0.0
    %404 = vmatprep.subr.mxu0 0.0
    %405 = vmatpush1.msra.mxu0 0.0
    %406 = vmatprep.subr.mxu0 0.0
    %407 = vmatpush1.msra.mxu0 0.0
    %408 = vmatprep.subr.mxu0 0.0
    %409 = vmatpush1.msra.mxu0 0.0
    %410 = vmatprep.mubr.f32.mxu0 0.0
    %411 = vmatmul.mubr.f32.gmra.mrb[0].mxu0 %v344
    %v412 = vpop.f32.mrb[0].mxu0
    %v413 = vadd.f32 0.0, %v412
    %v414 = vpop.f32.mrb[0].mxu0
    %415 = vdwg.mxu0
    %416 = vrot.lane.b32.xlu0 %v154, 64
    %v417 = vpop.permute.xlu0 %416
    %v420 = vsel %vm160, %v339, 0
    %422 = vmatprep.subr.mxu0 0.0
    %423 = vmatpush1.msra.mxu0 %v417
    %424 = vmatprep.subr.mxu0 0.0
    %425 = vmatpush1.msra.mxu0 0.0
    %426 = vmatprep.subr.mxu0 0.0
    %427 = vmatpush1.msra.mxu0 0.0
    %428 = vmatprep.subr.mxu0 0.0
    %429 = vmatpush1.msra.mxu0 0.0
    %430 = vmatprep.subr.mxu0 0.0
    %431 = vmatpush1.msra.mxu0 0.0
    %432 = vmatprep.subr.mxu0 0.0
    %433 = vmatpush1.msra.mxu0 0.0
    %434 = vmatprep.subr.mxu0 0.0
    %435 = vmatpush1.msra.mxu0 0.0
    %436 = vmatprep.subr.mxu0 0.0
    %437 = vmatpush1.msra.mxu0 0.0
    %438 = vmatprep.subr.mxu0 0.0
    %439 = vmatpush1.msra.mxu0 0.0
    %440 = vmatprep.subr.mxu0 0.0
    %441 = vmatpush1.msra.mxu0 0.0
    %442 = vmatprep.subr.mxu0 0.0
    %443 = vmatpush1.msra.mxu0 0.0
    %444 = vmatprep.subr.mxu0 0.0
    %445 = vmatpush1.msra.mxu0 0.0
    %446 = vmatprep.subr.mxu0 0.0
    %447 = vmatpush1.msra.mxu0 0.0
    %448 = vmatprep.subr.mxu0 0.0
    %449 = vmatpush1.msra.mxu0 0.0
    %450 = vmatprep.subr.mxu0 0.0
    %451 = vmatpush1.msra.mxu0 0.0
    %452 = vmatprep.subr.mxu0 0.0
    %453 = vmatpush1.msra.mxu0 0.0
    %454 = vmatprep.subr.mxu0 0.0
    %455 = vmatpush1.msra.mxu0 0.0
    %456 = vmatprep.subr.mxu0 0.0
    %457 = vmatpush1.msra.mxu0 0.0
    %458 = vmatprep.subr.mxu0 0.0
    %459 = vmatpush1.msra.mxu0 0.0
    %460 = vmatprep.subr.mxu0 0.0
    %461 = vmatpush1.msra.mxu0 0.0
    %462 = vmatprep.subr.mxu0 0.0
    %463 = vmatpush1.msra.mxu0 0.0
    %464 = vmatprep.subr.mxu0 0.0
    %465 = vmatpush1.msra.mxu0 0.0
    %466 = vmatprep.subr.mxu0 0.0
    %467 = vmatpush1.msra.mxu0 0.0
    %468 = vmatprep.subr.mxu0 0.0
    %469 = vmatpush1.msra.mxu0 0.0
    %470 = vmatprep.subr.mxu0 0.0
    %471 = vmatpush1.msra.mxu0 0.0
    %472 = vmatprep.subr.mxu0 0.0
    %473 = vmatpush1.msra.mxu0 0.0
    %474 = vmatprep.subr.mxu0 0.0
    %475 = vmatpush1.msra.mxu0 0.0
    %476 = vmatprep.subr.mxu0 0.0
    %477 = vmatpush1.msra.mxu0 0.0
    %478 = vmatprep.subr.mxu0 0.0
    %479 = vmatpush1.msra.mxu0 0.0
    %480 = vmatprep.subr.mxu0 0.0
    %481 = vmatpush1.msra.mxu0 0.0
    %482 = vmatprep.subr.mxu0 0.0
    %483 = vmatpush1.msra.mxu0 0.0
    %484 = vmatprep.subr.mxu0 0.0
    %485 = vmatpush1.msra.mxu0 0.0
    %486 = vmatprep.mubr.f32.mxu0 0.0
    %487 = vmatmul.mubr.f32.gmra.mrb[0].mxu0 %v420
    %v488 = vpop.f32.mrb[0].mxu0
    %v489 = vadd.f32 0.0, %v488
    %v490 = vpop.f32.mrb[0].mxu0
    %491 = vdwg.mxu0
    %492 = vrot.lane.b32.xlu0 %v149, 120
    %v493 = vpop.permute.xlu0 %492
    %494 = vrot.lane.b32.xlu0 %v149, 88
    %v495 = vpop.permute.xlu0 %494
    %v496 = vsel %vm160, %v493, 0
    %v498 = vsel %vm160, %v495, 0
    %500 = vmatprep.subr.mxu0 0.0
    %501 = vmatpush1.xpose.msra.mxu0 %v498
    %502 = vmatprep.subr.mxu0 0.0
    %503 = vmatpush1.xpose.msra.mxu0 0.0
    %504 = vmatprep.subr.mxu0 0.0
    %505 = vmatpush1.xpose.msra.mxu0 0.0
    %506 = vmatprep.subr.mxu0 0.0
    %507 = vmatpush1.xpose.msra.mxu0 0.0
    %508 = vmatprep.subr.mxu0 0.0
    %509 = vmatpush1.xpose.msra.mxu0 0.0
    %510 = vmatprep.subr.mxu0 0.0
    %511 = vmatpush1.xpose.msra.mxu0 0.0
    %512 = vmatprep.subr.mxu0 0.0
    %513 = vmatpush1.xpose.msra.mxu0 0.0
    %514 = vmatprep.subr.mxu0 0.0
    %515 = vmatpush1.xpose.msra.mxu0 0.0
    %516 = vmatprep.subr.mxu0 0.0
    %517 = vmatpush1.xpose.msra.mxu0 0.0
    %518 = vmatprep.subr.mxu0 0.0
    %519 = vmatpush1.xpose.msra.mxu0 0.0
    %520 = vmatprep.subr.mxu0 0.0
    %521 = vmatpush1.xpose.msra.mxu0 0.0
    %522 = vmatprep.subr.mxu0 0.0
    %523 = vmatpush1.xpose.msra.mxu0 0.0
    %524 = vmatprep.subr.mxu0 0.0
    %525 = vmatpush1.xpose.msra.mxu0 0.0
    %526 = vmatprep.subr.mxu0 0.0
    %527 = vmatpush1.xpose.msra.mxu0 0.0
    %528 = vmatprep.subr.mxu0 0.0
    %529 = vmatpush1.xpose.msra.mxu0 0.0
    %530 = vmatprep.subr.mxu0 0.0
    %531 = vmatpush1.xpose.msra.mxu0 0.0
    %532 = vmatprep.subr.mxu0 0.0
    %533 = vmatpush1.xpose.msra.mxu0 0.0
    %534 = vmatprep.subr.mxu0 0.0
    %535 = vmatpush1.xpose.msra.mxu0 0.0
    %536 = vmatprep.subr.mxu0 0.0
    %537 = vmatpush1.xpose.msra.mxu0 0.0
    %538 = vmatprep.subr.mxu0 0.0
    %539 = vmatpush1.xpose.msra.mxu0 0.0
    %540 = vmatprep.subr.mxu0 0.0
    %541 = vmatpush1.xpose.msra.mxu0 0.0
    %542 = vmatprep.subr.mxu0 0.0
    %543 = vmatpush1.xpose.msra.mxu0 0.0
    %544 = vmatprep.subr.mxu0 0.0
    %545 = vmatpush1.xpose.msra.mxu0 0.0
    %546 = vmatprep.subr.mxu0 0.0
    %547 = vmatpush1.xpose.msra.mxu0 0.0
    %548 = vmatprep.subr.mxu0 0.0
    %549 = vmatpush1.xpose.msra.mxu0 0.0
    %550 = vmatprep.subr.mxu0 0.0
    %551 = vmatpush1.xpose.msra.mxu0 0.0
    %552 = vmatprep.subr.mxu0 0.0
    %553 = vmatpush1.xpose.msra.mxu0 0.0
    %554 = vmatprep.subr.mxu0 0.0
    %555 = vmatpush1.xpose.msra.mxu0 0.0
    %556 = vmatprep.subr.mxu0 0.0
    %557 = vmatpush1.xpose.msra.mxu0 0.0
    %558 = vmatprep.subr.mxu0 0.0
    %559 = vmatpush1.xpose.msra.mxu0 0.0
    %560 = vmatprep.subr.mxu0 0.0
    %561 = vmatpush1.xpose.msra.mxu0 0.0
    %562 = vmatprep.subr.mxu0 0.0
    %563 = vmatpush1.xpose.msra.mxu0 0.0
    %564 = vmatprep.mubr.f32.mxu0 0.0
    %565 = vmatmul.mubr.f32.gmra.mrb[0].mxu0 %v496
    %v566 = vpop.f32.mrb[0].mxu0
    %v567 = vadd.f32 0.0, %v566
    %v568 = vpop.f32.mrb[0].mxu0
    %569 = vdwg.mxu0
    %570 = vrot.lane.b32.xlu0 %v154, 120
    %v571 = vpop.permute.xlu0 %570
    %572 = vrot.lane.b32.xlu0 %v154, 88
    %v573 = vpop.permute.xlu0 %572
    %v574 = vsel %vm160, %v571, 0
    %v576 = vsel %vm160, %v573, 0
    %578 = vmatprep.subr.mxu0 0.0
    %579 = vmatpush1.xpose.msra.mxu0 %v576
    %580 = vmatprep.subr.mxu0 0.0
    %581 = vmatpush1.xpose.msra.mxu0 0.0
    %582 = vmatprep.subr.mxu0 0.0
    %583 = vmatpush1.xpose.msra.mxu0 0.0
    %584 = vmatprep.subr.mxu0 0.0
    %585 = vmatpush1.xpose.msra.mxu0 0.0
    %586 = vmatprep.subr.mxu0 0.0
    %587 = vmatpush1.xpose.msra.mxu0 0.0
    %588 = vmatprep.subr.mxu0 0.0
    %589 = vmatpush1.xpose.msra.mxu0 0.0
    %590 = vmatprep.subr.mxu0 0.0
    %591 = vmatpush1.xpose.msra.mxu0 0.0
    %592 = vmatprep.subr.mxu0 0.0
    %593 = vmatpush1.xpose.msra.mxu0 0.0
    %594 = vmatprep.subr.mxu0 0.0
    %595 = vmatpush1.xpose.msra.mxu0 0.0
    %596 = vmatprep.subr.mxu0 0.0
    %597 = vmatpush1.xpose.msra.mxu0 0.0
    %598 = vmatprep.subr.mxu0 0.0
    %599 = vmatpush1.xpose.msra.mxu0 0.0
    %600 = vmatprep.subr.mxu0 0.0
    %601 = vmatpush1.xpose.msra.mxu0 0.0
    %602 = vmatprep.subr.mxu0 0.0
    %603 = vmatpush1.xpose.msra.mxu0 0.0
    %604 = vmatprep.subr.mxu0 0.0
    %605 = vmatpush1.xpose.msra.mxu0 0.0
    %606 = vmatprep.subr.mxu0 0.0
    %607 = vmatpush1.xpose.msra.mxu0 0.0
    %608 = vmatprep.subr.mxu0 0.0
    %609 = vmatpush1.xpose.msra.mxu0 0.0
    %610 = vmatprep.subr.mxu0 0.0
    %611 = vmatpush1.xpose.msra.mxu0 0.0
    %612 = vmatprep.subr.mxu0 0.0
    %613 = vmatpush1.xpose.msra.mxu0 0.0
    %614 = vmatprep.subr.mxu0 0.0
    %615 = vmatpush1.xpose.msra.mxu0 0.0
    %616 = vmatprep.subr.mxu0 0.0
    %617 = vmatpush1.xpose.msra.mxu0 0.0
    %618 = vmatprep.subr.mxu0 0.0
    %619 = vmatpush1.xpose.msra.mxu0 0.0
    %620 = vmatprep.subr.mxu0 0.0
    %621 = vmatpush1.xpose.msra.mxu0 0.0
    %622 = vmatprep.subr.mxu0 0.0
    %623 = vmatpush1.xpose.msra.mxu0 0.0
    %624 = vmatprep.subr.mxu0 0.0
    %625 = vmatpush1.xpose.msra.mxu0 0.0
    %626 = vmatprep.subr.mxu0 0.0
    %627 = vmatpush1.xpose.msra.mxu0 0.0
    %628 = vmatprep.subr.mxu0 0.0
    %629 = vmatpush1.xpose.msra.mxu0 0.0
    %630 = vmatprep.subr.mxu0 0.0
    %631 = vmatpush1.xpose.msra.mxu0 0.0
    %632 = vmatprep.subr.mxu0 0.0
    %633 = vmatpush1.xpose.msra.mxu0 0.0
    %634 = vmatprep.subr.mxu0 0.0
    %635 = vmatpush1.xpose.msra.mxu0 0.0
    %636 = vmatprep.subr.mxu0 0.0
    %637 = vmatpush1.xpose.msra.mxu0 0.0
    %638 = vmatprep.subr.mxu0 0.0
    %639 = vmatpush1.xpose.msra.mxu0 0.0
    %640 = vmatprep.subr.mxu0 0.0
    %641 = vmatpush1.xpose.msra.mxu0 0.0
    %642 = vmatprep.mubr.f32.mxu0 0.0
    %643 = vmatmul.mubr.f32.gmra.mrb[0].mxu0 %v574
    %v644 = vpop.f32.mrb[0].mxu0
    %v645 = vadd.f32 0.0, %v644
    %v646 = vpop.f32.mrb[0].mxu0
    %647 = vdwg.mxu0
    %v648 = vsel %vm160, %v567, -inf
    %649 = vmax.xlane.f32.xlu0 %v648
    %v650 = vpop.xlane.xlu0 %649
    %v651 = vsel %vm160, %v645, -inf
    %652 = vmax.xlane.f32.xlu0 %v651
    %v653 = vpop.xlane.xlu0 %652
    %v654 = vsub.f32 %v567, %v650
    %v655 = vsub.f32 %v645, %v653
    %v656 = vmul.f32 %v654, 1.442695
    %v657 = vpow.pop %v656
    %v658 = vmul.f32 %v655, 1.442695
    %v659 = vpow.pop %v658
    %v660 = vsel %vm160, %v657, 0.0
    %661 = vadd.xlane.f32.xlu0 %v660
    %v662 = vpop.xlane.xlu0 %661
    %v663 = vsel %vm160, %v659, 0.0
    %664 = vadd.xlane.f32.xlu0 %v663
    %v665 = vpop.xlane.xlu0 %664
    %v666 = vrcp.pop %v662
    %v667 = vrcp.pop %v665
    %v668 = vmul.f32 %v662, %v666
    %v669 = vmul.f32 %v665, %v667
    %v670 = vsub.f32 2.0, %v668
    %v671 = vsub.f32 2.0, %v669
    %v672 = vmul.f32 %v666, %v670
    %v673 = vmul.f32 %v667, %v671
    %v674 = vmul.f32 %v657, %v672
    %v675 = vmul.f32 %v659, %v673
    %676 = vrot.lane.b32.xlu0 %v149, 56
    %v677 = vpop.permute.xlu0 %676
    %v680 = vsel %vm160, %v674, 0
    %682 = vmatprep.subr.mxu0 0.0
    %683 = vmatpush1.msra.mxu0 %v677
    %684 = vmatprep.subr.mxu0 0.0
    %685 = vmatpush1.msra.mxu0 0.0
    %686 = vmatprep.subr.mxu0 0.0
    %687 = vmatpush1.msra.mxu0 0.0
    %688 = vmatprep.subr.mxu0 0.0
    %689 = vmatpush1.msra.mxu0 0.0
    %690 = vmatprep.subr.mxu0 0.0
    %691 = vmatpush1.msra.mxu0 0.0
    %692 = vmatprep.subr.mxu0 0.0
    %693 = vmatpush1.msra.mxu0 0.0
    %694 = vmatprep.subr.mxu0 0.0
    %695 = vmatpush1.msra.mxu0 0.0
    %696 = vmatprep.subr.mxu0 0.0
    %697 = vmatpush1.msra.mxu0 0.0
    %698 = vmatprep.subr.mxu0 0.0
    %699 = vmatpush1.msra.mxu0 0.0
    %700 = vmatprep.subr.mxu0 0.0
    %701 = vmatpush1.msra.mxu0 0.0
    %702 = vmatprep.subr.mxu0 0.0
    %703 = vmatpush1.msra.mxu0 0.0
    %704 = vmatprep.subr.mxu0 0.0
    %705 = vmatpush1.msra.mxu0 0.0
    %706 = vmatprep.subr.mxu0 0.0
    %707 = vmatpush1.msra.mxu0 0.0
    %708 = vmatprep.subr.mxu0 0.0
    %709 = vmatpush1.msra.mxu0 0.0
    %710 = vmatprep.subr.mxu0 0.0
    %711 = vmatpush1.msra.mxu0 0.0
    %712 = vmatprep.subr.mxu0 0.0
    %713 = vmatpush1.msra.mxu0 0.0
    %714 = vmatprep.subr.mxu0 0.0
    %715 = vmatpush1.msra.mxu0 0.0
    %716 = vmatprep.subr.mxu0 0.0
    %717 = vmatpush1.msra.mxu0 0.0
    %718 = vmatprep.subr.mxu0 0.0
    %719 = vmatpush1.msra.mxu0 0.0
    %720 = vmatprep.subr.mxu0 0.0
    %721 = vmatpush1.msra.mxu0 0.0
    %722 = vmatprep.subr.mxu0 0.0
    %723 = vmatpush1.msra.mxu0 0.0
    %724 = vmatprep.subr.mxu0 0.0
    %725 = vmatpush1.msra.mxu0 0.0
    %726 = vmatprep.subr.mxu0 0.0
    %727 = vmatpush1.msra.mxu0 0.0
    %728 = vmatprep.subr.mxu0 0.0
    %729 = vmatpush1.msra.mxu0 0.0
    %730 = vmatprep.subr.mxu0 0.0
    %731 = vmatpush1.msra.mxu0 0.0
    %732 = vmatprep.subr.mxu0 0.0
    %733 = vmatpush1.msra.mxu0 0.0
    %734 = vmatprep.subr.mxu0 0.0
    %735 = vmatpush1.msra.mxu0 0.0
    %736 = vmatprep.subr.mxu0 0.0
    %737 = vmatpush1.msra.mxu0 0.0
    %738 = vmatprep.subr.mxu0 0.0
    %739 = vmatpush1.msra.mxu0 0.0
    %740 = vmatprep.subr.mxu0 0.0
    %741 = vmatpush1.msra.mxu0 0.0
    %742 = vmatprep.subr.mxu0 0.0
    %743 = vmatpush1.msra.mxu0 0.0
    %744 = vmatprep.subr.mxu0 0.0
    %745 = vmatpush1.msra.mxu0 0.0
    %746 = vmatprep.mubr.f32.mxu0 0.0
    %747 = vmatmul.mubr.f32.gmra.mrb[0].mxu0 %v680
    %v748 = vpop.f32.mrb[0].mxu0
    %v749 = vadd.f32 0.0, %v748
    %v750 = vpop.f32.mrb[0].mxu0
    %751 = vdwg.mxu0
    %752 = vrot.lane.b32.xlu0 %v154, 56
    %v753 = vpop.permute.xlu0 %752
    %v756 = vsel %vm160, %v675, 0
    %758 = vmatprep.subr.mxu0 0.0
    %759 = vmatpush1.msra.mxu0 %v753
    %760 = vmatprep.subr.mxu0 0.0
    %761 = vmatpush1.msra.mxu0 0.0
    %762 = vmatprep.subr.mxu0 0.0
    %763 = vmatpush1.msra.mxu0 0.0
    %764 = vmatprep.subr.mxu0 0.0
    %765 = vmatpush1.msra.mxu0 0.0
    %766 = vmatprep.subr.mxu0 0.0
    %767 = vmatpush1.msra.mxu0 0.0
    %768 = vmatprep.subr.mxu0 0.0
    %769 = vmatpush1.msra.mxu0 0.0
    %770 = vmatprep.subr.mxu0 0.0
    %771 = vmatpush1.msra.mxu0 0.0
    %772 = vmatprep.subr.mxu0 0.0
    %773 = vmatpush1.msra.mxu0 0.0
    %774 = vmatprep.subr.mxu0 0.0
    %775 = vmatpush1.msra.mxu0 0.0
    %776 = vmatprep.subr.mxu0 0.0
    %777 = vmatpush1.msra.mxu0 0.0
    %778 = vmatprep.subr.mxu0 0.0
    %779 = vmatpush1.msra.mxu0 0.0
    %780 = vmatprep.subr.mxu0 0.0
    %781 = vmatpush1.msra.mxu0 0.0
    %782 = vmatprep.subr.mxu0 0.0
    %783 = vmatpush1.msra.mxu0 0.0
    %784 = vmatprep.subr.mxu0 0.0
    %785 = vmatpush1.msra.mxu0 0.0
    %786 = vmatprep.subr.mxu0 0.0
    %787 = vmatpush1.msra.mxu0 0.0
    %788 = vmatprep.subr.mxu0 0.0
    %789 = vmatpush1.msra.mxu0 0.0
    %790 = vmatprep.subr.mxu0 0.0
    %791 = vmatpush1.msra.mxu0 0.0
    %792 = vmatprep.subr.mxu0 0.0
    %793 = vmatpush1.msra.mxu0 0.0
    %794 = vmatprep.subr.mxu0 0.0
    %795 = vmatpush1.msra.mxu0 0.0
    %796 = vmatprep.subr.mxu0 0.0
    %797 = vmatpush1.msra.mxu0 0.0
    %798 = vmatprep.subr.mxu0 0.0
    %799 = vmatpush1.msra.mxu0 0.0
    %800 = vmatprep.subr.mxu0 0.0
    %801 = vmatpush1.msra.mxu0 0.0
    %802 = vmatprep.subr.mxu0 0.0
    %803 = vmatpush1.msra.mxu0 0.0
    %804 = vmatprep.subr.mxu0 0.0
    %805 = vmatpush1.msra.mxu0 0.0
    %806 = vmatprep.subr.mxu0 0.0
    %807 = vmatpush1.msra.mxu0 0.0
    %808 = vmatprep.subr.mxu0 0.0
    %809 = vmatpush1.msra.mxu0 0.0
    %810 = vmatprep.subr.mxu0 0.0
    %811 = vmatpush1.msra.mxu0 0.0
    %812 = vmatprep.subr.mxu0 0.0
    %813 = vmatpush1.msra.mxu0 0.0
    %814 = vmatprep.subr.mxu0 0.0
    %815 = vmatpush1.msra.mxu0 0.0
    %816 = vmatprep.subr.mxu0 0.0
    %817 = vmatpush1.msra.mxu0 0.0
    %818 = vmatprep.subr.mxu0 0.0
    %819 = vmatpush1.msra.mxu0 0.0
    %820 = vmatprep.subr.mxu0 0.0
    %821 = vmatpush1.msra.mxu0 0.0
    %822 = vmatprep.mubr.f32.mxu0 0.0
    %823 = vmatmul.mubr.f32.gmra.mrb[0].mxu0 %v756
    %v824 = vpop.f32.mrb[0].mxu0
    %v825 = vadd.f32 0.0, %v824
    %v826 = vpop.f32.mrb[0].mxu0
    %827 = vdwg.mxu0
    %828 = vrot.lane.b32.xlu0 %v149, 112
    %v829 = vpop.permute.xlu0 %828
    %830 = vrot.lane.b32.xlu0 %v149, 80
    %v831 = vpop.permute.xlu0 %830
    %v832 = vsel %vm160, %v829, 0
    %v834 = vsel %vm160, %v831, 0
    %836 = vmatprep.subr.mxu0 0.0
    %837 = vmatpush1.xpose.msra.mxu0 %v834
    %838 = vmatprep.subr.mxu0 0.0
    %839 = vmatpush1.xpose.msra.mxu0 0.0
    %840 = vmatprep.subr.mxu0 0.0
    %841 = vmatpush1.xpose.msra.mxu0 0.0
    %842 = vmatprep.subr.mxu0 0.0
    %843 = vmatpush1.xpose.msra.mxu0 0.0
    %844 = vmatprep.subr.mxu0 0.0
    %845 = vmatpush1.xpose.msra.mxu0 0.0
    %846 = vmatprep.subr.mxu0 0.0
    %847 = vmatpush1.xpose.msra.mxu0 0.0
    %848 = vmatprep.subr.mxu0 0.0
    %849 = vmatpush1.xpose.msra.mxu0 0.0
    %850 = vmatprep.subr.mxu0 0.0
    %851 = vmatpush1.xpose.msra.mxu0 0.0
    %852 = vmatprep.subr.mxu0 0.0
    %853 = vmatpush1.xpose.msra.mxu0 0.0
    %854 = vmatprep.subr.mxu0 0.0
    %855 = vmatpush1.xpose.msra.mxu0 0.0
    %856 = vmatprep.subr.mxu0 0.0
    %857 = vmatpush1.xpose.msra.mxu0 0.0
    %858 = vmatprep.subr.mxu0 0.0
    %859 = vmatpush1.xpose.msra.mxu0 0.0
    %860 = vmatprep.subr.mxu0 0.0
    %861 = vmatpush1.xpose.msra.mxu0 0.0
    %862 = vmatprep.subr.mxu0 0.0
    %863 = vmatpush1.xpose.msra.mxu0 0.0
    %864 = vmatprep.subr.mxu0 0.0
    %865 = vmatpush1.xpose.msra.mxu0 0.0
    %866 = vmatprep.subr.mxu0 0.0
    %867 = vmatpush1.xpose.msra.mxu0 0.0
    %868 = vmatprep.subr.mxu0 0.0
    %869 = vmatpush1.xpose.msra.mxu0 0.0
    %870 = vmatprep.subr.mxu0 0.0
    %871 = vmatpush1.xpose.msra.mxu0 0.0
    %872 = vmatprep.subr.mxu0 0.0
    %873 = vmatpush1.xpose.msra.mxu0 0.0
    %874 = vmatprep.subr.mxu0 0.0
    %875 = vmatpush1.xpose.msra.mxu0 0.0
    %876 = vmatprep.subr.mxu0 0.0
    %877 = vmatpush1.xpose.msra.mxu0 0.0
    %878 = vmatprep.subr.mxu0 0.0
    %879 = vmatpush1.xpose.msra.mxu0 0.0
    %880 = vmatprep.subr.mxu0 0.0
    %881 = vmatpush1.xpose.msra.mxu0 0.0
    %882 = vmatprep.subr.mxu0 0.0
    %883 = vmatpush1.xpose.msra.mxu0 0.0
    %884 = vmatprep.subr.mxu0 0.0
    %885 = vmatpush1.xpose.msra.mxu0 0.0
    %886 = vmatprep.subr.mxu0 0.0
    %887 = vmatpush1.xpose.msra.mxu0 0.0
    %888 = vmatprep.subr.mxu0 0.0
    %889 = vmatpush1.xpose.msra.mxu0 0.0
    %890 = vmatprep.subr.mxu0 0.0
    %891 = vmatpush1.xpose.msra.mxu0 0.0
    %892 = vmatprep.subr.mxu0 0.0
    %893 = vmatpush1.xpose.msra.mxu0 0.0
    %894 = vmatprep.subr.mxu0 0.0
    %895 = vmatpush1.xpose.msra.mxu0 0.0
    %896 = vmatprep.subr.mxu0 0.0
    %897 = vmatpush1.xpose.msra.mxu0 0.0
    %898 = vmatprep.subr.mxu0 0.0
    %899 = vmatpush1.xpose.msra.mxu0 0.0
    %900 = vmatprep.mubr.f32.mxu0 0.0
    %901 = vmatmul.mubr.f32.gmra.mrb[0].mxu0 %v832
    %v902 = vpop.f32.mrb[0].mxu0
    %v903 = vadd.f32 0.0, %v902
    %v904 = vpop.f32.mrb[0].mxu0
    %905 = vdwg.mxu0
    %906 = vrot.lane.b32.xlu0 %v154, 112
    %v907 = vpop.permute.xlu0 %906
    %908 = vrot.lane.b32.xlu0 %v154, 80
    %v909 = vpop.permute.xlu0 %908
    %v910 = vsel %vm160, %v907, 0
    %v912 = vsel %vm160, %v909, 0
    %914 = vmatprep.subr.mxu0 0.0
    %915 = vmatpush1.xpose.msra.mxu0 %v912
    %916 = vmatprep.subr.mxu0 0.0
    %917 = vmatpush1.xpose.msra.mxu0 0.0
    %918 = vmatprep.subr.mxu0 0.0
    %919 = vmatpush1.xpose.msra.mxu0 0.0
    %920 = vmatprep.subr.mxu0 0.0
    %921 = vmatpush1.xpose.msra.mxu0 0.0
    %922 = vmatprep.subr.mxu0 0.0
    %923 = vmatpush1.xpose.msra.mxu0 0.0
    %924 = vmatprep.subr.mxu0 0.0
    %925 = vmatpush1.xpose.msra.mxu0 0.0
    %926 = vmatprep.subr.mxu0 0.0
    %927 = vmatpush1.xpose.msra.mxu0 0.0
    %928 = vmatprep.subr.mxu0 0.0
    %929 = vmatpush1.xpose.msra.mxu0 0.0
    %930 = vmatprep.subr.mxu0 0.0
    %931 = vmatpush1.xpose.msra.mxu0 0.0
    %932 = vmatprep.subr.mxu0 0.0
    %933 = vmatpush1.xpose.msra.mxu0 0.0
    %934 = vmatprep.subr.mxu0 0.0
    %935 = vmatpush1.xpose.msra.mxu0 0.0
    %936 = vmatprep.subr.mxu0 0.0
    %937 = vmatpush1.xpose.msra.mxu0 0.0
    %938 = vmatprep.subr.mxu0 0.0
    %939 = vmatpush1.xpose.msra.mxu0 0.0
    %940 = vmatprep.subr.mxu0 0.0
    %941 = vmatpush1.xpose.msra.mxu0 0.0
    %942 = vmatprep.subr.mxu0 0.0
    %943 = vmatpush1.xpose.msra.mxu0 0.0
    %944 = vmatprep.subr.mxu0 0.0
    %945 = vmatpush1.xpose.msra.mxu0 0.0
    %946 = vmatprep.subr.mxu0 0.0
    %947 = vmatpush1.xpose.msra.mxu0 0.0
    %948 = vmatprep.subr.mxu0 0.0
    %949 = vmatpush1.xpose.msra.mxu0 0.0
    %950 = vmatprep.subr.mxu0 0.0
    %951 = vmatpush1.xpose.msra.mxu0 0.0
    %952 = vmatprep.subr.mxu0 0.0
    %953 = vmatpush1.xpose.msra.mxu0 0.0
    %954 = vmatprep.subr.mxu0 0.0
    %955 = vmatpush1.xpose.msra.mxu0 0.0
    %956 = vmatprep.subr.mxu0 0.0
    %957 = vmatpush1.xpose.msra.mxu0 0.0
    %958 = vmatprep.subr.mxu0 0.0
    %959 = vmatpush1.xpose.msra.mxu0 0.0
    %960 = vmatprep.subr.mxu0 0.0
    %961 = vmatpush1.xpose.msra.mxu0 0.0
    %962 = vmatprep.subr.mxu0 0.0
    %963 = vmatpush1.xpose.msra.mxu0 0.0
    %964 = vmatprep.subr.mxu0 0.0
    %965 = vmatpush1.xpose.msra.mxu0 0.0
    %966 = vmatprep.subr.mxu0 0.0
    %967 = vmatpush1.xpose.msra.mxu0 0.0
    %968 = vmatprep.subr.mxu0 0.0
    %969 = vmatpush1.xpose.msra.mxu0 0.0
    %970 = vmatprep.subr.mxu0 0.0
    %971 = vmatpush1.xpose.msra.mxu0 0.0
    %972 = vmatprep.subr.mxu0 0.0
    %973 = vmatpush1.xpose.msra.mxu0 0.0
    %974 = vmatprep.subr.mxu0 0.0
    %975 = vmatpush1.xpose.msra.mxu0 0.0
    %976 = vmatprep.subr.mxu0 0.0
    %977 = vmatpush1.xpose.msra.mxu0 0.0
    %978 = vmatprep.mubr.f32.mxu0 0.0
    %979 = vmatmul.mubr.f32.gmra.mrb[0].mxu0 %v910
    %v980 = vpop.f32.mrb[0].mxu0
    %v981 = vadd.f32 0.0, %v980
    %v982 = vpop.f32.mrb[0].mxu0
    %983 = vdwg.mxu0
    %v984 = vsel %vm160, %v903, -inf
    %985 = vmax.xlane.f32.xlu0 %v984
    %v986 = vpop.xlane.xlu0 %985
    %v987 = vsel %vm160, %v981, -inf
    %988 = vmax.xlane.f32.xlu0 %v987
    %v989 = vpop.xlane.xlu0 %988
    %v990 = vsub.f32 %v903, %v986
    %v991 = vsub.f32 %v981, %v989
    %v992 = vmul.f32 %v990, 1.442695
    %v993 = vpow.pop %v992
    %v994 = vmul.f32 %v991, 1.442695
    %v995 = vpow.pop %v994
    %v996 = vsel %vm160, %v993, 0.0
    %997 = vadd.xlane.f32.xlu0 %v996
    %v998 = vpop.xlane.xlu0 %997
    %v999 = vsel %vm160, %v995, 0.0
    %1000 = vadd.xlane.f32.xlu0 %v999
    %v1001 = vpop.xlane.xlu0 %1000
    %v1002 = vrcp.pop %v998
    %v1003 = vrcp.pop %v1001
    %v1004 = vmul.f32 %v998, %v1002
    %v1005 = vmul.f32 %v1001, %v1003
    %v1006 = vsub.f32 2.0, %v1004
    %v1007 = vsub.f32 2.0, %v1005
    %v1008 = vmul.f32 %v1002, %v1006
    %v1009 = vmul.f32 %v1003, %v1007
    %v1010 = vmul.f32 %v993, %v1008
    %v1011 = vmul.f32 %v995, %v1009
    %1012 = vrot.lane.b32.xlu0 %v149, 48
    %v1013 = vpop.permute.xlu0 %1012
    %v1016 = vsel %vm160, %v1010, 0
    %1018 = vmatprep.subr.mxu0 0.0
    %1019 = vmatpush1.msra.mxu0 %v1013
    %1020 = vmatprep.subr.mxu0 0.0
    %1021 = vmatpush1.msra.mxu0 0.0
    %1022 = vmatprep.subr.mxu0 0.0
    %1023 = vmatpush1.msra.mxu0 0.0
    %1024 = vmatprep.subr.mxu0 0.0
    %1025 = vmatpush1.msra.mxu0 0.0
    %1026 = vmatprep.subr.mxu0 0.0
    %1027 = vmatpush1.msra.mxu0 0.0
    %1028 = vmatprep.subr.mxu0 0.0
    %1029 = vmatpush1.msra.mxu0 0.0
    %1030 = vmatprep.subr.mxu0 0.0
    %1031 = vmatpush1.msra.mxu0 0.0
    %1032 = vmatprep.subr.mxu0 0.0
    %1033 = vmatpush1.msra.mxu0 0.0
    %1034 = vmatprep.subr.mxu0 0.0
    %1035 = vmatpush1.msra.mxu0 0.0
    %1036 = vmatprep.subr.mxu0 0.0
    %1037 = vmatpush1.msra.mxu0 0.0
    %1038 = vmatprep.subr.mxu0 0.0
    %1039 = vmatpush1.msra.mxu0 0.0
    %1040 = vmatprep.subr.mxu0 0.0
    %1041 = vmatpush1.msra.mxu0 0.0
    %1042 = vmatprep.subr.mxu0 0.0
    %1043 = vmatpush1.msra.mxu0 0.0
    %1044 = vmatprep.subr.mxu0 0.0
    %1045 = vmatpush1.msra.mxu0 0.0
    %1046 = vmatprep.subr.mxu0 0.0
    %1047 = vmatpush1.msra.mxu0 0.0
    %1048 = vmatprep.subr.mxu0 0.0
    %1049 = vmatpush1.msra.mxu0 0.0
    %1050 = vmatprep.subr.mxu0 0.0
    %1051 = vmatpush1.msra.mxu0 0.0
    %1052 = vmatprep.subr.mxu0 0.0
    %1053 = vmatpush1.msra.mxu0 0.0
    %1054 = vmatprep.subr.mxu0 0.0
    %1055 = vmatpush1.msra.mxu0 0.0
    %1056 = vmatprep.subr.mxu0 0.0
    %1057 = vmatpush1.msra.mxu0 0.0
    %1058 = vmatprep.subr.mxu0 0.0
    %1059 = vmatpush1.msra.mxu0 0.0
    %1060 = vmatprep.subr.mxu0 0.0
    %1061 = vmatpush1.msra.mxu0 0.0
    %1062 = vmatprep.subr.mxu0 0.0
    %1063 = vmatpush1.msra.mxu0 0.0
    %1064 = vmatprep.subr.mxu0 0.0
    %1065 = vmatpush1.msra.mxu0 0.0
    %1066 = vmatprep.subr.mxu0 0.0
    %1067 = vmatpush1.msra.mxu0 0.0
    %1068 = vmatprep.subr.mxu0 0.0
    %1069 = vmatpush1.msra.mxu0 0.0
    %1070 = vmatprep.subr.mxu0 0.0
    %1071 = vmatpush1.msra.mxu0 0.0
    %1072 = vmatprep.subr.mxu0 0.0
    %1073 = vmatpush1.msra.mxu0 0.0
    %1074 = vmatprep.subr.mxu0 0.0
    %1075 = vmatpush1.msra.mxu0 0.0
    %1076 = vmatprep.subr.mxu0 0.0
    %1077 = vmatpush1.msra.mxu0 0.0
    %1078 = vmatprep.subr.mxu0 0.0
    %1079 = vmatpush1.msra.mxu0 0.0
    %1080 = vmatprep.subr.mxu0 0.0
    %1081 = vmatpush1.msra.mxu0 0.0
    %1082 = vmatprep.mubr.f32.mxu0 0.0
    %1083 = vmatmul.mubr.f32.gmra.mrb[0].mxu0 %v1016
    %v1084 = vpop.f32.mrb[0].mxu0
    %v1085 = vadd.f32 0.0, %v1084
    %v1086 = vpop.f32.mrb[0].mxu0
    %1087 = vdwg.mxu0
    %1088 = vrot.lane.b32.xlu0 %v154, 48
    %v1089 = vpop.permute.xlu0 %1088
    %v1092 = vsel %vm160, %v1011, 0
    %1094 = vmatprep.subr.mxu0 0.0
    %1095 = vmatpush1.msra.mxu0 %v1089
    %1096 = vmatprep.subr.mxu0 0.0
    %1097 = vmatpush1.msra.mxu0 0.0
    %1098 = vmatprep.subr.mxu0 0.0
    %1099 = vmatpush1.msra.mxu0 0.0
    %1100 = vmatprep.subr.mxu0 0.0
    %1101 = vmatpush1.msra.mxu0 0.0
    %1102 = vmatprep.subr.mxu0 0.0
    %1103 = vmatpush1.msra.mxu0 0.0
    %1104 = vmatprep.subr.mxu0 0.0
    %1105 = vmatpush1.msra.mxu0 0.0
    %1106 = vmatprep.subr.mxu0 0.0
    %1107 = vmatpush1.msra.mxu0 0.0
    %1108 = vmatprep.subr.mxu0 0.0
    %1109 = vmatpush1.msra.mxu0 0.0
    %1110 = vmatprep.subr.mxu0 0.0
    %1111 = vmatpush1.msra.mxu0 0.0
    %1112 = vmatprep.subr.mxu0 0.0
    %1113 = vmatpush1.msra.mxu0 0.0
    %1114 = vmatprep.subr.mxu0 0.0
    %1115 = vmatpush1.msra.mxu0 0.0
    %1116 = vmatprep.subr.mxu0 0.0
    %1117 = vmatpush1.msra.mxu0 0.0
    %1118 = vmatprep.subr.mxu0 0.0
    %1119 = vmatpush1.msra.mxu0 0.0
    %1120 = vmatprep.subr.mxu0 0.0
    %1121 = vmatpush1.msra.mxu0 0.0
    %1122 = vmatprep.subr.mxu0 0.0
    %1123 = vmatpush1.msra.mxu0 0.0
    %1124 = vmatprep.subr.mxu0 0.0
    %1125 = vmatpush1.msra.mxu0 0.0
    %1126 = vmatprep.subr.mxu0 0.0
    %1127 = vmatpush1.msra.mxu0 0.0
    %1128 = vmatprep.subr.mxu0 0.0
    %1129 = vmatpush1.msra.mxu0 0.0
    %1130 = vmatprep.subr.mxu0 0.0
    %1131 = vmatpush1.msra.mxu0 0.0
    %1132 = vmatprep.subr.mxu0 0.0
    %1133 = vmatpush1.msra.mxu0 0.0
    %1134 = vmatprep.subr.mxu0 0.0
    %1135 = vmatpush1.msra.mxu0 0.0
    %1136 = vmatprep.subr.mxu0 0.0
    %1137 = vmatpush1.msra.mxu0 0.0
    %1138 = vmatprep.subr.mxu0 0.0
    %1139 = vmatpush1.msra.mxu0 0.0
    %1140 = vmatprep.subr.mxu0 0.0
    %1141 = vmatpush1.msra.mxu0 0.0
    %1142 = vmatprep.subr.mxu0 0.0
    %1143 = vmatpush1.msra.mxu0 0.0
    %1144 = vmatprep.subr.mxu0 0.0
    %1145 = vmatpush1.msra.mxu0 0.0
    %1146 = vmatprep.subr.mxu0 0.0
    %1147 = vmatpush1.msra.mxu0 0.0
    %1148 = vmatprep.subr.mxu0 0.0
    %1149 = vmatpush1.msra.mxu0 0.0
    %1150 = vmatprep.subr.mxu0 0.0
    %1151 = vmatpush1.msra.mxu0 0.0
    %1152 = vmatprep.subr.mxu0 0.0
    %1153 = vmatpush1.msra.mxu0 0.0
    %1154 = vmatprep.subr.mxu0 0.0
    %1155 = vmatpush1.msra.mxu0 0.0
    %1156 = vmatprep.subr.mxu0 0.0
    %1157 = vmatpush1.msra.mxu0 0.0
    %1158 = vmatprep.mubr.f32.mxu0 0.0
    %1159 = vmatmul.mubr.f32.gmra.mrb[0].mxu0 %v1092
    %v1160 = vpop.f32.mrb[0].mxu0
    %v1161 = vadd.f32 0.0, %v1160
    %v1162 = vpop.f32.mrb[0].mxu0
    %1163 = vdwg.mxu0
    %1164 = vrot.lane.b32.xlu0 %v149, 104
    %v1165 = vpop.permute.xlu0 %1164
    %1166 = vrot.lane.b32.xlu0 %v149, 72
    %v1167 = vpop.permute.xlu0 %1166
    %v1168 = vsel %vm160, %v1165, 0
    %v1170 = vsel %vm160, %v1167, 0
    %1172 = vmatprep.subr.mxu0 0.0
    %1173 = vmatpush1.xpose.msra.mxu0 %v1170
    %1174 = vmatprep.subr.mxu0 0.0
    %1175 = vmatpush1.xpose.msra.mxu0 0.0
    %1176 = vmatprep.subr.mxu0 0.0
    %1177 = vmatpush1.xpose.msra.mxu0 0.0
    %1178 = vmatprep.subr.mxu0 0.0
    %1179 = vmatpush1.xpose.msra.mxu0 0.0
    %1180 = vmatprep.subr.mxu0 0.0
    %1181 = vmatpush1.xpose.msra.mxu0 0.0
    %1182 = vmatprep.subr.mxu0 0.0
    %1183 = vmatpush1.xpose.msra.mxu0 0.0
    %1184 = vmatprep.subr.mxu0 0.0
    %1185 = vmatpush1.xpose.msra.mxu0 0.0
    %1186 = vmatprep.subr.mxu0 0.0
    %1187 = vmatpush1.xpose.msra.mxu0 0.0
    %1188 = vmatprep.subr.mxu0 0.0
    %1189 = vmatpush1.xpose.msra.mxu0 0.0
    %1190 = vmatprep.subr.mxu0 0.0
    %1191 = vmatpush1.xpose.msra.mxu0 0.0
    %1192 = vmatprep.subr.mxu0 0.0
    %1193 = vmatpush1.xpose.msra.mxu0 0.0
    %1194 = vmatprep.subr.mxu0 0.0
    %1195 = vmatpush1.xpose.msra.mxu0 0.0
    %1196 = vmatprep.subr.mxu0 0.0
    %1197 = vmatpush1.xpose.msra.mxu0 0.0
    %1198 = vmatprep.subr.mxu0 0.0
    %1199 = vmatpush1.xpose.msra.mxu0 0.0
    %1200 = vmatprep.subr.mxu0 0.0
    %1201 = vmatpush1.xpose.msra.mxu0 0.0
    %1202 = vmatprep.subr.mxu0 0.0
    %1203 = vmatpush1.xpose.msra.mxu0 0.0
    %1204 = vmatprep.subr.mxu0 0.0
    %1205 = vmatpush1.xpose.msra.mxu0 0.0
    %1206 = vmatprep.subr.mxu0 0.0
    %1207 = vmatpush1.xpose.msra.mxu0 0.0
    %1208 = vmatprep.subr.mxu0 0.0
    %1209 = vmatpush1.xpose.msra.mxu0 0.0
    %1210 = vmatprep.subr.mxu0 0.0
    %1211 = vmatpush1.xpose.msra.mxu0 0.0
    %1212 = vmatprep.subr.mxu0 0.0
    %1213 = vmatpush1.xpose.msra.mxu0 0.0
    %1214 = vmatprep.subr.mxu0 0.0
    %1215 = vmatpush1.xpose.msra.mxu0 0.0
    %1216 = vmatprep.subr.mxu0 0.0
    %1217 = vmatpush1.xpose.msra.mxu0 0.0
    %1218 = vmatprep.subr.mxu0 0.0
    %1219 = vmatpush1.xpose.msra.mxu0 0.0
    %1220 = vmatprep.subr.mxu0 0.0
    %1221 = vmatpush1.xpose.msra.mxu0 0.0
    %1222 = vmatprep.subr.mxu0 0.0
    %1223 = vmatpush1.xpose.msra.mxu0 0.0
    %1224 = vmatprep.subr.mxu0 0.0
    %1225 = vmatpush1.xpose.msra.mxu0 0.0
    %1226 = vmatprep.subr.mxu0 0.0
    %1227 = vmatpush1.xpose.msra.mxu0 0.0
    %1228 = vmatprep.subr.mxu0 0.0
    %1229 = vmatpush1.xpose.msra.mxu0 0.0
    %1230 = vmatprep.subr.mxu0 0.0
    %1231 = vmatpush1.xpose.msra.mxu0 0.0
    %1232 = vmatprep.subr.mxu0 0.0
    %1233 = vmatpush1.xpose.msra.mxu0 0.0
    %1234 = vmatprep.subr.mxu0 0.0
    %1235 = vmatpush1.xpose.msra.mxu0 0.0
    %1236 = vmatprep.mubr.f32.mxu0 0.0
    %1237 = vmatmul.mubr.f32.gmra.mrb[0].mxu0 %v1168
    %v1238 = vpop.f32.mrb[0].mxu0
    %v1239 = vadd.f32 0.0, %v1238
    %v1240 = vpop.f32.mrb[0].mxu0
    %1241 = vdwg.mxu0
    %1242 = vrot.lane.b32.xlu0 %v154, 104
    %v1243 = vpop.permute.xlu0 %1242
    %1244 = vrot.lane.b32.xlu0 %v154, 72
    %v1245 = vpop.permute.xlu0 %1244
    %v1246 = vsel %vm160, %v1243, 0
    %v1248 = vsel %vm160, %v1245, 0
    %1250 = vmatprep.subr.mxu0 0.0
    %1251 = vmatpush1.xpose.msra.mxu0 %v1248
    %1252 = vmatprep.subr.mxu0 0.0
    %1253 = vmatpush1.xpose.msra.mxu0 0.0
    %1254 = vmatprep.subr.mxu0 0.0
    %1255 = vmatpush1.xpose.msra.mxu0 0.0
    %1256 = vmatprep.subr.mxu0 0.0
    %1257 = vmatpush1.xpose.msra.mxu0 0.0
    %1258 = vmatprep.subr.mxu0 0.0
    %1259 = vmatpush1.xpose.msra.mxu0 0.0
    %1260 = vmatprep.subr.mxu0 0.0
    %1261 = vmatpush1.xpose.msra.mxu0 0.0
    %1262 = vmatprep.subr.mxu0 0.0
    %1263 = vmatpush1.xpose.msra.mxu0 0.0
    %1264 = vmatprep.subr.mxu0 0.0
    %1265 = vmatpush1.xpose.msra.mxu0 0.0
    %1266 = vmatprep.subr.mxu0 0.0
    %1267 = vmatpush1.xpose.msra.mxu0 0.0
    %1268 = vmatprep.subr.mxu0 0.0
    %1269 = vmatpush1.xpose.msra.mxu0 0.0
    %1270 = vmatprep.subr.mxu0 0.0
    %1271 = vmatpush1.xpose.msra.mxu0 0.0
    %1272 = vmatprep.subr.mxu0 0.0
    %1273 = vmatpush1.xpose.msra.mxu0 0.0
    %1274 = vmatprep.subr.mxu0 0.0
    %1275 = vmatpush1.xpose.msra.mxu0 0.0
    %1276 = vmatprep.subr.mxu0 0.0
    %1277 = vmatpush1.xpose.msra.mxu0 0.0
    %1278 = vmatprep.subr.mxu0 0.0
    %1279 = vmatpush1.xpose.msra.mxu0 0.0
    %1280 = vmatprep.subr.mxu0 0.0
    %1281 = vmatpush1.xpose.msra.mxu0 0.0
    %1282 = vmatprep.subr.mxu0 0.0
    %1283 = vmatpush1.xpose.msra.mxu0 0.0
    %1284 = vmatprep.subr.mxu0 0.0
    %1285 = vmatpush1.xpose.msra.mxu0 0.0
    %1286 = vmatprep.subr.mxu0 0.0
    %1287 = vmatpush1.xpose.msra.mxu0 0.0
    %1288 = vmatprep.subr.mxu0 0.0
    %1289 = vmatpush1.xpose.msra.mxu0 0.0
    %1290 = vmatprep.subr.mxu0 0.0
    %1291 = vmatpush1.xpose.msra.mxu0 0.0
    %1292 = vmatprep.subr.mxu0 0.0
    %1293 = vmatpush1.xpose.msra.mxu0 0.0
    %1294 = vmatprep.subr.mxu0 0.0
    %1295 = vmatpush1.xpose.msra.mxu0 0.0
    %1296 = vmatprep.subr.mxu0 0.0
    %1297 = vmatpush1.xpose.msra.mxu0 0.0
    %1298 = vmatprep.subr.mxu0 0.0
    %1299 = vmatpush1.xpose.msra.mxu0 0.0
    %1300 = vmatprep.subr.mxu0 0.0
    %1301 = vmatpush1.xpose.msra.mxu0 0.0
    %1302 = vmatprep.subr.mxu0 0.0
    %1303 = vmatpush1.xpose.msra.mxu0 0.0
    %1304 = vmatprep.subr.mxu0 0.0
    %1305 = vmatpush1.xpose.msra.mxu0 0.0
    %1306 = vmatprep.subr.mxu0 0.0
    %1307 = vmatpush1.xpose.msra.mxu0 0.0
    %1308 = vmatprep.subr.mxu0 0.0
    %1309 = vmatpush1.xpose.msra.mxu0 0.0
    %1310 = vmatprep.subr.mxu0 0.0
    %1311 = vmatpush1.xpose.msra.mxu0 0.0
    %1312 = vmatprep.subr.mxu0 0.0
    %1313 = vmatpush1.xpose.msra.mxu0 0.0
    %1314 = vmatprep.mubr.f32.mxu0 0.0
    %1315 = vmatmul.mubr.f32.gmra.mrb[0].mxu0 %v1246
    %v1316 = vpop.f32.mrb[0].mxu0
    %v1317 = vadd.f32 0.0, %v1316
    %v1318 = vpop.f32.mrb[0].mxu0
    %1319 = vdwg.mxu0
    %v1320 = vsel %vm160, %v1239, -inf
    %1321 = vmax.xlane.f32.xlu0 %v1320
    %v1322 = vpop.xlane.xlu0 %1321
    %v1323 = vsel %vm160, %v1317, -inf
    %1324 = vmax.xlane.f32.xlu0 %v1323
    %v1325 = vpop.xlane.xlu0 %1324
    %v1326 = vsub.f32 %v1239, %v1322
    %v1327 = vsub.f32 %v1317, %v1325
    %v1328 = vmul.f32 %v1326, 1.442695
    %v1329 = vpow.pop %v1328
    %v1330 = vmul.f32 %v1327, 1.442695
    %v1331 = vpow.pop %v1330
    %v1332 = vsel %vm160, %v1329, 0.0
    %1333 = vadd.xlane.f32.xlu0 %v1332
    %v1334 = vpop.xlane.xlu0 %1333
    %v1335 = vsel %vm160, %v1331, 0.0
    %1336 = vadd.xlane.f32.xlu0 %v1335
    %v1337 = vpop.xlane.xlu0 %1336
    %v1338 = vrcp.pop %v1334
    %v1339 = vrcp.pop %v1337
    %v1340 = vmul.f32 %v1334, %v1338
    %v1341 = vmul.f32 %v1337, %v1339
    %v1342 = vsub.f32 2.0, %v1340
    %v1343 = vsub.f32 2.0, %v1341
    %v1344 = vmul.f32 %v1338, %v1342
    %v1345 = vmul.f32 %v1339, %v1343
    %v1346 = vmul.f32 %v1329, %v1344
    %v1347 = vmul.f32 %v1331, %v1345
    %1348 = vrot.lane.b32.xlu0 %v149, 40
    %v1349 = vpop.permute.xlu0 %1348
    %v1352 = vsel %vm160, %v1346, 0
    %1354 = vmatprep.subr.mxu0 0.0
    %1355 = vmatpush1.msra.mxu0 %v1349
    %1356 = vmatprep.subr.mxu0 0.0
    %1357 = vmatpush1.msra.mxu0 0.0
    %1358 = vmatprep.subr.mxu0 0.0
    %1359 = vmatpush1.msra.mxu0 0.0
    %1360 = vmatprep.subr.mxu0 0.0
    %1361 = vmatpush1.msra.mxu0 0.0
    %1362 = vmatprep.subr.mxu0 0.0
    %1363 = vmatpush1.msra.mxu0 0.0
    %1364 = vmatprep.subr.mxu0 0.0
    %1365 = vmatpush1.msra.mxu0 0.0
    %1366 = vmatprep.subr.mxu0 0.0
    %1367 = vmatpush1.msra.mxu0 0.0
    %1368 = vmatprep.subr.mxu0 0.0
    %1369 = vmatpush1.msra.mxu0 0.0
    %1370 = vmatprep.subr.mxu0 0.0
    %1371 = vmatpush1.msra.mxu0 0.0
    %1372 = vmatprep.subr.mxu0 0.0
    %1373 = vmatpush1.msra.mxu0 0.0
    %1374 = vmatprep.subr.mxu0 0.0
    %1375 = vmatpush1.msra.mxu0 0.0
    %1376 = vmatprep.subr.mxu0 0.0
    %1377 = vmatpush1.msra.mxu0 0.0
    %1378 = vmatprep.subr.mxu0 0.0
    %1379 = vmatpush1.msra.mxu0 0.0
    %1380 = vmatprep.subr.mxu0 0.0
    %1381 = vmatpush1.msra.mxu0 0.0
    %1382 = vmatprep.subr.mxu0 0.0
    %1383 = vmatpush1.msra.mxu0 0.0
    %1384 = vmatprep.subr.mxu0 0.0
    %1385 = vmatpush1.msra.mxu0 0.0
    %1386 = vmatprep.subr.mxu0 0.0
    %1387 = vmatpush1.msra.mxu0 0.0
    %1388 = vmatprep.subr.mxu0 0.0
    %1389 = vmatpush1.msra.mxu0 0.0
    %1390 = vmatprep.subr.mxu0 0.0
    %1391 = vmatpush1.msra.mxu0 0.0
    %1392 = vmatprep.subr.mxu0 0.0
    %1393 = vmatpush1.msra.mxu0 0.0
    %1394 = vmatprep.subr.mxu0 0.0
    %1395 = vmatpush1.msra.mxu0 0.0
    %1396 = vmatprep.subr.mxu0 0.0
    %1397 = vmatpush1.msra.mxu0 0.0
    %1398 = vmatprep.subr.mxu0 0.0
    %1399 = vmatpush1.msra.mxu0 0.0
    %1400 = vmatprep.subr.mxu0 0.0
    %1401 = vmatpush1.msra.mxu0 0.0
    %1402 = vmatprep.subr.mxu0 0.0
    %1403 = vmatpush1.msra.mxu0 0.0
    %1404 = vmatprep.subr.mxu0 0.0
    %1405 = vmatpush1.msra.mxu0 0.0
    %1406 = vmatprep.subr.mxu0 0.0
    %1407 = vmatpush1.msra.mxu0 0.0
    %1408 = vmatprep.subr.mxu0 0.0
    %1409 = vmatpush1.msra.mxu0 0.0
    %1410 = vmatprep.subr.mxu0 0.0
    %1411 = vmatpush1.msra.mxu0 0.0
    %1412 = vmatprep.subr.mxu0 0.0
    %1413 = vmatpush1.msra.mxu0 0.0
    %1414 = vmatprep.subr.mxu0 0.0
    %1415 = vmatpush1.msra.mxu0 0.0
    %1416 = vmatprep.subr.mxu0 0.0
    %1417 = vmatpush1.msra.mxu0 0.0
    %1418 = vmatprep.mubr.f32.mxu0 0.0
    %1419 = vmatmul.mubr.f32.gmra.mrb[0].mxu0 %v1352
    %v1420 = vpop.f32.mrb[0].mxu0
    %v1421 = vadd.f32 0.0, %v1420
    %v1422 = vpop.f32.mrb[0].mxu0
    %1423 = vdwg.mxu0
    %1424 = vrot.lane.b32.xlu0 %v154, 40
    %v1425 = vpop.permute.xlu0 %1424
    %v1428 = vsel %vm160, %v1347, 0
    %1430 = vmatprep.subr.mxu0 0.0
    %1431 = vmatpush1.msra.mxu0 %v1425
    %1432 = vmatprep.subr.mxu0 0.0
    %1433 = vmatpush1.msra.mxu0 0.0
    %1434 = vmatprep.subr.mxu0 0.0
    %1435 = vmatpush1.msra.mxu0 0.0
    %1436 = vmatprep.subr.mxu0 0.0
    %1437 = vmatpush1.msra.mxu0 0.0
    %1438 = vmatprep.subr.mxu0 0.0
    %1439 = vmatpush1.msra.mxu0 0.0
    %1440 = vmatprep.subr.mxu0 0.0
    %1441 = vmatpush1.msra.mxu0 0.0
    %1442 = vmatprep.subr.mxu0 0.0
    %1443 = vmatpush1.msra.mxu0 0.0
    %1444 = vmatprep.subr.mxu0 0.0
    %1445 = vmatpush1.msra.mxu0 0.0
    %1446 = vmatprep.subr.mxu0 0.0
    %1447 = vmatpush1.msra.mxu0 0.0
    %1448 = vmatprep.subr.mxu0 0.0
    %1449 = vmatpush1.msra.mxu0 0.0
    %1450 = vmatprep.subr.mxu0 0.0
    %1451 = vmatpush1.msra.mxu0 0.0
    %1452 = vmatprep.subr.mxu0 0.0
    %1453 = vmatpush1.msra.mxu0 0.0
    %1454 = vmatprep.subr.mxu0 0.0
    %1455 = vmatpush1.msra.mxu0 0.0
    %1456 = vmatprep.subr.mxu0 0.0
    %1457 = vmatpush1.msra.mxu0 0.0
    %1458 = vmatprep.subr.mxu0 0.0
    %1459 = vmatpush1.msra.mxu0 0.0
    %1460 = vmatprep.subr.mxu0 0.0
    %1461 = vmatpush1.msra.mxu0 0.0
    %1462 = vmatprep.subr.mxu0 0.0
    %1463 = vmatpush1.msra.mxu0 0.0
    %1464 = vmatprep.subr.mxu0 0.0
    %1465 = vmatpush1.msra.mxu0 0.0
    %1466 = vmatprep.subr.mxu0 0.0
    %1467 = vmatpush1.msra.mxu0 0.0
    %1468 = vmatprep.subr.mxu0 0.0
    %1469 = vmatpush1.msra.mxu0 0.0
    %1470 = vmatprep.subr.mxu0 0.0
    %1471 = vmatpush1.msra.mxu0 0.0
    %1472 = vmatprep.subr.mxu0 0.0
    %1473 = vmatpush1.msra.mxu0 0.0
    %1474 = vmatprep.subr.mxu0 0.0
    %1475 = vmatpush1.msra.mxu0 0.0
    %1476 = vmatprep.subr.mxu0 0.0
    %1477 = vmatpush1.msra.mxu0 0.0
    %1478 = vmatprep.subr.mxu0 0.0
    %1479 = vmatpush1.msra.mxu0 0.0
    %1480 = vmatprep.subr.mxu0 0.0
    %1481 = vmatpush1.msra.mxu0 0.0
    %1482 = vmatprep.subr.mxu0 0.0
    %1483 = vmatpush1.msra.mxu0 0.0
    %1484 = vmatprep.subr.mxu0 0.0
    %1485 = vmatpush1.msra.mxu0 0.0
    %1486 = vmatprep.subr.mxu0 0.0
    %1487 = vmatpush1.msra.mxu0 0.0
    %1488 = vmatprep.subr.mxu0 0.0
    %1489 = vmatpush1.msra.mxu0 0.0
    %1490 = vmatprep.subr.mxu0 0.0
    %1491 = vmatpush1.msra.mxu0 0.0
    %1492 = vmatprep.subr.mxu0 0.0
    %1493 = vmatpush1.msra.mxu0 0.0
    %1494 = vmatprep.mubr.f32.mxu0 0.0
    %1495 = vmatmul.mubr.f32.gmra.mrb[0].mxu0 %v1428
    %v1496 = vpop.f32.mrb[0].mxu0
    %v1497 = vadd.f32 0.0, %v1496
    %v1498 = vpop.f32.mrb[0].mxu0
    %1499 = vdwg.mxu0
    %1502 = vrot.lane.b32.xlu0 %v749, 8
    %v1503 = vpop.permute.xlu0 %1502
    %1504 = vrot.lane.b32.xlu0 %v825, 8
    %v1505 = vpop.permute.xlu0 %1504
    %1510 = vrot.lane.b32.xlu0 %v1085, 16
    %v1511 = vpop.permute.xlu0 %1510
    %1512 = vrot.lane.b32.xlu0 %v1161, 16
    %v1513 = vpop.permute.xlu0 %1512
    %1518 = vrot.lane.b32.xlu0 %v1421, 24
    %v1519 = vpop.permute.xlu0 %1518
    %1520 = vrot.lane.b32.xlu0 %v1497, 24
    %v1521 = vpop.permute.xlu0 %1520
    %v1524 = vsel %vm160, %v413, %v1503
    %v1525 = vsel %vm160, %v489, %v1505
    %vm1526 = vcmask 130048
    %v1527 = vsel %vm1526, %v1524, %v1511
    %v1528 = vsel %vm1526, %v1525, %v1513
    %vm1529 = vcmask 195584
    %v1530 = vsel %vm1529, %v1527, %v1519
    %v1531 = vsel %vm1529, %v1528, %v1521
    %v1532 = vld [vmem:[#allocation5] sm:$0xff]
    %v1533 = vld [vmem:[#allocation5 + $0x8] sm:$0xff]
    %v1534 = vld [vmem:[#allocation5 + $0x10] sm:$0xff]
    %v1535 = vld [vmem:[#allocation5 + $0x18] sm:$0xff]
    %v1536 = vld [vmem:[%s4] sm:$0x1]
    %v1538 = vlaneseq
    %v1539 = vshrl.u32 %v1538, 7
    %v1540 = vsub.s32 0, %v1539
    %v1541 = vrot.slane %v1536, %v1540
    %v1544 = vsel %vm75, %v1530, 0
    %v1547 = vsel %vm75, %v1531, 0
    %1549 = vmatprep.subr.mxu0 0.0
    %1550 = vmatpush1.msra.mxu0 %v1532
    %1551 = vmatprep.subr.mxu0 0.0
    %1552 = vmatpush1.msra.mxu0 %v1533
    %1553 = vmatprep.subr.mxu0 0.0
    %1554 = vmatpush1.msra.mxu0 %v1534
    %1555 = vmatprep.subr.mxu0 0.0
    %1556 = vmatpush1.msra.mxu0 %v1535
    %1557 = vmatprep.subr.mxu0 0.0
    %1558 = vmatpush1.msra.mxu0 0.0
    %1559 = vmatprep.subr.mxu0 0.0
    %1560 = vmatpush1.msra.mxu0 0.0
    %1561 = vmatprep.subr.mxu0 0.0
    %1562 = vmatpush1.msra.mxu0 0.0
    %1563 = vmatprep.subr.mxu0 0.0
    %1564 = vmatpush1.msra.mxu0 0.0
    %1565 = vmatprep.subr.mxu0 0.0
    %1566 = vmatpush1.msra.mxu0 0.0
    %1567 = vmatprep.subr.mxu0 0.0
    %1568 = vmatpush1.msra.mxu0 0.0
    %1569 = vmatprep.subr.mxu0 0.0
    %1570 = vmatpush1.msra.mxu0 0.0
    %1571 = vmatprep.subr.mxu0 0.0
    %1572 = vmatpush1.msra.mxu0 0.0
    %1573 = vmatprep.subr.mxu0 0.0
    %1574 = vmatpush1.msra.mxu0 0.0
    %1575 = vmatprep.subr.mxu0 0.0
    %1576 = vmatpush1.msra.mxu0 0.0
    %1577 = vmatprep.subr.mxu0 0.0
    %1578 = vmatpush1.msra.mxu0 0.0
    %1579 = vmatprep.subr.mxu0 0.0
    %1580 = vmatpush1.msra.mxu0 0.0
    %1581 = vmatprep.subr.mxu0 0.0
    %1582 = vmatpush1.msra.mxu0 0.0
    %1583 = vmatprep.subr.mxu0 0.0
    %1584 = vmatpush1.msra.mxu0 0.0
    %1585 = vmatprep.subr.mxu0 0.0
    %1586 = vmatpush1.msra.mxu0 0.0
    %1587 = vmatprep.subr.mxu0 0.0
    %1588 = vmatpush1.msra.mxu0 0.0
    %1589 = vmatprep.subr.mxu0 0.0
    %1590 = vmatpush1.msra.mxu0 0.0
    %1591 = vmatprep.subr.mxu0 0.0
    %1592 = vmatpush1.msra.mxu0 0.0
    %1593 = vmatprep.subr.mxu0 0.0
    %1594 = vmatpush1.msra.mxu0 0.0
    %1595 = vmatprep.subr.mxu0 0.0
    %1596 = vmatpush1.msra.mxu0 0.0
    %1597 = vmatprep.subr.mxu0 0.0
    %1598 = vmatpush1.msra.mxu0 0.0
    %1599 = vmatprep.subr.mxu0 0.0
    %1600 = vmatpush1.msra.mxu0 0.0
    %1601 = vmatprep.subr.mxu0 0.0
    %1602 = vmatpush1.msra.mxu0 0.0
    %1603 = vmatprep.subr.mxu0 0.0
    %1604 = vmatpush1.msra.mxu0 0.0
    %1605 = vmatprep.subr.mxu0 0.0
    %1606 = vmatpush1.msra.mxu0 0.0
    %1607 = vmatprep.subr.mxu0 0.0
    %1608 = vmatpush1.msra.mxu0 0.0
    %1609 = vmatprep.subr.mxu0 0.0
    %1610 = vmatpush1.msra.mxu0 0.0
    %1611 = vmatprep.subr.mxu0 0.0
    %1612 = vmatpush1.msra.mxu0 0.0
    %1613 = vmatprep.mubr.f32.mxu0 0.0
    %1614 = vmatmul.mubr.f32.gmra.mrb[0].mxu0 %v1544
    %v1615 = vpop.f32.mrb[0].mxu0
    %v1616 = vadd.f32 %v1541, %v1615
    %v1617 = vpop.f32.mrb[0].mxu0
    %1618 = vmatprep.mubr.f32.mxu0 0.0
    %1619 = vmatmul.mubr.f32.gmra.mrb[0].mxu0 %v1547
    %v1620 = vpop.f32.mrb[0].mxu0
    %v1621 = vadd.f32 %v1541, %v1620
    %v1622 = vpop.f32.mrb[0].mxu0
    %1623 = vdwg.mxu0
    %v1624 = vadd.f32 %v62, %v1616
    %v1625 = vadd.f32 %v63, %v1621
    %v1626 = vsel %vm75, %v1624, 0.0
    %1627 = vadd.xlane.f32.xlu0 %v1626
    %v1628 = vpop.xlane.xlu0 %1627
    %v1629 = vsel %vm75, %v1625, 0.0
    %1630 = vadd.xlane.f32.xlu0 %v1629
    %v1631 = vpop.xlane.xlu0 %1630
    %v1632 = vrcp.pop 32.0
    %v1633 = vmul.f32 %v1628, %v1632
    %v1634 = vmul.f32 %v1631, %v1632
    %v1635 = vmul.f32 %v1624, %v1624
    %v1636 = vmul.f32 %v1625, %v1625
    %v1637 = vsel %vm75, %v1635, 0.0
    %1638 = vadd.xlane.f32.xlu0 %v1637
    %v1639 = vpop.xlane.xlu0 %1638
    %v1640 = vsel %vm75, %v1636, 0.0
    %1641 = vadd.xlane.f32.xlu0 %v1640
    %v1642 = vpop.xlane.xlu0 %1641
    %v1643 = vmul.f32 %v1639, %v1632
    %v1644 = vmul.f32 %v1642, %v1632
    %v1645 = vmul.f32 %v1633, %v1633
    %v1646 = vmul.f32 %v1634, %v1634
    %v1647 = vsub.f32 %v1643, %v1645
    %v1648 = vsub.f32 %v1644, %v1646
    %v1649 = vsub.f32 %v1624, %v1633
    %v1650 = vsub.f32 %v1625, %v1634
    %v1651 = vadd.f32 %v1647, 1e-05
    %v1652 = vadd.f32 %v1648, 1e-05
    %v1653 = vrsqrt.pop %v1651
    %v1654 = vrsqrt.pop %v1652
    %v1655 = vmul.f32 %v1649, %v1653
    %v1656 = vmul.f32 %v1650, %v1654
    %v1657 = vld [vmem:[%s5] sm:$0x1]
    %v1659 = vlaneseq
    %v1660 = vshrl.u32 %v1659, 7
    %v1661 = vsub.s32 0, %v1660
    %v1662 = vrot.slane %v1657, %v1661
    %v1664 = vmul.f32 %v1655, %v1662
    %v1665 = vmul.f32 %v1656, %v1662
    %v1666 = vld [vmem:[%s6] sm:$0x1]
    %v1668 = vlaneseq
    %v1669 = vshrl.u32 %v1668, 7
    %v1670 = vsub.s32 0, %v1669
    %v1671 = vrot.slane %v1666, %v1670
    %v1673 = vadd.f32 %v1664, %v1671
    %v1674 = vadd.f32 %v1665, %v1671
    %s1675 = scalar_lea.vmem [#allocation3], 32
    %v1676 = vld [vmem:[%s1675] sm:$0xff]
    %v1677 = vld [vmem:[%s1675 + $0x8] sm:$0xff]
    %v1678 = vld [vmem:[%s1675 + $0x10] sm:$0xff]
    %v1679 = vld [vmem:[%s1675 + $0x18] sm:$0xff]
    %s1680 = scalar_lea.vmem %s2, 1
    %v1681 = vld [vmem:[%s1680] sm:$0x1]
    %v1683 = vlaneseq
    %v1684 = vshrl.u32 %v1683, 7
    %v1685 = vsub.s32 0, %v1684
    %v1686 = vrot.slane %v1681, %v1685
    %v1689 = vsel %vm75, %v1673, 0
    %v1692 = vsel %vm75, %v1674, 0
    %1694 = vmatprep.subr.mxu0 0.0
    %1695 = vmatpush1.msra.mxu0 %v1676
    %1696 = vmatprep.subr.mxu0 0.0
    %1697 = vmatpush1.msra.mxu0 %v1677
    %1698 = vmatprep.subr.mxu0 0.0
    %1699 = vmatpush1.msra.mxu0 %v1678
    %1700 = vmatprep.subr.mxu0 0.0
    %1701 = vmatpush1.msra.mxu0 %v1679
    %1702 = vmatprep.subr.mxu0 0.0
    %1703 = vmatpush1.msra.mxu0 0.0
    %1704 = vmatprep.subr.mxu0 0.0
    %1705 = vmatpush1.msra.mxu0 0.0
    %1706 = vmatprep.subr.mxu0 0.0
    %1707 = vmatpush1.msra.mxu0 0.0
    %1708 = vmatprep.subr.mxu0 0.0
    %1709 = vmatpush1.msra.mxu0 0.0
    %1710 = vmatprep.subr.mxu0 0.0
    %1711 = vmatpush1.msra.mxu0 0.0
    %1712 = vmatprep.subr.mxu0 0.0
    %1713 = vmatpush1.msra.mxu0 0.0
    %1714 = vmatprep.subr.mxu0 0.0
    %1715 = vmatpush1.msra.mxu0 0.0
    %1716 = vmatprep.subr.mxu0 0.0
    %1717 = vmatpush1.msra.mxu0 0.0
    %1718 = vmatprep.subr.mxu0 0.0
    %1719 = vmatpush1.msra.mxu0 0.0
    %1720 = vmatprep.subr.mxu0 0.0
    %1721 = vmatpush1.msra.mxu0 0.0
    %1722 = vmatprep.subr.mxu0 0.0
    %1723 = vmatpush1.msra.mxu0 0.0
    %1724 = vmatprep.subr.mxu0 0.0
    %1725 = vmatpush1.msra.mxu0 0.0
    %1726 = vmatprep.subr.mxu0 0.0
    %1727 = vmatpush1.msra.mxu0 0.0
    %1728 = vmatprep.subr.mxu0 0.0
    %1729 = vmatpush1.msra.mxu0 0.0
    %1730 = vmatprep.subr.mxu0 0.0
    %1731 = vmatpush1.msra.mxu0 0.0
    %1732 = vmatprep.subr.mxu0 0.0
    %1733 = vmatpush1.msra.mxu0 0.0
    %1734 = vmatprep.subr.mxu0 0.0
    %1735 = vmatpush1.msra.mxu0 0.0
    %1736 = vmatprep.subr.mxu0 0.0
    %1737 = vmatpush1.msra.mxu0 0.0
    %1738 = vmatprep.subr.mxu0 0.0
    %1739 = vmatpush1.msra.mxu0 0.0
    %1740 = vmatprep.subr.mxu0 0.0
    %1741 = vmatpush1.msra.mxu0 0.0
    %1742 = vmatprep.subr.mxu0 0.0
    %1743 = vmatpush1.msra.mxu0 0.0
    %1744 = vmatprep.subr.mxu0 0.0
    %1745 = vmatpush1.msra.mxu0 0.0
    %1746 = vmatprep.subr.mxu0 0.0
    %1747 = vmatpush1.msra.mxu0 0.0
    %1748 = vmatprep.subr.mxu0 0.0
    %1749 = vmatpush1.msra.mxu0 0.0
    %1750 = vmatprep.subr.mxu0 0.0
    %1751 = vmatpush1.msra.mxu0 0.0
    %1752 = vmatprep.subr.mxu0 0.0
    %1753 = vmatpush1.msra.mxu0 0.0
    %1754 = vmatprep.subr.mxu0 0.0
    %1755 = vmatpush1.msra.mxu0 0.0
    %1756 = vmatprep.subr.mxu0 0.0
    %1757 = vmatpush1.msra.mxu0 0.0
    %1758 = vmatprep.mubr.f32.mxu0 0.0
    %1759 = vmatmul.mubr.f32.gmra.mrb[0].mxu0 %v1689
    %v1760 = vpop.f32.mrb[0].mxu0
    %v1761 = vadd.f32 %v1686, %v1760
    %v1762 = vpop.f32.mrb[0].mxu0
    %1763 = vmatprep.mubr.f32.mxu0 0.0
    %1764 = vmatmul.mubr.f32.gmra.mrb[0].mxu0 %v1692
    %v1765 = vpop.f32.mrb[0].mxu0
    %v1766 = vadd.f32 %v1686, %v1765
    %v1767 = vpop.f32.mrb[0].mxu0
    %1768 = vdwg.mxu0
    %1770 = vrot.lane.b32.xlu0 %v1761, 96
    %v1771 = vpop.permute.xlu0 %1770
    %v1772 = vsel %vm160, %v1761, 0
    %v1774 = vsel %vm160, %v1771, 0
    %1776 = vmatprep.subr.mxu0 0.0
    %1777 = vmatpush1.xpose.msra.mxu0 %v1774
    %1778 = vmatprep.subr.mxu0 0.0
    %1779 = vmatpush1.xpose.msra.mxu0 0.0
    %1780 = vmatprep.subr.mxu0 0.0
    %1781 = vmatpush1.xpose.msra.mxu0 0.0
    %1782 = vmatprep.subr.mxu0 0.0
    %1783 = vmatpush1.xpose.msra.mxu0 0.0
    %1784 = vmatprep.subr.mxu0 0.0
    %1785 = vmatpush1.xpose.msra.mxu0 0.0
    %1786 = vmatprep.subr.mxu0 0.0
    %1787 = vmatpush1.xpose.msra.mxu0 0.0
    %1788 = vmatprep.subr.mxu0 0.0
    %1789 = vmatpush1.xpose.msra.mxu0 0.0
    %1790 = vmatprep.subr.mxu0 0.0
    %1791 = vmatpush1.xpose.msra.mxu0 0.0
    %1792 = vmatprep.subr.mxu0 0.0
    %1793 = vmatpush1.xpose.msra.mxu0 0.0
    %1794 = vmatprep.subr.mxu0 0.0
    %1795 = vmatpush1.xpose.msra.mxu0 0.0
    %1796 = vmatprep.subr.mxu0 0.0
    %1797 = vmatpush1.xpose.msra.mxu0 0.0
    %1798 = vmatprep.subr.mxu0 0.0
    %1799 = vmatpush1.xpose.msra.mxu0 0.0
    %1800 = vmatprep.subr.mxu0 0.0
    %1801 = vmatpush1.xpose.msra.mxu0 0.0
    %1802 = vmatprep.subr.mxu0 0.0
    %1803 = vmatpush1.xpose.msra.mxu0 0.0
    %1804 = vmatprep.subr.mxu0 0.0
    %1805 = vmatpush1.xpose.msra.mxu0 0.0
    %1806 = vmatprep.subr.mxu0 0.0
    %1807 = vmatpush1.xpose.msra.mxu0 0.0
    %1808 = vmatprep.subr.mxu0 0.0
    %1809 = vmatpush1.xpose.msra.mxu0 0.0
    %1810 = vmatprep.subr.mxu0 0.0
    %1811 = vmatpush1.xpose.msra.mxu0 0.0
    %1812 = vmatprep.subr.mxu0 0.0
    %1813 = vmatpush1.xpose.msra.mxu0 0.0
    %1814 = vmatprep.subr.mxu0 0.0
    %1815 = vmatpush1.xpose.msra.mxu0 0.0
    %1816 = vmatprep.subr.mxu0 0.0
    %1817 = vmatpush1.xpose.msra.mxu0 0.0
    %1818 = vmatprep.subr.mxu0 0.0
    %1819 = vmatpush1.xpose.msra.mxu0 0.0
    %1820 = vmatprep.subr.mxu0 0.0
    %1821 = vmatpush1.xpose.msra.mxu0 0.0
    %1822 = vmatprep.subr.mxu0 0.0
    %1823 = vmatpush1.xpose.msra.mxu0 0.0
    %1824 = vmatprep.subr.mxu0 0.0
    %1825 = vmatpush1.xpose.msra.mxu0 0.0
    %1826 = vmatprep.subr.mxu0 0.0
    %1827 = vmatpush1.xpose.msra.mxu0 0.0
    %1828 = vmatprep.subr.mxu0 0.0
    %1829 = vmatpush1.xpose.msra.mxu0 0.0
    %1830 = vmatprep.subr.mxu0 0.0
    %1831 = vmatpush1.xpose.msra.mxu0 0.0
    %1832 = vmatprep.subr.mxu0 0.0
    %1833 = vmatpush1.xpose.msra.mxu0 0.0
    %1834 = vmatprep.subr.mxu0 0.0
    %1835 = vmatpush1.xpose.msra.mxu0 0.0
    %1836 = vmatprep.subr.mxu0 0.0
    %1837 = vmatpush1.xpose.msra.mxu0 0.0
    %1838 = vmatprep.subr.mxu0 0.0
    %1839 = vmatpush1.xpose.msra.mxu0 0.0
    %1840 = vmatprep.mubr.f32.mxu0 0.0
    %1841 = vmatmul.mubr.f32.gmra.mrb[0].mxu0 %v1772
    %v1842 = vpop.f32.mrb[0].mxu0
    %v1843 = vadd.f32 0.0, %v1842
    %v1844 = vpop.f32.mrb[0].mxu0
    %1845 = vdwg.mxu0
    %1847 = vrot.lane.b32.xlu0 %v1766, 96
    %v1848 = vpop.permute.xlu0 %1847
    %v1849 = vsel %vm160, %v1766, 0
    %v1851 = vsel %vm160, %v1848, 0
    %1853 = vmatprep.subr.mxu0 0.0
    %1854 = vmatpush1.xpose.msra.mxu0 %v1851
    %1855 = vmatprep.subr.mxu0 0.0
    %1856 = vmatpush1.xpose.msra.mxu0 0.0
    %1857 = vmatprep.subr.mxu0 0.0
    %1858 = vmatpush1.xpose.msra.mxu0 0.0
    %1859 = vmatprep.subr.mxu0 0.0
    %1860 = vmatpush1.xpose.msra.mxu0 0.0
    %1861 = vmatprep.subr.mxu0 0.0
    %1862 = vmatpush1.xpose.msra.mxu0 0.0
    %1863 = vmatprep.subr.mxu0 0.0
    %1864 = vmatpush1.xpose.msra.mxu0 0.0
    %1865 = vmatprep.subr.mxu0 0.0
    %1866 = vmatpush1.xpose.msra.mxu0 0.0
    %1867 = vmatprep.subr.mxu0 0.0
    %1868 = vmatpush1.xpose.msra.mxu0 0.0
    %1869 = vmatprep.subr.mxu0 0.0
    %1870 = vmatpush1.xpose.msra.mxu0 0.0
    %1871 = vmatprep.subr.mxu0 0.0
    %1872 = vmatpush1.xpose.msra.mxu0 0.0
    %1873 = vmatprep.subr.mxu0 0.0
    %1874 = vmatpush1.xpose.msra.mxu0 0.0
    %1875 = vmatprep.subr.mxu0 0.0
    %1876 = vmatpush1.xpose.msra.mxu0 0.0
    %1877 = vmatprep.subr.mxu0 0.0
    %1878 = vmatpush1.xpose.msra.mxu0 0.0
    %1879 = vmatprep.subr.mxu0 0.0
    %1880 = vmatpush1.xpose.msra.mxu0 0.0
    %1881 = vmatprep.subr.mxu0 0.0
    %1882 = vmatpush1.xpose.msra.mxu0 0.0
    %1883 = vmatprep.subr.mxu0 0.0
    %1884 = vmatpush1.xpose.msra.mxu0 0.0
    %1885 = vmatprep.subr.mxu0 0.0
    %1886 = vmatpush1.xpose.msra.mxu0 0.0
    %1887 = vmatprep.subr.mxu0 0.0
    %1888 = vmatpush1.xpose.msra.mxu0 0.0
    %1889 = vmatprep.subr.mxu0 0.0
    %1890 = vmatpush1.xpose.msra.mxu0 0.0
    %1891 = vmatprep.subr.mxu0 0.0
    %1892 = vmatpush1.xpose.msra.mxu0 0.0
    %1893 = vmatprep.subr.mxu0 0.0
    %1894 = vmatpush1.xpose.msra.mxu0 0.0
    %1895 = vmatprep.subr.mxu0 0.0
    %1896 = vmatpush1.xpose.msra.mxu0 0.0
    %1897 = vmatprep.subr.mxu0 0.0
    %1898 = vmatpush1.xpose.msra.mxu0 0.0
    %1899 = vmatprep.subr.mxu0 0.0
    %1900 = vmatpush1.xpose.msra.mxu0 0.0
    %1901 = vmatprep.subr.mxu0 0.0
    %1902 = vmatpush1.xpose.msra.mxu0 0.0
    %1903 = vmatprep.subr.mxu0 0.0
    %1904 = vmatpush1.xpose.msra.mxu0 0.0
    %1905 = vmatprep.subr.mxu0 0.0
    %1906 = vmatpush1.xpose.msra.mxu0 0.0
    %1907 = vmatprep.subr.mxu0 0.0
    %1908 = vmatpush1.xpose.msra.mxu0 0.0
    %1909 = vmatprep.subr.mxu0 0.0
    %1910 = vmatpush1.xpose.msra.mxu0 0.0
    %1911 = vmatprep.subr.mxu0 0.0
    %1912 = vmatpush1.xpose.msra.mxu0 0.0
    %1913 = vmatprep.subr.mxu0 0.0
    %1914 = vmatpush1.xpose.msra.mxu0 0.0
    %1915 = vmatprep.subr.mxu0 0.0
    %1916 = vmatpush1.xpose.msra.mxu0 0.0
    %1917 = vmatprep.mubr.f32.mxu0 0.0
    %1918 = vmatmul.mubr.f32.gmra.mrb[0].mxu0 %v1849
    %v1919 = vpop.f32.mrb[0].mxu0
    %v1920 = vadd.f32 0.0, %v1919
    %v1921 = vpop.f32.mrb[0].mxu0
    %1922 = vdwg.mxu0
    %v1923 = vsel %vm160, %v1843, -inf
    %1924 = vmax.xlane.f32.xlu0 %v1923
    %v1925 = vpop.xlane.xlu0 %1924
    %v1926 = vsel %vm160, %v1920, -inf
    %1927 = vmax.xlane.f32.xlu0 %v1926
    %v1928 = vpop.xlane.xlu0 %1927
    %v1929 = vsub.f32 %v1843, %v1925
    %v1930 = vsub.f32 %v1920, %v1928
    %v1931 = vmul.f32 %v1929, 1.442695
    %v1932 = vpow.pop %v1931
    %v1933 = vmul.f32 %v1930, 1.442695
    %v1934 = vpow.pop %v1933
    %v1935 = vsel %vm160, %v1932, 0.0
    %1936 = vadd.xlane.f32.xlu0 %v1935
    %v1937 = vpop.xlane.xlu0 %1936
    %v1938 = vsel %vm160, %v1934, 0.0
    %1939 = vadd.xlane.f32.xlu0 %v1938
    %v1940 = vpop.xlane.xlu0 %1939
    %v1941 = vrcp.pop %v1937
    %v1942 = vrcp.pop %v1940
    %v1943 = vmul.f32 %v1937, %v1941
    %v1944 = vmul.f32 %v1940, %v1942
    %v1945 = vsub.f32 2.0, %v1943
    %v1946 = vsub.f32 2.0, %v1944
    %v1947 = vmul.f32 %v1941, %v1945
    %v1948 = vmul.f32 %v1942, %v1946
    %v1949 = vmul.f32 %v1932, %v1947
    %v1950 = vmul.f32 %v1934, %v1948
    %1951 = vrot.lane.b32.xlu0 %v1761, 64
    %v1952 = vpop.permute.xlu0 %1951
    %v1955 = vsel %vm160, %v1949, 0
    %1957 = vmatprep.subr.mxu0 0.0
    %1958 = vmatpush1.msra.mxu0 %v1952
    %1959 = vmatprep.subr.mxu0 0.0
    %1960 = vmatpush1.msra.mxu0 0.0
    %1961 = vmatprep.subr.mxu0 0.0
    %1962 = vmatpush1.msra.mxu0 0.0
    %1963 = vmatprep.subr.mxu0 0.0
    %1964 = vmatpush1.msra.mxu0 0.0
    %1965 = vmatprep.subr.mxu0 0.0
    %1966 = vmatpush1.msra.mxu0 0.0
    %1967 = vmatprep.subr.mxu0 0.0
    %1968 = vmatpush1.msra.mxu0 0.0
    %1969 = vmatprep.subr.mxu0 0.0
    %1970 = vmatpush1.msra.mxu0 0.0
    %1971 = vmatprep.subr.mxu0 0.0
    %1972 = vmatpush1.msra.mxu0 0.0
    %1973 = vmatprep.subr.mxu0 0.0
    %1974 = vmatpush1.msra.mxu0 0.0
    %1975 = vmatprep.subr.mxu0 0.0
    %1976 = vmatpush1.msra.mxu0 0.0
    %1977 = vmatprep.subr.mxu0 0.0
    %1978 = vmatpush1.msra.mxu0 0.0
    %1979 = vmatprep.subr.mxu0 0.0
    %1980 = vmatpush1.msra.mxu0 0.0
    %1981 = vmatprep.subr.mxu0 0.0
    %1982 = vmatpush1.msra.mxu0 0.0
    %1983 = vmatprep.subr.mxu0 0.0
    %1984 = vmatpush1.msra.mxu0 0.0
    %1985 = vmatprep.subr.mxu0 0.0
    %1986 = vmatpush1.msra.mxu0 0.0
    %1987 = vmatprep.subr.mxu0 0.0
    %1988 = vmatpush1.msra.mxu0 0.0
    %1989 = vmatprep.subr.mxu0 0.0
    %1990 = vmatpush1.msra.mxu0 0.0
    %1991 = vmatprep.subr.mxu0 0.0
    %1992 = vmatpush1.msra.mxu0 0.0
    %1993 = vmatprep.subr.mxu0 0.0
    %1994 = vmatpush1.msra.mxu0 0.0
    %1995 = vmatprep.subr.mxu0 0.0
    %1996 = vmatpush1.msra.mxu0 0.0
    %1997 = vmatprep.subr.mxu0 0.0
    %1998 = vmatpush1.msra.mxu0 0.0
    %1999 = vmatprep.subr.mxu0 0.0
    %2000 = vmatpush1.msra.mxu0 0.0
    %2001 = vmatprep.subr.mxu0 0.0
    %2002 = vmatpush1.msra.mxu0 0.0
    %2003 = vmatprep.subr.mxu0 0.0
    %2004 = vmatpush1.msra.mxu0 0.0
    %2005 = vmatprep.subr.mxu0 0.0
    %2006 = vmatpush1.msra.mxu0 0.0
    %2007 = vmatprep.subr.mxu0 0.0
    %2008 = vmatpush1.msra.mxu0 0.0
    %2009 = vmatprep.subr.mxu0 0.0
    %2010 = vmatpush1.msra.mxu0 0.0
    %2011 = vmatprep.subr.mxu0 0.0
    %2012 = vmatpush1.msra.mxu0 0.0
    %2013 = vmatprep.subr.mxu0 0.0
    %2014 = vmatpush1.msra.mxu0 0.0
    %2015 = vmatprep.subr.mxu0 0.0
    %2016 = vmatpush1.msra.mxu0 0.0
    %2017 = vmatprep.subr.mxu0 0.0
    %2018 = vmatpush1.msra.mxu0 0.0
    %2019 = vmatprep.subr.mxu0 0.0
    %2020 = vmatpush1.msra.mxu0 0.0
    %2021 = vmatprep.mubr.f32.mxu0 0.0
    %2022 = vmatmul.mubr.f32.gmra.mrb[0].mxu0 %v1955
    %v2023 = vpop.f32.mrb[0].mxu0
    %v2024 = vadd.f32 0.0, %v2023
    %v2025 = vpop.f32.mrb[0].mxu0
    %2026 = vdwg.mxu0
    %2027 = vrot.lane.b32.xlu0 %v1766, 64
    %v2028 = vpop.permute.xlu0 %2027
    %v2031 = vsel %vm160, %v1950, 0
    %2033 = vmatprep.subr.mxu0 0.0
    %2034 = vmatpush1.msra.mxu0 %v2028
    %2035 = vmatprep.subr.mxu0 0.0
    %2036 = vmatpush1.msra.mxu0 0.0
    %2037 = vmatprep.subr.mxu0 0.0
    %2038 = vmatpush1.msra.mxu0 0.0
    %2039 = vmatprep.subr.mxu0 0.0
    %2040 = vmatpush1.msra.mxu0 0.0
    %2041 = vmatprep.subr.mxu0 0.0
    %2042 = vmatpush1.msra.mxu0 0.0
    %2043 = vmatprep.subr.mxu0 0.0
    %2044 = vmatpush1.msra.mxu0 0.0
    %2045 = vmatprep.subr.mxu0 0.0
    %2046 = vmatpush1.msra.mxu0 0.0
    %2047 = vmatprep.subr.mxu0 0.0
    %2048 = vmatpush1.msra.mxu0 0.0
    %2049 = vmatprep.subr.mxu0 0.0
    %2050 = vmatpush1.msra.mxu0 0.0
    %2051 = vmatprep.subr.mxu0 0.0
    %2052 = vmatpush1.msra.mxu0 0.0
    %2053 = vmatprep.subr.mxu0 0.0
    %2054 = vmatpush1.msra.mxu0 0.0
    %2055 = vmatprep.subr.mxu0 0.0
    %2056 = vmatpush1.msra.mxu0 0.0
    %2057 = vmatprep.subr.mxu0 0.0
    %2058 = vmatpush1.msra.mxu0 0.0
    %2059 = vmatprep.subr.mxu0 0.0
    %2060 = vmatpush1.msra.mxu0 0.0
    %2061 = vmatprep.subr.mxu0 0.0
    %2062 = vmatpush1.msra.mxu0 0.0
    %2063 = vmatprep.subr.mxu0 0.0
    %2064 = vmatpush1.msra.mxu0 0.0
    %2065 = vmatprep.subr.mxu0 0.0
    %2066 = vmatpush1.msra.mxu0 0.0
    %2067 = vmatprep.subr.mxu0 0.0
    %2068 = vmatpush1.msra.mxu0 0.0
    %2069 = vmatprep.subr.mxu0 0.0
    %2070 = vmatpush1.msra.mxu0 0.0
    %2071 = vmatprep.subr.mxu0 0.0
    %2072 = vmatpush1.msra.mxu0 0.0
    %2073 = vmatprep.subr.mxu0 0.0
    %2074 = vmatpush1.msra.mxu0 0.0
    %2075 = vmatprep.subr.mxu0 0.0
    %2076 = vmatpush1.msra.mxu0 0.0
    %2077 = vmatprep.subr.mxu0 0.0
    %2078 = vmatpush1.msra.mxu0 0.0
    %2079 = vmatprep.subr.mxu0 0.0
    %2080 = vmatpush1.msra.mxu0 0.0
    %2081 = vmatprep.subr.mxu0 0.0
    %2082 = vmatpush1.msra.mxu0 0.0
    %2083 = vmatprep.subr.mxu0 0.0
    %2084 = vmatpush1.msra.mxu0 0.0
    %2085 = vmatprep.subr.mxu0 0.0
    %2086 = vmatpush1.msra.mxu0 0.0
    %2087 = vmatprep.subr.mxu0 0.0
    %2088 = vmatpush1.msra.mxu0 0.0
    %2089 = vmatprep.subr.mxu0 0.0
    %2090 = vmatpush1.msra.mxu0 0.0
    %2091 = vmatprep.subr.mxu0 0.0
    %2092 = vmatpush1.msra.mxu0 0.0
    %2093 = vmatprep.subr.mxu0 0.0
    %2094 = vmatpush1.msra.mxu0 0.0
    %2095 = vmatprep.subr.mxu0 0.0
    %2096 = vmatpush1.msra.mxu0 0.0
    %2097 = vmatprep.mubr.f32.mxu0 0.0
    %2098 = vmatmul.mubr.f32.gmra.mrb[0].mxu0 %v2031
    %v2099 = vpop.f32.mrb[0].mxu0
    %v2100 = vadd.f32 0.0, %v2099
    %v2101 = vpop.f32.mrb[0].mxu0
    %2102 = vdwg.mxu0
    %2103 = vrot.lane.b32.xlu0 %v1761, 120
    %v2104 = vpop.permute.xlu0 %2103
    %2105 = vrot.lane.b32.xlu0 %v1761, 88
    %v2106 = vpop.permute.xlu0 %2105
    %v2107 = vsel %vm160, %v2104, 0
    %v2109 = vsel %vm160, %v2106, 0
    %2111 = vmatprep.subr.mxu0 0.0
    %2112 = vmatpush1.xpose.msra.mxu0 %v2109
    %2113 = vmatprep.subr.mxu0 0.0
    %2114 = vmatpush1.xpose.msra.mxu0 0.0
    %2115 = vmatprep.subr.mxu0 0.0
    %2116 = vmatpush1.xpose.msra.mxu0 0.0
    %2117 = vmatprep.subr.mxu0 0.0
    %2118 = vmatpush1.xpose.msra.mxu0 0.0
    %2119 = vmatprep.subr.mxu0 0.0
    %2120 = vmatpush1.xpose.msra.mxu0 0.0
    %2121 = vmatprep.subr.mxu0 0.0
    %2122 = vmatpush1.xpose.msra.mxu0 0.0
    %2123 = vmatprep.subr.mxu0 0.0
    %2124 = vmatpush1.xpose.msra.mxu0 0.0
    %2125 = vmatprep.subr.mxu0 0.0
    %2126 = vmatpush1.xpose.msra.mxu0 0.0
    %2127 = vmatprep.subr.mxu0 0.0
    %2128 = vmatpush1.xpose.msra.mxu0 0.0
    %2129 = vmatprep.subr.mxu0 0.0
    %2130 = vmatpush1.xpose.msra.mxu0 0.0
    %2131 = vmatprep.subr.mxu0 0.0
    %2132 = vmatpush1.xpose.msra.mxu0 0.0
    %2133 = vmatprep.subr.mxu0 0.0
    %2134 = vmatpush1.xpose.msra.mxu0 0.0
    %2135 = vmatprep.subr.mxu0 0.0
    %2136 = vmatpush1.xpose.msra.mxu0 0.0
    %2137 = vmatprep.subr.mxu0 0.0
    %2138 = vmatpush1.xpose.msra.mxu0 0.0
    %2139 = vmatprep.subr.mxu0 0.0
    %2140 = vmatpush1.xpose.msra.mxu0 0.0
    %2141 = vmatprep.subr.mxu0 0.0
    %2142 = vmatpush1.xpose.msra.mxu0 0.0
    %2143 = vmatprep.subr.mxu0 0.0
    %2144 = vmatpush1.xpose.msra.mxu0 0.0
    %2145 = vmatprep.subr.mxu0 0.0
    %2146 = vmatpush1.xpose.msra.mxu0 0.0
    %2147 = vmatprep.subr.mxu0 0.0
    %2148 = vmatpush1.xpose.msra.mxu0 0.0
    %2149 = vmatprep.subr.mxu0 0.0
    %2150 = vmatpush1.xpose.msra.mxu0 0.0
    %2151 = vmatprep.subr.mxu0 0.0
    %2152 = vmatpush1.xpose.msra.mxu0 0.0
    %2153 = vmatprep.subr.mxu0 0.0
    %2154 = vmatpush1.xpose.msra.mxu0 0.0
    %2155 = vmatprep.subr.mxu0 0.0
    %2156 = vmatpush1.xpose.msra.mxu0 0.0
    %2157 = vmatprep.subr.mxu0 0.0
    %2158 = vmatpush1.xpose.msra.mxu0 0.0
    %2159 = vmatprep.subr.mxu0 0.0
    %2160 = vmatpush1.xpose.msra.mxu0 0.0
    %2161 = vmatprep.subr.mxu0 0.0
    %2162 = vmatpush1.xpose.msra.mxu0 0.0
    %2163 = vmatprep.subr.mxu0 0.0
    %2164 = vmatpush1.xpose.msra.mxu0 0.0
    %2165 = vmatprep.subr.mxu0 0.0
    %2166 = vmatpush1.xpose.msra.mxu0 0.0
    %2167 = vmatprep.subr.mxu0 0.0
    %2168 = vmatpush1.xpose.msra.mxu0 0.0
    %2169 = vmatprep.subr.mxu0 0.0
    %2170 = vmatpush1.xpose.msra.mxu0 0.0
    %2171 = vmatprep.subr.mxu0 0.0
    %2172 = vmatpush1.xpose.msra.mxu0 0.0
    %2173 = vmatprep.subr.mxu0 0.0
    %2174 = vmatpush1.xpose.msra.mxu0 0.0
    %2175 = vmatprep.mubr.f32.mxu0 0.0
    %2176 = vmatmul.mubr.f32.gmra.mrb[0].mxu0 %v2107
    %v2177 = vpop.f32.mrb[0].mxu0
    %v2178 = vadd.f32 0.0, %v2177
    %v2179 = vpop.f32.mrb[0].mxu0
    %2180 = vdwg.mxu0
    %2181 = vrot.lane.b32.xlu0 %v1766, 120
    %v2182 = vpop.permute.xlu0 %2181
    %2183 = vrot.lane.b32.xlu0 %v1766, 88
    %v2184 = vpop.permute.xlu0 %2183
    %v2185 = vsel %vm160, %v2182, 0
    %v2187 = vsel %vm160, %v2184, 0
    %2189 = vmatprep.subr.mxu0 0.0
    %2190 = vmatpush1.xpose.msra.mxu0 %v2187
    %2191 = vmatprep.subr.mxu0 0.0
    %2192 = vmatpush1.xpose.msra.mxu0 0.0
    %2193 = vmatprep.subr.mxu0 0.0
    %2194 = vmatpush1.xpose.msra.mxu0 0.0
    %2195 = vmatprep.subr.mxu0 0.0
    %2196 = vmatpush1.xpose.msra.mxu0 0.0
    %2197 = vmatprep.subr.mxu0 0.0
    %2198 = vmatpush1.xpose.msra.mxu0 0.0
    %2199 = vmatprep.subr.mxu0 0.0
    %2200 = vmatpush1.xpose.msra.mxu0 0.0
    %2201 = vmatprep.subr.mxu0 0.0
    %2202 = vmatpush1.xpose.msra.mxu0 0.0
    %2203 = vmatprep.subr.mxu0 0.0
    %2204 = vmatpush1.xpose.msra.mxu0 0.0
    %2205 = vmatprep.subr.mxu0 0.0
    %2206 = vmatpush1.xpose.msra.mxu0 0.0
    %2207 = vmatprep.subr.mxu0 0.0
    %2208 = vmatpush1.xpose.msra.mxu0 0.0
    %2209 = vmatprep.subr.mxu0 0.0
    %2210 = vmatpush1.xpose.msra.mxu0 0.0
    %2211 = vmatprep.subr.mxu0 0.0
    %2212 = vmatpush1.xpose.msra.mxu0 0.0
    %2213 = vmatprep.subr.mxu0 0.0
    %2214 = vmatpush1.xpose.msra.mxu0 0.0
    %2215 = vmatprep.subr.mxu0 0.0
    %2216 = vmatpush1.xpose.msra.mxu0 0.0
    %2217 = vmatprep.subr.mxu0 0.0
    %2218 = vmatpush1.xpose.msra.mxu0 0.0
    %2219 = vmatprep.subr.mxu0 0.0
    %2220 = vmatpush1.xpose.msra.mxu0 0.0
    %2221 = vmatprep.subr.mxu0 0.0
    %2222 = vmatpush1.xpose.msra.mxu0 0.0
    %2223 = vmatprep.subr.mxu0 0.0
    %2224 = vmatpush1.xpose.msra.mxu0 0.0
    %2225 = vmatprep.subr.mxu0 0.0
    %2226 = vmatpush1.xpose.msra.mxu0 0.0
    %2227 = vmatprep.subr.mxu0 0.0
    %2228 = vmatpush1.xpose.msra.mxu0 0.0
    %2229 = vmatprep.subr.mxu0 0.0
    %2230 = vmatpush1.xpose.msra.mxu0 0.0
    %2231 = vmatprep.subr.mxu0 0.0
    %2232 = vmatpush1.xpose.msra.mxu0 0.0
    %2233 = vmatprep.subr.mxu0 0.0
    %2234 = vmatpush1.xpose.msra.mxu0 0.0
    %2235 = vmatprep.subr.mxu0 0.0
    %2236 = vmatpush1.xpose.msra.mxu0 0.0
    %2237 = vmatprep.subr.mxu0 0.0
    %2238 = vmatpush1.xpose.msra.mxu0 0.0
    %2239 = vmatprep.subr.mxu0 0.0
    %2240 = vmatpush1.xpose.msra.mxu0 0.0
    %2241 = vmatprep.subr.mxu0 0.0
    %2242 = vmatpush1.xpose.msra.mxu0 0.0
    %2243 = vmatprep.subr.mxu0 0.0
    %2244 = vmatpush1.xpose.msra.mxu0 0.0
    %2245 = vmatprep.subr.mxu0 0.0
    %2246 = vmatpush1.xpose.msra.mxu0 0.0
    %2247 = vmatprep.subr.mxu0 0.0
    %2248 = vmatpush1.xpose.msra.mxu0 0.0
    %2249 = vmatprep.subr.mxu0 0.0
    %2250 = vmatpush1.xpose.msra.mxu0 0.0
    %2251 = vmatprep.subr.mxu0 0.0
    %2252 = vmatpush1.xpose.msra.mxu0 0.0
    %2253 = vmatprep.mubr.f32.mxu0 0.0
    %2254 = vmatmul.mubr.f32.gmra.mrb[0].mxu0 %v2185
    %v2255 = vpop.f32.mrb[0].mxu0
    %v2256 = vadd.f32 0.0, %v2255
    %v2257 = vpop.f32.mrb[0].mxu0
    %2258 = vdwg.mxu0
    %v2259 = vsel %vm160, %v2178, -inf
    %2260 = vmax.xlane.f32.xlu0 %v2259
    %v2261 = vpop.xlane.xlu0 %2260
    %v2262 = vsel %vm160, %v2256, -inf
    %2263 = vmax.xlane.f32.xlu0 %v2262
    %v2264 = vpop.xlane.xlu0 %2263
    %v2265 = vsub.f32 %v2178, %v2261
    %v2266 = vsub.f32 %v2256, %v2264
    %v2267 = vmul.f32 %v2265, 1.442695
    %v2268 = vpow.pop %v2267
    %v2269 = vmul.f32 %v2266, 1.442695
    %v2270 = vpow.pop %v2269
    %v2271 = vsel %vm160, %v2268, 0.0
    %2272 = vadd.xlane.f32.xlu0 %v2271
    %v2273 = vpop.xlane.xlu0 %2272
    %v2274 = vsel %vm160, %v2270, 0.0
    %2275 = vadd.xlane.f32.xlu0 %v2274
    %v2276 = vpop.xlane.xlu0 %2275
    %v2277 = vrcp.pop %v2273
    %v2278 = vrcp.pop %v2276
    %v2279 = vmul.f32 %v2273, %v2277
    %v2280 = vmul.f32 %v2276, %v2278
    %v2281 = vsub.f32 2.0, %v2279
    %v2282 = vsub.f32 2.0, %v2280
    %v2283 = vmul.f32 %v2277, %v2281
    %v2284 = vmul.f32 %v2278, %v2282
    %v2285 = vmul.f32 %v2268, %v2283
    %v2286 = vmul.f32 %v2270, %v2284
    %2287 = vrot.lane.b32.xlu0 %v1761, 56
    %v2288 = vpop.permute.xlu0 %2287
    %v2291 = vsel %vm160, %v2285, 0
    %2293 = vmatprep.subr.mxu0 0.0
    %2294 = vmatpush1.msra.mxu0 %v2288
    %2295 = vmatprep.subr.mxu0 0.0
    %2296 = vmatpush1.msra.mxu0 0.0
    %2297 = vmatprep.subr.mxu0 0.0
    %2298 = vmatpush1.msra.mxu0 0.0
    %2299 = vmatprep.subr.mxu0 0.0
    %2300 = vmatpush1.msra.mxu0 0.0
    %2301 = vmatprep.subr.mxu0 0.0
    %2302 = vmatpush1.msra.mxu0 0.0
    %2303 = vmatprep.subr.mxu0 0.0
    %2304 = vmatpush1.msra.mxu0 0.0
    %2305 = vmatprep.subr.mxu0 0.0
    %2306 = vmatpush1.msra.mxu0 0.0
    %2307 = vmatprep.subr.mxu0 0.0
    %2308 = vmatpush1.msra.mxu0 0.0
    %2309 = vmatprep.subr.mxu0 0.0
    %2310 = vmatpush1.msra.mxu0 0.0
    %2311 = vmatprep.subr.mxu0 0.0
    %2312 = vmatpush1.msra.mxu0 0.0
    %2313 = vmatprep.subr.mxu0 0.0
    %2314 = vmatpush1.msra.mxu0 0.0
    %2315 = vmatprep.subr.mxu0 0.0
    %2316 = vmatpush1.msra.mxu0 0.0
    %2317 = vmatprep.subr.mxu0 0.0
    %2318 = vmatpush1.msra.mxu0 0.0
    %2319 = vmatprep.subr.mxu0 0.0
    %2320 = vmatpush1.msra.mxu0 0.0
    %2321 = vmatprep.subr.mxu0 0.0
    %2322 = vmatpush1.msra.mxu0 0.0
    %2323 = vmatprep.subr.mxu0 0.0
    %2324 = vmatpush1.msra.mxu0 0.0
    %2325 = vmatprep.subr.mxu0 0.0
    %2326 = vmatpush1.msra.mxu0 0.0
    %2327 = vmatprep.subr.mxu0 0.0
    %2328 = vmatpush1.msra.mxu0 0.0
    %2329 = vmatprep.subr.mxu0 0.0
    %2330 = vmatpush1.msra.mxu0 0.0
    %2331 = vmatprep.subr.mxu0 0.0
    %2332 = vmatpush1.msra.mxu0 0.0
    %2333 = vmatprep.subr.mxu0 0.0
    %2334 = vmatpush1.msra.mxu0 0.0
    %2335 = vmatprep.subr.mxu0 0.0
    %2336 = vmatpush1.msra.mxu0 0.0
    %2337 = vmatprep.subr.mxu0 0.0
    %2338 = vmatpush1.msra.mxu0 0.0
    %2339 = vmatprep.subr.mxu0 0.0
    %2340 = vmatpush1.msra.mxu0 0.0
    %2341 = vmatprep.subr.mxu0 0.0
    %2342 = vmatpush1.msra.mxu0 0.0
    %2343 = vmatprep.subr.mxu0 0.0
    %2344 = vmatpush1.msra.mxu0 0.0
    %2345 = vmatprep.subr.mxu0 0.0
    %2346 = vmatpush1.msra.mxu0 0.0
    %2347 = vmatprep.subr.mxu0 0.0
    %2348 = vmatpush1.msra.mxu0 0.0
    %2349 = vmatprep.subr.mxu0 0.0
    %2350 = vmatpush1.msra.mxu0 0.0
    %2351 = vmatprep.subr.mxu0 0.0
    %2352 = vmatpush1.msra.mxu0 0.0
    %2353 = vmatprep.subr.mxu0 0.0
    %2354 = vmatpush1.msra.mxu0 0.0
    %2355 = vmatprep.subr.mxu0 0.0
    %2356 = vmatpush1.msra.mxu0 0.0
    %2357 = vmatprep.mubr.f32.mxu0 0.0
    %2358 = vmatmul.mubr.f32.gmra.mrb[0].mxu0 %v2291
    %v2359 = vpop.f32.mrb[0].mxu0
    %v2360 = vadd.f32 0.0, %v2359
    %v2361 = vpop.f32.mrb[0].mxu0
    %2362 = vdwg.mxu0
    %2363 = vrot.lane.b32.xlu0 %v1766, 56
    %v2364 = vpop.permute.xlu0 %2363
    %v2367 = vsel %vm160, %v2286, 0
    %2369 = vmatprep.subr.mxu0 0.0
    %2370 = vmatpush1.msra.mxu0 %v2364
    %2371 = vmatprep.subr.mxu0 0.0
    %2372 = vmatpush1.msra.mxu0 0.0
    %2373 = vmatprep.subr.mxu0 0.0
    %2374 = vmatpush1.msra.mxu0 0.0
    %2375 = vmatprep.subr.mxu0 0.0
    %2376 = vmatpush1.msra.mxu0 0.0
    %2377 = vmatprep.subr.mxu0 0.0
    %2378 = vmatpush1.msra.mxu0 0.0
    %2379 = vmatprep.subr.mxu0 0.0
    %2380 = vmatpush1.msra.mxu0 0.0
    %2381 = vmatprep.subr.mxu0 0.0
    %2382 = vmatpush1.msra.mxu0 0.0
    %2383 = vmatprep.subr.mxu0 0.0
    %2384 = vmatpush1.msra.mxu0 0.0
    %2385 = vmatprep.subr.mxu0 0.0
    %2386 = vmatpush1.msra.mxu0 0.0
    %2387 = vmatprep.subr.mxu0 0.0
    %2388 = vmatpush1.msra.mxu0 0.0
    %2389 = vmatprep.subr.mxu0 0.0
    %2390 = vmatpush1.msra.mxu0 0.0
    %2391 = vmatprep.subr.mxu0 0.0
    %2392 = vmatpush1.msra.mxu0 0.0
    %2393 = vmatprep.subr.mxu0 0.0
    %2394 = vmatpush1.msra.mxu0 0.0
    %2395 = vmatprep.subr.mxu0 0.0
    %2396 = vmatpush1.msra.mxu0 0.0
    %2397 = vmatprep.subr.mxu0 0.0
    %2398 = vmatpush1.msra.mxu0 0.0
    %2399 = vmatprep.subr.mxu0 0.0
    %2400 = vmatpush1.msra.mxu0 0.0
    %2401 = vmatprep.subr.mxu0 0.0
    %2402 = vmatpush1.msra.mxu0 0.0
    %2403 = vmatprep.subr.mxu0 0.0
    %2404 = vmatpush1.msra.mxu0 0.0
    %2405 = vmatprep.subr.mxu0 0.0
    %2406 = vmatpush1.msra.mxu0 0.0
    %2407 = vmatprep.subr.mxu0 0.0
    %2408 = vmatpush1.msra.mxu0 0.0
    %2409 = vmatprep.subr.mxu0 0.0
    %2410 = vmatpush1.msra.mxu0 0.0
    %2411 = vmatprep.subr.mxu0 0.0
    %2412 = vmatpush1.msra.mxu0 0.0
    %2413 = vmatprep.subr.mxu0 0.0
    %2414 = vmatpush1.msra.mxu0 0.0
    %2415 = vmatprep.subr.mxu0 0.0
    %2416 = vmatpush1.msra.mxu0 0.0
    %2417 = vmatprep.subr.mxu0 0.0
    %2418 = vmatpush1.msra.mxu0 0.0
    %2419 = vmatprep.subr.mxu0 0.0
    %2420 = vmatpush1.msra.mxu0 0.0
    %2421 = vmatprep.subr.mxu0 0.0
    %2422 = vmatpush1.msra.mxu0 0.0
    %2423 = vmatprep.subr.mxu0 0.0
    %2424 = vmatpush1.msra.mxu0 0.0
    %2425 = vmatprep.subr.mxu0 0.0
    %2426 = vmatpush1.msra.mxu0 0.0
    %2427 = vmatprep.subr.mxu0 0.0
    %2428 = vmatpush1.msra.mxu0 0.0
    %2429 = vmatprep.subr.mxu0 0.0
    %2430 = vmatpush1.msra.mxu0 0.0
    %2431 = vmatprep.subr.mxu0 0.0
    %2432 = vmatpush1.msra.mxu0 0.0
    %2433 = vmatprep.mubr.f32.mxu0 0.0
    %2434 = vmatmul.mubr.f32.gmra.mrb[0].mxu0 %v2367
    %v2435 = vpop.f32.mrb[0].mxu0
    %v2436 = vadd.f32 0.0, %v2435
    %v2437 = vpop.f32.mrb[0].mxu0
    %2438 = vdwg.mxu0
    %2439 = vrot.lane.b32.xlu0 %v1761, 112
    %v2440 = vpop.permute.xlu0 %2439
    %2441 = vrot.lane.b32.xlu0 %v1761, 80
    %v2442 = vpop.permute.xlu0 %2441
    %v2443 = vsel %vm160, %v2440, 0
    %v2445 = vsel %vm160, %v2442, 0
    %2447 = vmatprep.subr.mxu0 0.0
    %2448 = vmatpush1.xpose.msra.mxu0 %v2445
    %2449 = vmatprep.subr.mxu0 0.0
    %2450 = vmatpush1.xpose.msra.mxu0 0.0
    %2451 = vmatprep.subr.mxu0 0.0
    %2452 = vmatpush1.xpose.msra.mxu0 0.0
    %2453 = vmatprep.subr.mxu0 0.0
    %2454 = vmatpush1.xpose.msra.mxu0 0.0
    %2455 = vmatprep.subr.mxu0 0.0
    %2456 = vmatpush1.xpose.msra.mxu0 0.0
    %2457 = vmatprep.subr.mxu0 0.0
    %2458 = vmatpush1.xpose.msra.mxu0 0.0
    %2459 = vmatprep.subr.mxu0 0.0
    %2460 = vmatpush1.xpose.msra.mxu0 0.0
    %2461 = vmatprep.subr.mxu0 0.0
    %2462 = vmatpush1.xpose.msra.mxu0 0.0
    %2463 = vmatprep.subr.mxu0 0.0
    %2464 = vmatpush1.xpose.msra.mxu0 0.0
    %2465 = vmatprep.subr.mxu0 0.0
    %2466 = vmatpush1.xpose.msra.mxu0 0.0
    %2467 = vmatprep.subr.mxu0 0.0
    %2468 = vmatpush1.xpose.msra.mxu0 0.0
    %2469 = vmatprep.subr.mxu0 0.0
    %2470 = vmatpush1.xpose.msra.mxu0 0.0
    %2471 = vmatprep.subr.mxu0 0.0
    %2472 = vmatpush1.xpose.msra.mxu0 0.0
    %2473 = vmatprep.subr.mxu0 0.0
    %2474 = vmatpush1.xpose.msra.mxu0 0.0
    %2475 = vmatprep.subr.mxu0 0.0
    %2476 = vmatpush1.xpose.msra.mxu0 0.0
    %2477 = vmatprep.subr.mxu0 0.0
    %2478 = vmatpush1.xpose.msra.mxu0 0.0
    %2479 = vmatprep.subr.mxu0 0.0
    %2480 = vmatpush1.xpose.msra.mxu0 0.0
    %2481 = vmatprep.subr.mxu0 0.0
    %2482 = vmatpush1.xpose.msra.mxu0 0.0
    %2483 = vmatprep.subr.mxu0 0.0
    %2484 = vmatpush1.xpose.msra.mxu0 0.0
    %2485 = vmatprep.subr.mxu0 0.0
    %2486 = vmatpush1.xpose.msra.mxu0 0.0
    %2487 = vmatprep.subr.mxu0 0.0
    %2488 = vmatpush1.xpose.msra.mxu0 0.0
    %2489 = vmatprep.subr.mxu0 0.0
    %2490 = vmatpush1.xpose.msra.mxu0 0.0
    %2491 = vmatprep.subr.mxu0 0.0
    %2492 = vmatpush1.xpose.msra.mxu0 0.0
    %2493 = vmatprep.subr.mxu0 0.0
    %2494 = vmatpush1.xpose.msra.mxu0 0.0
    %2495 = vmatprep.subr.mxu0 0.0
    %2496 = vmatpush1.xpose.msra.mxu0 0.0
    %2497 = vmatprep.subr.mxu0 0.0
    %2498 = vmatpush1.xpose.msra.mxu0 0.0
    %2499 = vmatprep.subr.mxu0 0.0
    %2500 = vmatpush1.xpose.msra.mxu0 0.0
    %2501 = vmatprep.subr.mxu0 0.0
    %2502 = vmatpush1.xpose.msra.mxu0 0.0
    %2503 = vmatprep.subr.mxu0 0.0
    %2504 = vmatpush1.xpose.msra.mxu0 0.0
    %2505 = vmatprep.subr.mxu0 0.0
    %2506 = vmatpush1.xpose.msra.mxu0 0.0
    %2507 = vmatprep.subr.mxu0 0.0
    %2508 = vmatpush1.xpose.msra.mxu0 0.0
    %2509 = vmatprep.subr.mxu0 0.0
    %2510 = vmatpush1.xpose.msra.mxu0 0.0
    %2511 = vmatprep.mubr.f32.mxu0 0.0
    %2512 = vmatmul.mubr.f32.gmra.mrb[0].mxu0 %v2443
    %v2513 = vpop.f32.mrb[0].mxu0
    %v2514 = vadd.f32 0.0, %v2513
    %v2515 = vpop.f32.mrb[0].mxu0
    %2516 = vdwg.mxu0
    %2517 = vrot.lane.b32.xlu0 %v1766, 112
    %v2518 = vpop.permute.xlu0 %2517
    %2519 = vrot.lane.b32.xlu0 %v1766, 80
    %v2520 = vpop.permute.xlu0 %2519
    %v2521 = vsel %vm160, %v2518, 0
    %v2523 = vsel %vm160, %v2520, 0
    %2525 = vmatprep.subr.mxu0 0.0
    %2526 = vmatpush1.xpose.msra.mxu0 %v2523
    %2527 = vmatprep.subr.mxu0 0.0
    %2528 = vmatpush1.xpose.msra.mxu0 0.0
    %2529 = vmatprep.subr.mxu0 0.0
    %2530 = vmatpush1.xpose.msra.mxu0 0.0
    %2531 = vmatprep.subr.mxu0 0.0
    %2532 = vmatpush1.xpose.msra.mxu0 0.0
    %2533 = vmatprep.subr.mxu0 0.0
    %2534 = vmatpush1.xpose.msra.mxu0 0.0
    %2535 = vmatprep.subr.mxu0 0.0
    %2536 = vmatpush1.xpose.msra.mxu0 0.0
    %2537 = vmatprep.subr.mxu0 0.0
    %2538 = vmatpush1.xpose.msra.mxu0 0.0
    %2539 = vmatprep.subr.mxu0 0.0
    %2540 = vmatpush1.xpose.msra.mxu0 0.0
    %2541 = vmatprep.subr.mxu0 0.0
    %2542 = vmatpush1.xpose.msra.mxu0 0.0
    %2543 = vmatprep.subr.mxu0 0.0
    %2544 = vmatpush1.xpose.msra.mxu0 0.0
    %2545 = vmatprep.subr.mxu0 0.0
    %2546 = vmatpush1.xpose.msra.mxu0 0.0
    %2547 = vmatprep.subr.mxu0 0.0
    %2548 = vmatpush1.xpose.msra.mxu0 0.0
    %2549 = vmatprep.subr.mxu0 0.0
    %2550 = vmatpush1.xpose.msra.mxu0 0.0
    %2551 = vmatprep.subr.mxu0 0.0
    %2552 = vmatpush1.xpose.msra.mxu0 0.0
    %2553 = vmatprep.subr.mxu0 0.0
    %2554 = vmatpush1.xpose.msra.mxu0 0.0
    %2555 = vmatprep.subr.mxu0 0.0
    %2556 = vmatpush1.xpose.msra.mxu0 0.0
    %2557 = vmatprep.subr.mxu0 0.0
    %2558 = vmatpush1.xpose.msra.mxu0 0.0
    %2559 = vmatprep.subr.mxu0 0.0
    %2560 = vmatpush1.xpose.msra.mxu0 0.0
    %2561 = vmatprep.subr.mxu0 0.0
    %2562 = vmatpush1.xpose.msra.mxu0 0.0
    %2563 = vmatprep.subr.mxu0 0.0
    %2564 = vmatpush1.xpose.msra.mxu0 0.0
    %2565 = vmatprep.subr.mxu0 0.0
    %2566 = vmatpush1.xpose.msra.mxu0 0.0
    %2567 = vmatprep.subr.mxu0 0.0
    %2568 = vmatpush1.xpose.msra.mxu0 0.0
    %2569 = vmatprep.subr.mxu0 0.0
    %2570 = vmatpush1.xpose.msra.mxu0 0.0
    %2571 = vmatprep.subr.mxu0 0.0
    %2572 = vmatpush1.xpose.msra.mxu0 0.0
    %2573 = vmatprep.subr.mxu0 0.0
    %2574 = vmatpush1.xpose.msra.mxu0 0.0
    %2575 = vmatprep.subr.mxu0 0.0
    %2576 = vmatpush1.xpose.msra.mxu0 0.0
    %2577 = vmatprep.subr.mxu0 0.0
    %2578 = vmatpush1.xpose.msra.mxu0 0.0
    %2579 = vmatprep.subr.mxu0 0.0
    %2580 = vmatpush1.xpose.msra.mxu0 0.0
    %2581 = vmatprep.subr.mxu0 0.0
    %2582 = vmatpush1.xpose.msra.mxu0 0.0
    %2583 = vmatprep.subr.mxu0 0.0
    %2584 = vmatpush1.xpose.msra.mxu0 0.0
    %2585 = vmatprep.subr.mxu0 0.0
    %2586 = vmatpush1.xpose.msra.mxu0 0.0
    %2587 = vmatprep.subr.mxu0 0.0
    %2588 = vmatpush1.xpose.msra.mxu0 0.0
    %2589 = vmatprep.mubr.f32.mxu0 0.0
    %2590 = vmatmul.mubr.f32.gmra.mrb[0].mxu0 %v2521
    %v2591 = vpop.f32.mrb[0].mxu0
    %v2592 = vadd.f32 0.0, %v2591
    %v2593 = vpop.f32.mrb[0].mxu0
    %2594 = vdwg.mxu0
    %v2595 = vsel %vm160, %v2514, -inf
    %2596 = vmax.xlane.f32.xlu0 %v2595
    %v2597 = vpop.xlane.xlu0 %2596
    %v2598 = vsel %vm160, %v2592, -inf
    %2599 = vmax.xlane.f32.xlu0 %v2598
    %v2600 = vpop.xlane.xlu0 %2599
    %v2601 = vsub.f32 %v2514, %v2597
    %v2602 = vsub.f32 %v2592, %v2600
    %v2603 = vmul.f32 %v2601, 1.442695
    %v2604 = vpow.pop %v2603
    %v2605 = vmul.f32 %v2602, 1.442695
    %v2606 = vpow.pop %v2605
    %v2607 = vsel %vm160, %v2604, 0.0
    %2608 = vadd.xlane.f32.xlu0 %v2607
    %v2609 = vpop.xlane.xlu0 %2608
    %v2610 = vsel %vm160, %v2606, 0.0
    %2611 = vadd.xlane.f32.xlu0 %v2610
    %v2612 = vpop.xlane.xlu0 %2611
    %v2613 = vrcp.pop %v2609
    %v2614 = vrcp.pop %v2612
    %v2615 = vmul.f32 %v2609, %v2613
    %v2616 = vmul.f32 %v2612, %v2614
    %v2617 = vsub.f32 2.0, %v2615
    %v2618 = vsub.f32 2.0, %v2616
    %v2619 = vmul.f32 %v2613, %v2617
    %v2620 = vmul.f32 %v2614, %v2618
    %v2621 = vmul.f32 %v2604, %v2619
    %v2622 = vmul.f32 %v2606, %v2620
    %2623 = vrot.lane.b32.xlu0 %v1761, 48
    %v2624 = vpop.permute.xlu0 %2623
    %v2627 = vsel %vm160, %v2621, 0
    %2629 = vmatprep.subr.mxu0 0.0
    %2630 = vmatpush1.msra.mxu0 %v2624
    %2631 = vmatprep.subr.mxu0 0.0
    %2632 = vmatpush1.msra.mxu0 0.0
    %2633 = vmatprep.subr.mxu0 0.0
    %2634 = vmatpush1.msra.mxu0 0.0
    %2635 = vmatprep.subr.mxu0 0.0
    %2636 = vmatpush1.msra.mxu0 0.0
    %2637 = vmatprep.subr.mxu0 0.0
    %2638 = vmatpush1.msra.mxu0 0.0
    %2639 = vmatprep.subr.mxu0 0.0
    %2640 = vmatpush1.msra.mxu0 0.0
    %2641 = vmatprep.subr.mxu0 0.0
    %2642 = vmatpush1.msra.mxu0 0.0
    %2643 = vmatprep.subr.mxu0 0.0
    %2644 = vmatpush1.msra.mxu0 0.0
    %2645 = vmatprep.subr.mxu0 0.0
    %2646 = vmatpush1.msra.mxu0 0.0
    %2647 = vmatprep.subr.mxu0 0.0
    %2648 = vmatpush1.msra.mxu0 0.0
    %2649 = vmatprep.subr.mxu0 0.0
    %2650 = vmatpush1.msra.mxu0 0.0
    %2651 = vmatprep.subr.mxu0 0.0
    %2652 = vmatpush1.msra.mxu0 0.0
    %2653 = vmatprep.subr.mxu0 0.0
    %2654 = vmatpush1.msra.mxu0 0.0
    %2655 = vmatprep.subr.mxu0 0.0
    %2656 = vmatpush1.msra.mxu0 0.0
    %2657 = vmatprep.subr.mxu0 0.0
    %2658 = vmatpush1.msra.mxu0 0.0
    %2659 = vmatprep.subr.mxu0 0.0
    %2660 = vmatpush1.msra.mxu0 0.0
    %2661 = vmatprep.subr.mxu0 0.0
    %2662 = vmatpush1.msra.mxu0 0.0
    %2663 = vmatprep.subr.mxu0 0.0
    %2664 = vmatpush1.msra.mxu0 0.0
    %2665 = vmatprep.subr.mxu0 0.0
    %2666 = vmatpush1.msra.mxu0 0.0
    %2667 = vmatprep.subr.mxu0 0.0
    %2668 = vmatpush1.msra.mxu0 0.0
    %2669 = vmatprep.subr.mxu0 0.0
    %2670 = vmatpush1.msra.mxu0 0.0
    %2671 = vmatprep.subr.mxu0 0.0
    %2672 = vmatpush1.msra.mxu0 0.0
    %2673 = vmatprep.subr.mxu0 0.0
    %2674 = vmatpush1.msra.mxu0 0.0
    %2675 = vmatprep.subr.mxu0 0.0
    %2676 = vmatpush1.msra.mxu0 0.0
    %2677 = vmatprep.subr.mxu0 0.0
    %2678 = vmatpush1.msra.mxu0 0.0
    %2679 = vmatprep.subr.mxu0 0.0
    %2680 = vmatpush1.msra.mxu0 0.0
    %2681 = vmatprep.subr.mxu0 0.0
    %2682 = vmatpush1.msra.mxu0 0.0
    %2683 = vmatprep.subr.mxu0 0.0
    %2684 = vmatpush1.msra.mxu0 0.0
    %2685 = vmatprep.subr.mxu0 0.0
    %2686 = vmatpush1.msra.mxu0 0.0
    %2687 = vmatprep.subr.mxu0 0.0
    %2688 = vmatpush1.msra.mxu0 0.0
    %2689 = vmatprep.subr.mxu0 0.0
    %2690 = vmatpush1.msra.mxu0 0.0
    %2691 = vmatprep.subr.mxu0 0.0
    %2692 = vmatpush1.msra.mxu0 0.0
    %2693 = vmatprep.mubr.f32.mxu0 0.0
    %2694 = vmatmul.mubr.f32.gmra.mrb[0].mxu0 %v2627
    %v2695 = vpop.f32.mrb[0].mxu0
    %v2696 = vadd.f32 0.0, %v2695
    %v2697 = vpop.f32.mrb[0].mxu0
    %2698 = vdwg.mxu0
    %2699 = vrot.lane.b32.xlu0 %v1766, 48
    %v2700 = vpop.permute.xlu0 %2699
    %v2703 = vsel %vm160, %v2622, 0
    %2705 = vmatprep.subr.mxu0 0.0
    %2706 = vmatpush1.msra.mxu0 %v2700
    %2707 = vmatprep.subr.mxu0 0.0
    %2708 = vmatpush1.msra.mxu0 0.0
    %2709 = vmatprep.subr.mxu0 0.0
    %2710 = vmatpush1.msra.mxu0 0.0
    %2711 = vmatprep.subr.mxu0 0.0
    %2712 = vmatpush1.msra.mxu0 0.0
    %2713 = vmatprep.subr.mxu0 0.0
    %2714 = vmatpush1.msra.mxu0 0.0
    %2715 = vmatprep.subr.mxu0 0.0
    %2716 = vmatpush1.msra.mxu0 0.0
    %2717 = vmatprep.subr.mxu0 0.0
    %2718 = vmatpush1.msra.mxu0 0.0
    %2719 = vmatprep.subr.mxu0 0.0
    %2720 = vmatpush1.msra.mxu0 0.0
    %2721 = vmatprep.subr.mxu0 0.0
    %2722 = vmatpush1.msra.mxu0 0.0
    %2723 = vmatprep.subr.mxu0 0.0
    %2724 = vmatpush1.msra.mxu0 0.0
    %2725 = vmatprep.subr.mxu0 0.0
    %2726 = vmatpush1.msra.mxu0 0.0
    %2727 = vmatprep.subr.mxu0 0.0
    %2728 = vmatpush1.msra.mxu0 0.0
    %2729 = vmatprep.subr.mxu0 0.0
    %2730 = vmatpush1.msra.mxu0 0.0
    %2731 = vmatprep.subr.mxu0 0.0
    %2732 = vmatpush1.msra.mxu0 0.0
    %2733 = vmatprep.subr.mxu0 0.0
    %2734 = vmatpush1.msra.mxu0 0.0
    %2735 = vmatprep.subr.mxu0 0.0
    %2736 = vmatpush1.msra.mxu0 0.0
    %2737 = vmatprep.subr.mxu0 0.0
    %2738 = vmatpush1.msra.mxu0 0.0
    %2739 = vmatprep.subr.mxu0 0.0
    %2740 = vmatpush1.msra.mxu0 0.0
    %2741 = vmatprep.subr.mxu0 0.0
    %2742 = vmatpush1.msra.mxu0 0.0
    %2743 = vmatprep.subr.mxu0 0.0
    %2744 = vmatpush1.msra.mxu0 0.0
    %2745 = vmatprep.subr.mxu0 0.0
    %2746 = vmatpush1.msra.mxu0 0.0
    %2747 = vmatprep.subr.mxu0 0.0
    %2748 = vmatpush1.msra.mxu0 0.0
    %2749 = vmatprep.subr.mxu0 0.0
    %2750 = vmatpush1.msra.mxu0 0.0
    %2751 = vmatprep.subr.mxu0 0.0
    %2752 = vmatpush1.msra.mxu0 0.0
    %2753 = vmatprep.subr.mxu0 0.0
    %2754 = vmatpush1.msra.mxu0 0.0
    %2755 = vmatprep.subr.mxu0 0.0
    %2756 = vmatpush1.msra.mxu0 0.0
    %2757 = vmatprep.subr.mxu0 0.0
    %2758 = vmatpush1.msra.mxu0 0.0
    %2759 = vmatprep.subr.mxu0 0.0
    %2760 = vmatpush1.msra.mxu0 0.0
    %2761 = vmatprep.subr.mxu0 0.0
    %2762 = vmatpush1.msra.mxu0 0.0
    %2763 = vmatprep.subr.mxu0 0.0
    %2764 = vmatpush1.msra.mxu0 0.0
    %2765 = vmatprep.subr.mxu0 0.0
    %2766 = vmatpush1.msra.mxu0 0.0
    %2767 = vmatprep.subr.mxu0 0.0
    %2768 = vmatpush1.msra.mxu0 0.0
    %2769 = vmatprep.mubr.f32.mxu0 0.0
    %2770 = vmatmul.mubr.f32.gmra.mrb[0].mxu0 %v2703
    %v2771 = vpop.f32.mrb[0].mxu0
    %v2772 = vadd.f32 0.0, %v2771
    %v2773 = vpop.f32.mrb[0].mxu0
    %2774 = vdwg.mxu0
    %2775 = vrot.lane.b32.xlu0 %v1761, 104
    %v2776 = vpop.permute.xlu0 %2775
    %2777 = vrot.lane.b32.xlu0 %v1761, 72
    %v2778 = vpop.permute.xlu0 %2777
    %v2779 = vsel %vm160, %v2776, 0
    %v2781 = vsel %vm160, %v2778, 0
    %2783 = vmatprep.subr.mxu0 0.0
    %2784 = vmatpush1.xpose.msra.mxu0 %v2781
    %2785 = vmatprep.subr.mxu0 0.0
    %2786 = vmatpush1.xpose.msra.mxu0 0.0
    %2787 = vmatprep.subr.mxu0 0.0
    %2788 = vmatpush1.xpose.msra.mxu0 0.0
    %2789 = vmatprep.subr.mxu0 0.0
    %2790 = vmatpush1.xpose.msra.mxu0 0.0
    %2791 = vmatprep.subr.mxu0 0.0
    %2792 = vmatpush1.xpose.msra.mxu0 0.0
    %2793 = vmatprep.subr.mxu0 0.0
    %2794 = vmatpush1.xpose.msra.mxu0 0.0
    %2795 = vmatprep.subr.mxu0 0.0
    %2796 = vmatpush1.xpose.msra.mxu0 0.0
    %2797 = vmatprep.subr.mxu0 0.0
    %2798 = vmatpush1.xpose.msra.mxu0 0.0
    %2799 = vmatprep.subr.mxu0 0.0
    %2800 = vmatpush1.xpose.msra.mxu0 0.0
    %2801 = vmatprep.subr.mxu0 0.0
    %2802 = vmatpush1.xpose.msra.mxu0 0.0
    %2803 = vmatprep.subr.mxu0 0.0
    %2804 = vmatpush1.xpose.msra.mxu0 0.0
    %2805 = vmatprep.subr.mxu0 0.0
    %2806 = vmatpush1.xpose.msra.mxu0 0.0
    %2807 = vmatprep.subr.mxu0 0.0
    %2808 = vmatpush1.xpose.msra.mxu0 0.0
    %2809 = vmatprep.subr.mxu0 0.0
    %2810 = vmatpush1.xpose.msra.mxu0 0.0
    %2811 = vmatprep.subr.mxu0 0.0
    %2812 = vmatpush1.xpose.msra.mxu0 0.0
    %2813 = vmatprep.subr.mxu0 0.0
    %2814 = vmatpush1.xpose.msra.mxu0 0.0
    %2815 = vmatprep.subr.mxu0 0.0
    %2816 = vmatpush1.xpose.msra.mxu0 0.0
    %2817 = vmatprep.subr.mxu0 0.0
    %2818 = vmatpush1.xpose.msra.mxu0 0.0
    %2819 = vmatprep.subr.mxu0 0.0
    %2820 = vmatpush1.xpose.msra.mxu0 0.0
    %2821 = vmatprep.subr.mxu0 0.0
    %2822 = vmatpush1.xpose.msra.mxu0 0.0
    %2823 = vmatprep.subr.mxu0 0.0
    %2824 = vmatpush1.xpose.msra.mxu0 0.0
    %2825 = vmatprep.subr.mxu0 0.0
    %2826 = vmatpush1.xpose.msra.mxu0 0.0
    %2827 = vmatprep.subr.mxu0 0.0
    %2828 = vmatpush1.xpose.msra.mxu0 0.0
    %2829 = vmatprep.subr.mxu0 0.0
    %2830 = vmatpush1.xpose.msra.mxu0 0.0
    %2831 = vmatprep.subr.mxu0 0.0
    %2832 = vmatpush1.xpose.msra.mxu0 0.0
    %2833 = vmatprep.subr.mxu0 0.0
    %2834 = vmatpush1.xpose.msra.mxu0 0.0
    %2835 = vmatprep.subr.mxu0 0.0
    %2836 = vmatpush1.xpose.msra.mxu0 0.0
    %2837 = vmatprep.subr.mxu0 0.0
    %2838 = vmatpush1.xpose.msra.mxu0 0.0
    %2839 = vmatprep.subr.mxu0 0.0
    %2840 = vmatpush1.xpose.msra.mxu0 0.0
    %2841 = vmatprep.subr.mxu0 0.0
    %2842 = vmatpush1.xpose.msra.mxu0 0.0
    %2843 = vmatprep.subr.mxu0 0.0
    %2844 = vmatpush1.xpose.msra.mxu0 0.0
    %2845 = vmatprep.subr.mxu0 0.0
    %2846 = vmatpush1.xpose.msra.mxu0 0.0
    %2847 = vmatprep.mubr.f32.mxu0 0.0
    %2848 = vmatmul.mubr.f32.gmra.mrb[0].mxu0 %v2779
    %v2849 = vpop.f32.mrb[0].mxu0
    %v2850 = vadd.f32 0.0, %v2849
    %v2851 = vpop.f32.mrb[0].mxu0
    %2852 = vdwg.mxu0
    %2853 = vrot.lane.b32.xlu0 %v1766, 104
    %v2854 = vpop.permute.xlu0 %2853
    %2855 = vrot.lane.b32.xlu0 %v1766, 72
    %v2856 = vpop.permute.xlu0 %2855
    %v2857 = vsel %vm160, %v2854, 0
    %v2859 = vsel %vm160, %v2856, 0
    %2861 = vmatprep.subr.mxu0 0.0
    %2862 = vmatpush1.xpose.msra.mxu0 %v2859
    %2863 = vmatprep.subr.mxu0 0.0
    %2864 = vmatpush1.xpose.msra.mxu0 0.0
    %2865 = vmatprep.subr.mxu0 0.0
    %2866 = vmatpush1.xpose.msra.mxu0 0.0
    %2867 = vmatprep.subr.mxu0 0.0
    %2868 = vmatpush1.xpose.msra.mxu0 0.0
    %2869 = vmatprep.subr.mxu0 0.0
    %2870 = vmatpush1.xpose.msra.mxu0 0.0
    %2871 = vmatprep.subr.mxu0 0.0
    %2872 = vmatpush1.xpose.msra.mxu0 0.0
    %2873 = vmatprep.subr.mxu0 0.0
    %2874 = vmatpush1.xpose.msra.mxu0 0.0
    %2875 = vmatprep.subr.mxu0 0.0
    %2876 = vmatpush1.xpose.msra.mxu0 0.0
    %2877 = vmatprep.subr.mxu0 0.0
    %2878 = vmatpush1.xpose.msra.mxu0 0.0
    %2879 = vmatprep.subr.mxu0 0.0
    %2880 = vmatpush1.xpose.msra.mxu0 0.0
    %2881 = vmatprep.subr.mxu0 0.0
    %2882 = vmatpush1.xpose.msra.mxu0 0.0
    %2883 = vmatprep.subr.mxu0 0.0
    %2884 = vmatpush1.xpose.msra.mxu0 0.0
    %2885 = vmatprep.subr.mxu0 0.0
    %2886 = vmatpush1.xpose.msra.mxu0 0.0
    %2887 = vmatprep.subr.mxu0 0.0
    %2888 = vmatpush1.xpose.msra.mxu0 0.0
    %2889 = vmatprep.subr.mxu0 0.0
    %2890 = vmatpush1.xpose.msra.mxu0 0.0
    %2891 = vmatprep.subr.mxu0 0.0
    %2892 = vmatpush1.xpose.msra.mxu0 0.0
    %2893 = vmatprep.subr.mxu0 0.0
    %2894 = vmatpush1.xpose.msra.mxu0 0.0
    %2895 = vmatprep.subr.mxu0 0.0
    %2896 = vmatpush1.xpose.msra.mxu0 0.0
    %2897 = vmatprep.subr.mxu0 0.0
    %2898 = vmatpush1.xpose.msra.mxu0 0.0
    %2899 = vmatprep.subr.mxu0 0.0
    %2900 = vmatpush1.xpose.msra.mxu0 0.0
    %2901 = vmatprep.subr.mxu0 0.0
    %2902 = vmatpush1.xpose.msra.mxu0 0.0
    %2903 = vmatprep.subr.mxu0 0.0
    %2904 = vmatpush1.xpose.msra.mxu0 0.0
    %2905 = vmatprep.subr.mxu0 0.0
    %2906 = vmatpush1.xpose.msra.mxu0 0.0
    %2907 = vmatprep.subr.mxu0 0.0
    %2908 = vmatpush1.xpose.msra.mxu0 0.0
    %2909 = vmatprep.subr.mxu0 0.0
    %2910 = vmatpush1.xpose.msra.mxu0 0.0
    %2911 = vmatprep.subr.mxu0 0.0
    %2912 = vmatpush1.xpose.msra.mxu0 0.0
    %2913 = vmatprep.subr.mxu0 0.0
    %2914 = vmatpush1.xpose.msra.mxu0 0.0
    %2915 = vmatprep.subr.mxu0 0.0
    %2916 = vmatpush1.xpose.msra.mxu0 0.0
    %2917 = vmatprep.subr.mxu0 0.0
    %2918 = vmatpush1.xpose.msra.mxu0 0.0
    %2919 = vmatprep.subr.mxu0 0.0
    %2920 = vmatpush1.xpose.msra.mxu0 0.0
    %2921 = vmatprep.subr.mxu0 0.0
    %2922 = vmatpush1.xpose.msra.mxu0 0.0
    %2923 = vmatprep.subr.mxu0 0.0
    %2924 = vmatpush1.xpose.msra.mxu0 0.0
    %2925 = vmatprep.mubr.f32.mxu0 0.0
    %2926 = vmatmul.mubr.f32.gmra.mrb[0].mxu0 %v2857
    %v2927 = vpop.f32.mrb[0].mxu0
    %v2928 = vadd.f32 0.0, %v2927
    %v2929 = vpop.f32.mrb[0].mxu0
    %2930 = vdwg.mxu0
    %v2931 = vsel %vm160, %v2850, -inf
    %2932 = vmax.xlane.f32.xlu0 %v2931
    %v2933 = vpop.xlane.xlu0 %2932
    %v2934 = vsel %vm160, %v2928, -inf
    %2935 = vmax.xlane.f32.xlu0 %v2934
    %v2936 = vpop.xlane.xlu0 %2935
    %v2937 = vsub.f32 %v2850, %v2933
    %v2938 = vsub.f32 %v2928, %v2936
    %v2939 = vmul.f32 %v2937, 1.442695
    %v2940 = vpow.pop %v2939
    %v2941 = vmul.f32 %v2938, 1.442695
    %v2942 = vpow.pop %v2941
    %v2943 = vsel %vm160, %v2940, 0.0
    %2944 = vadd.xlane.f32.xlu0 %v2943
    %v2945 = vpop.xlane.xlu0 %2944
    %v2946 = vsel %vm160, %v2942, 0.0
    %2947 = vadd.xlane.f32.xlu0 %v2946
    %v2948 = vpop.xlane.xlu0 %2947
    %v2949 = vrcp.pop %v2945
    %v2950 = vrcp.pop %v2948
    %v2951 = vmul.f32 %v2945, %v2949
    %v2952 = vmul.f32 %v2948, %v2950
    %v2953 = vsub.f32 2.0, %v2951
    %v2954 = vsub.f32 2.0, %v2952
    %v2955 = vmul.f32 %v2949, %v2953
    %v2956 = vmul.f32 %v2950, %v2954
    %v2957 = vmul.f32 %v2940, %v2955
    %v2958 = vmul.f32 %v2942, %v2956
    %2959 = vrot.lane.b32.xlu0 %v1761, 40
    %v2960 = vpop.permute.xlu0 %2959
    %v2963 = vsel %vm160, %v2957, 0
    %2965 = vmatprep.subr.mxu0 0.0
    %2966 = vmatpush1.msra.mxu0 %v2960
    %2967 = vmatprep.subr.mxu0 0.0
    %2968 = vmatpush1.msra.mxu0 0.0
    %2969 = vmatprep.subr.mxu0 0.0
    %2970 = vmatpush1.msra.mxu0 0.0
    %2971 = vmatprep.subr.mxu0 0.0
    %2972 = vmatpush1.msra.mxu0 0.0
    %2973 = vmatprep.subr.mxu0 0.0
    %2974 = vmatpush1.msra.mxu0 0.0
    %2975 = vmatprep.subr.mxu0 0.0
    %2976 = vmatpush1.msra.mxu0 0.0
    %2977 = vmatprep.subr.mxu0 0.0
    %2978 = vmatpush1.msra.mxu0 0.0
    %2979 = vmatprep.subr.mxu0 0.0
    %2980 = vmatpush1.msra.mxu0 0.0
    %2981 = vmatprep.subr.mxu0 0.0
    %2982 = vmatpush1.msra.mxu0 0.0
    %2983 = vmatprep.subr.mxu0 0.0
    %2984 = vmatpush1.msra.mxu0 0.0
    %2985 = vmatprep.subr.mxu0 0.0
    %2986 = vmatpush1.msra.mxu0 0.0
    %2987 = vmatprep.subr.mxu0 0.0
    %2988 = vmatpush1.msra.mxu0 0.0
    %2989 = vmatprep.subr.mxu0 0.0
    %2990 = vmatpush1.msra.mxu0 0.0
    %2991 = vmatprep.subr.mxu0 0.0
    %2992 = vmatpush1.msra.mxu0 0.0
    %2993 = vmatprep.subr.mxu0 0.0
    %2994 = vmatpush1.msra.mxu0 0.0
    %2995 = vmatprep.subr.mxu0 0.0
    %2996 = vmatpush1.msra.mxu0 0.0
    %2997 = vmatprep.subr.mxu0 0.0
    %2998 = vmatpush1.msra.mxu0 0.0
    %2999 = vmatprep.subr.mxu0 0.0
    %3000 = vmatpush1.msra.mxu0 0.0
    %3001 = vmatprep.subr.mxu0 0.0
    %3002 = vmatpush1.msra.mxu0 0.0
    %3003 = vmatprep.subr.mxu0 0.0
    %3004 = vmatpush1.msra.mxu0 0.0
    %3005 = vmatprep.subr.mxu0 0.0
    %3006 = vmatpush1.msra.mxu0 0.0
    %3007 = vmatprep.subr.mxu0 0.0
    %3008 = vmatpush1.msra.mxu0 0.0
    %3009 = vmatprep.subr.mxu0 0.0
    %3010 = vmatpush1.msra.mxu0 0.0
    %3011 = vmatprep.subr.mxu0 0.0
    %3012 = vmatpush1.msra.mxu0 0.0
    %3013 = vmatprep.subr.mxu0 0.0
    %3014 = vmatpush1.msra.mxu0 0.0
    %3015 = vmatprep.subr.mxu0 0.0
    %3016 = vmatpush1.msra.mxu0 0.0
    %3017 = vmatprep.subr.mxu0 0.0
    %3018 = vmatpush1.msra.mxu0 0.0
    %3019 = vmatprep.subr.mxu0 0.0
    %3020 = vmatpush1.msra.mxu0 0.0
    %3021 = vmatprep.subr.mxu0 0.0
    %3022 = vmatpush1.msra.mxu0 0.0
    %3023 = vmatprep.subr.mxu0 0.0
    %3024 = vmatpush1.msra.mxu0 0.0
    %3025 = vmatprep.subr.mxu0 0.0
    %3026 = vmatpush1.msra.mxu0 0.0
    %3027 = vmatprep.subr.mxu0 0.0
    %3028 = vmatpush1.msra.mxu0 0.0
    %3029 = vmatprep.mubr.f32.mxu0 0.0
    %3030 = vmatmul.mubr.f32.gmra.mrb[0].mxu0 %v2963
    %v3031 = vpop.f32.mrb[0].mxu0
    %v3032 = vadd.f32 0.0, %v3031
    %v3033 = vpop.f32.mrb[0].mxu0
    %3034 = vdwg.mxu0
    %3035 = vrot.lane.b32.xlu0 %v1766, 40
    %v3036 = vpop.permute.xlu0 %3035
    %v3039 = vsel %vm160, %v2958, 0
    %3041 = vmatprep.subr.mxu0 0.0
    %3042 = vmatpush1.msra.mxu0 %v3036
    %3043 = vmatprep.subr.mxu0 0.0
    %3044 = vmatpush1.msra.mxu0 0.0
    %3045 = vmatprep.subr.mxu0 0.0
    %3046 = vmatpush1.msra.mxu0 0.0
    %3047 = vmatprep.subr.mxu0 0.0
    %3048 = vmatpush1.msra.mxu0 0.0
    %3049 = vmatprep.subr.mxu0 0.0
    %3050 = vmatpush1.msra.mxu0 0.0
    %3051 = vmatprep.subr.mxu0 0.0
    %3052 = vmatpush1.msra.mxu0 0.0
    %3053 = vmatprep.subr.mxu0 0.0
    %3054 = vmatpush1.msra.mxu0 0.0
    %3055 = vmatprep.subr.mxu0 0.0
    %3056 = vmatpush1.msra.mxu0 0.0
    %3057 = vmatprep.subr.mxu0 0.0
    %3058 = vmatpush1.msra.mxu0 0.0
    %3059 = vmatprep.subr.mxu0 0.0
    %3060 = vmatpush1.msra.mxu0 0.0
    %3061 = vmatprep.subr.mxu0 0.0
    %3062 = vmatpush1.msra.mxu0 0.0
    %3063 = vmatprep.subr.mxu0 0.0
    %3064 = vmatpush1.msra.mxu0 0.0
    %3065 = vmatprep.subr.mxu0 0.0
    %3066 = vmatpush1.msra.mxu0 0.0
    %3067 = vmatprep.subr.mxu0 0.0
    %3068 = vmatpush1.msra.mxu0 0.0
    %3069 = vmatprep.subr.mxu0 0.0
    %3070 = vmatpush1.msra.mxu0 0.0
    %3071 = vmatprep.subr.mxu0 0.0
    %3072 = vmatpush1.msra.mxu0 0.0
    %3073 = vmatprep.subr.mxu0 0.0
    %3074 = vmatpush1.msra.mxu0 0.0
    %3075 = vmatprep.subr.mxu0 0.0
    %3076 = vmatpush1.msra.mxu0 0.0
    %3077 = vmatprep.subr.mxu0 0.0
    %3078 = vmatpush1.msra.mxu0 0.0
    %3079 = vmatprep.subr.mxu0 0.0
    %3080 = vmatpush1.msra.mxu0 0.0
    %3081 = vmatprep.subr.mxu0 0.0
    %3082 = vmatpush1.msra.mxu0 0.0
    %3083 = vmatprep.subr.mxu0 0.0
    %3084 = vmatpush1.msra.mxu0 0.0
    %3085 = vmatprep.subr.mxu0 0.0
    %3086 = vmatpush1.msra.mxu0 0.0
    %3087 = vmatprep.subr.mxu0 0.0
    %3088 = vmatpush1.msra.mxu0 0.0
    %3089 = vmatprep.subr.mxu0 0.0
    %3090 = vmatpush1.msra.mxu0 0.0
    %3091 = vmatprep.subr.mxu0 0.0
    %3092 = vmatpush1.msra.mxu0 0.0
    %3093 = vmatprep.subr.mxu0 0.0
    %3094 = vmatpush1.msra.mxu0 0.0
    %3095 = vmatprep.subr.mxu0 0.0
    %3096 = vmatpush1.msra.mxu0 0.0
    %3097 = vmatprep.subr.mxu0 0.0
    %3098 = vmatpush1.msra.mxu0 0.0
    %3099 = vmatprep.subr.mxu0 0.0
    %3100 = vmatpush1.msra.mxu0 0.0
    %3101 = vmatprep.subr.mxu0 0.0
    %3102 = vmatpush1.msra.mxu0 0.0
    %3103 = vmatprep.subr.mxu0 0.0
    %3104 = vmatpush1.msra.mxu0 0.0
    %3105 = vmatprep.mubr.f32.mxu0 0.0
    %3106 = vmatmul.mubr.f32.gmra.mrb[0].mxu0 %v3039
    %v3107 = vpop.f32.mrb[0].mxu0
    %v3108 = vadd.f32 0.0, %v3107
    %v3109 = vpop.f32.mrb[0].mxu0
    %3110 = vdwg.mxu0
    %3113 = vrot.lane.b32.xlu0 %v2360, 8
    %v3114 = vpop.permute.xlu0 %3113
    %3115 = vrot.lane.b32.xlu0 %v2436, 8
    %v3116 = vpop.permute.xlu0 %3115
    %3121 = vrot.lane.b32.xlu0 %v2696, 16
    %v3122 = vpop.permute.xlu0 %3121
    %3123 = vrot.lane.b32.xlu0 %v2772, 16
    %v3124 = vpop.permute.xlu0 %3123
    %3129 = vrot.lane.b32.xlu0 %v3032, 24
    %v3130 = vpop.permute.xlu0 %3129
    %3131 = vrot.lane.b32.xlu0 %v3108, 24
    %v3132 = vpop.permute.xlu0 %3131
    %v3135 = vsel %vm160, %v2024, %v3114
    %v3136 = vsel %vm160, %v2100, %v3116
    %v3137 = vsel %vm1526, %v3135, %v3122
    %v3138 = vsel %vm1526, %v3136, %v3124
    %v3139 = vsel %vm1529, %v3137, %v3130
    %v3140 = vsel %vm1529, %v3138, %v3132
    %s3141 = scalar_lea.vmem [#allocation5], 32
    %v3142 = vld [vmem:[%s3141] sm:$0xff]
    %v3143 = vld [vmem:[%s3141 + $0x8] sm:$0xff]
    %v3144 = vld [vmem:[%s3141 + $0x10] sm:$0xff]
    %v3145 = vld [vmem:[%s3141 + $0x18] sm:$0xff]
    %s3146 = scalar_lea.vmem %s4, 1
    %v3147 = vld [vmem:[%s3146] sm:$0x1]
    %v3149 = vlaneseq
    %v3150 = vshrl.u32 %v3149, 7
    %v3151 = vsub.s32 0, %v3150
    %v3152 = vrot.slane %v3147, %v3151
    %v3155 = vsel %vm75, %v3139, 0
    %v3158 = vsel %vm75, %v3140, 0
    %3160 = vmatprep.subr.mxu0 0.0
    %3161 = vmatpush1.msra.mxu0 %v3142
    %3162 = vmatprep.subr.mxu0 0.0
    %3163 = vmatpush1.msra.mxu0 %v3143
    %3164 = vmatprep.subr.mxu0 0.0
    %3165 = vmatpush1.msra.mxu0 %v3144
    %3166 = vmatprep.subr.mxu0 0.0
    %3167 = vmatpush1.msra.mxu0 %v3145
    %3168 = vmatprep.subr.mxu0 0.0
    %3169 = vmatpush1.msra.mxu0 0.0
    %3170 = vmatprep.subr.mxu0 0.0
    %3171 = vmatpush1.msra.mxu0 0.0
    %3172 = vmatprep.subr.mxu0 0.0
    %3173 = vmatpush1.msra.mxu0 0.0
    %3174 = vmatprep.subr.mxu0 0.0
    %3175 = vmatpush1.msra.mxu0 0.0
    %3176 = vmatprep.subr.mxu0 0.0
    %3177 = vmatpush1.msra.mxu0 0.0
    %3178 = vmatprep.subr.mxu0 0.0
    %3179 = vmatpush1.msra.mxu0 0.0
    %3180 = vmatprep.subr.mxu0 0.0
    %3181 = vmatpush1.msra.mxu0 0.0
    %3182 = vmatprep.subr.mxu0 0.0
    %3183 = vmatpush1.msra.mxu0 0.0
    %3184 = vmatprep.subr.mxu0 0.0
    %3185 = vmatpush1.msra.mxu0 0.0
    %3186 = vmatprep.subr.mxu0 0.0
    %3187 = vmatpush1.msra.mxu0 0.0
    %3188 = vmatprep.subr.mxu0 0.0
    %3189 = vmatpush1.msra.mxu0 0.0
    %3190 = vmatprep.subr.mxu0 0.0
    %3191 = vmatpush1.msra.mxu0 0.0
    %3192 = vmatprep.subr.mxu0 0.0
    %3193 = vmatpush1.msra.mxu0 0.0
    %3194 = vmatprep.subr.mxu0 0.0
    %3195 = vmatpush1.msra.mxu0 0.0
    %3196 = vmatprep.subr.mxu0 0.0
    %3197 = vmatpush1.msra.mxu0 0.0
    %3198 = vmatprep.subr.mxu0 0.0
    %3199 = vmatpush1.msra.mxu0 0.0
    %3200 = vmatprep.subr.mxu0 0.0
    %3201 = vmatpush1.msra.mxu0 0.0
    %3202 = vmatprep.subr.mxu0 0.0
    %3203 = vmatpush1.msra.mxu0 0.0
    %3204 = vmatprep.subr.mxu0 0.0
    %3205 = vmatpush1.msra.mxu0 0.0
    %3206 = vmatprep.subr.mxu0 0.0
    %3207 = vmatpush1.msra.mxu0 0.0
    %3208 = vmatprep.subr.mxu0 0.0
    %3209 = vmatpush1.msra.mxu0 0.0
    %3210 = vmatprep.subr.mxu0 0.0
    %3211 = vmatpush1.msra.mxu0 0.0
    %3212 = vmatprep.subr.mxu0 0.0
    %3213 = vmatpush1.msra.mxu0 0.0
    %3214 = vmatprep.subr.mxu0 0.0
    %3215 = vmatpush1.msra.mxu0 0.0
    %3216 = vmatprep.subr.mxu0 0.0
    %3217 = vmatpush1.msra.mxu0 0.0
    %3218 = vmatprep.subr.mxu0 0.0
    %3219 = vmatpush1.msra.mxu0 0.0
    %3220 = vmatprep.subr.mxu0 0.0
    %3221 = vmatpush1.msra.mxu0 0.0
    %3222 = vmatprep.subr.mxu0 0.0
    %3223 = vmatpush1.msra.mxu0 0.0
    %3224 = vmatprep.mubr.f32.mxu0 0.0
    %3225 = vmatmul.mubr.f32.gmra.mrb[0].mxu0 %v3155
    %v3226 = vpop.f32.mrb[0].mxu0
    %v3227 = vadd.f32 %v3152, %v3226
    %v3228 = vpop.f32.mrb[0].mxu0
    %3229 = vmatprep.mubr.f32.mxu0 0.0
    %3230 = vmatmul.mubr.f32.gmra.mrb[0].mxu0 %v3158
    %v3231 = vpop.f32.mrb[0].mxu0
    %v3232 = vadd.f32 %v3152, %v3231
    %v3233 = vpop.f32.mrb[0].mxu0
    %3234 = vdwg.mxu0
    %v3235 = vadd.f32 %v1673, %v3227
    %v3236 = vadd.f32 %v1674, %v3232
    %v3237 = vsel %vm75, %v3235, 0.0
    %3238 = vadd.xlane.f32.xlu0 %v3237
    %v3239 = vpop.xlane.xlu0 %3238
    %v3240 = vsel %vm75, %v3236, 0.0
    %3241 = vadd.xlane.f32.xlu0 %v3240
    %v3242 = vpop.xlane.xlu0 %3241
    %v3243 = vmul.f32 %v3239, %v1632
    %v3244 = vmul.f32 %v3242, %v1632
    %v3245 = vmul.f32 %v3235, %v3235
    %v3246 = vmul.f32 %v3236, %v3236
    %v3247 = vsel %vm75, %v3245, 0.0
    %3248 = vadd.xlane.f32.xlu0 %v3247
    %v3249 = vpop.xlane.xlu0 %3248
    %v3250 = vsel %vm75, %v3246, 0.0
    %3251 = vadd.xlane.f32.xlu0 %v3250
    %v3252 = vpop.xlane.xlu0 %3251
    %v3253 = vmul.f32 %v3249, %v1632
    %v3254 = vmul.f32 %v3252, %v1632
    %v3255 = vmul.f32 %v3243, %v3243
    %v3256 = vmul.f32 %v3244, %v3244
    %v3257 = vsub.f32 %v3253, %v3255
    %v3258 = vsub.f32 %v3254, %v3256
    %v3259 = vsub.f32 %v3235, %v3243
    %v3260 = vsub.f32 %v3236, %v3244
    %v3261 = vadd.f32 %v3257, 1e-05
    %v3262 = vadd.f32 %v3258, 1e-05
    %v3263 = vrsqrt.pop %v3261
    %v3264 = vrsqrt.pop %v3262
    %v3265 = vmul.f32 %v3259, %v3263
    %v3266 = vmul.f32 %v3260, %v3264
    %s3267 = scalar_lea.vmem %s5, 1
    %v3268 = vld [vmem:[%s3267] sm:$0x1]
    %v3270 = vlaneseq
    %v3271 = vshrl.u32 %v3270, 7
    %v3272 = vsub.s32 0, %v3271
    %v3273 = vrot.slane %v3268, %v3272
    %v3275 = vmul.f32 %v3265, %v3273
    %v3276 = vmul.f32 %v3266, %v3273
    %s3277 = scalar_lea.vmem %s6, 1
    %v3278 = vld [vmem:[%s3277] sm:$0x1]
    %v3280 = vlaneseq
    %v3281 = vshrl.u32 %v3280, 7
    %v3282 = vsub.s32 0, %v3281
    %v3283 = vrot.slane %v3278, %v3282
    %v3285 = vadd.f32 %v3275, %v3283
    %v3286 = vadd.f32 %v3276, %v3283
    %v3287 = vld [vmem:[%s7] sm:$0xff]
    %v3288 = vld [vmem:[%s7 + $0x8] sm:$0xff]
    %v3289 = vld [vmem:[%s7 + $0x10] sm:$0xff]
    %v3290 = vld [vmem:[%s7 + $0x18] sm:$0xff]
    %v3292 = vsel %vm75, %v3285, 0
    %v3295 = vsel %vm75, %v3286, 0
    %3297 = vmatprep.subr.mxu0 0.0
    %3298 = vmatpush1.msra.mxu0 %v3287
    %3299 = vmatprep.subr.mxu0 0.0
    %3300 = vmatpush1.msra.mxu0 %v3288
    %3301 = vmatprep.subr.mxu0 0.0
    %3302 = vmatpush1.msra.mxu0 %v3289
    %3303 = vmatprep.subr.mxu0 0.0
    %3304 = vmatpush1.msra.mxu0 %v3290
    %3305 = vmatprep.subr.mxu0 0.0
    %3306 = vmatpush1.msra.mxu0 0.0
    %3307 = vmatprep.subr.mxu0 0.0
    %3308 = vmatpush1.msra.mxu0 0.0
    %3309 = vmatprep.subr.mxu0 0.0
    %3310 = vmatpush1.msra.mxu0 0.0
    %3311 = vmatprep.subr.mxu0 0.0
    %3312 = vmatpush1.msra.mxu0 0.0
    %3313 = vmatprep.subr.mxu0 0.0
    %3314 = vmatpush1.msra.mxu0 0.0
    %3315 = vmatprep.subr.mxu0 0.0
    %3316 = vmatpush1.msra.mxu0 0.0
    %3317 = vmatprep.subr.mxu0 0.0
    %3318 = vmatpush1.msra.mxu0 0.0
    %3319 = vmatprep.subr.mxu0 0.0
    %3320 = vmatpush1.msra.mxu0 0.0
    %3321 = vmatprep.subr.mxu0 0.0
    %3322 = vmatpush1.msra.mxu0 0.0
    %3323 = vmatprep.subr.mxu0 0.0
    %3324 = vmatpush1.msra.mxu0 0.0
    %3325 = vmatprep.subr.mxu0 0.0
    %3326 = vmatpush1.msra.mxu0 0.0
    %3327 = vmatprep.subr.mxu0 0.0
    %3328 = vmatpush1.msra.mxu0 0.0
    %3329 = vmatprep.subr.mxu0 0.0
    %3330 = vmatpush1.msra.mxu0 0.0
    %3331 = vmatprep.subr.mxu0 0.0
    %3332 = vmatpush1.msra.mxu0 0.0
    %3333 = vmatprep.subr.mxu0 0.0
    %3334 = vmatpush1.msra.mxu0 0.0
    %3335 = vmatprep.subr.mxu0 0.0
    %3336 = vmatpush1.msra.mxu0 0.0
    %3337 = vmatprep.subr.mxu0 0.0
    %3338 = vmatpush1.msra.mxu0 0.0
    %3339 = vmatprep.subr.mxu0 0.0
    %3340 = vmatpush1.msra.mxu0 0.0
    %3341 = vmatprep.subr.mxu0 0.0
    %3342 = vmatpush1.msra.mxu0 0.0
    %3343 = vmatprep.subr.mxu0 0.0
    %3344 = vmatpush1.msra.mxu0 0.0
    %3345 = vmatprep.subr.mxu0 0.0
    %3346 = vmatpush1.msra.mxu0 0.0
    %3347 = vmatprep.subr.mxu0 0.0
    %3348 = vmatpush1.msra.mxu0 0.0
    %3349 = vmatprep.subr.mxu0 0.0
    %3350 = vmatpush1.msra.mxu0 0.0
    %3351 = vmatprep.subr.mxu0 0.0
    %3352 = vmatpush1.msra.mxu0 0.0
    %3353 = vmatprep.subr.mxu0 0.0
    %3354 = vmatpush1.msra.mxu0 0.0
    %3355 = vmatprep.subr.mxu0 0.0
    %3356 = vmatpush1.msra.mxu0 0.0
    %3357 = vmatprep.subr.mxu0 0.0
    %3358 = vmatpush1.msra.mxu0 0.0
    %3359 = vmatprep.subr.mxu0 0.0
    %3360 = vmatpush1.msra.mxu0 0.0
    %3361 = vmatprep.mubr.f32.mxu0 0.0
    %3362 = vmatmul.mubr.f32.gmra.mrb[0].mxu0 %v3292
    %v3363 = vpop.f32.mrb[0].mxu0
    %v3364 = vadd.f32 0.0, %v3363
    %v3365 = vpop.f32.mrb[0].mxu0
    %3366 = vmatprep.mubr.f32.mxu0 0.0
    %3367 = vmatmul.mubr.f32.gmra.mrb[0].mxu0 %v3295
    %v3368 = vpop.f32.mrb[0].mxu0
    %v3369 = vadd.f32 0.0, %v3368
    %v3370 = vpop.f32.mrb[0].mxu0
    %3371 = vdwg.mxu0
    %vm3372 = vcmask 7168
    %v3373 = vsel %vm3372, %v3364, 0.0
    %v3374 = vrot.slane %v3373, 4
    %v3375 = vadd.f32 %v3373, %v3374
    %v3376 = vrot.slane %v3375, 2
    %v3377 = vadd.f32 %v3375, %v3376
    %v3378 = vrot.slane %v3377, 1
    %v3379 = vadd.f32 %v3377, %v3378
    %v3380 = vsel %vm3372, %v3369, 0.0
    %v3381 = vrot.slane %v3380, 4
    %v3382 = vadd.f32 %v3380, %v3381
    %v3383 = vrot.slane %v3382, 2
    %v3384 = vadd.f32 %v3382, %v3383
    %v3385 = vrot.slane %v3384, 1
    %v3386 = vadd.f32 %v3384, %v3385
    %v3387 = vrcp.pop 8.0
    %v3388 = vmul.f32 %v3379, %v3387
    %v3389 = vmul.f32 %v3386, %v3387
    %v3390 = vld [vmem:[#allocation2] sm:$0x1]
    %v3392 = vlaneseq
    %v3393 = vshrl.u32 %v3392, 7
    %v3394 = vsub.s32 0, %v3393
    %v3395 = vrot.slane %v3390, %v3394
    %v3397 = vadd.f32 %v3388, %v3395
    %v3398 = vadd.f32 %v3389, %v3395
    %v3401 = vrot.slane %v3398, 7
    %vm3402 = vcmask 1041409
    %v3403 = vsel %vm3402, %v3401, %v3397
    %vm3405 = vcmask 1024
    %3406 = vst.msk [vmem:[%s9] sm:$0x3] %vm3405, %v3403
    // Predicated region
    $region46: #{esm_decoder_half.1} parent=1 // pred_check
      _
    $region47: #{esm_decoder_half.1} parent=1 // pred_check_branch
      %3408 = sbr.rel (0) target = $region49
    $region48: #{esm_decoder_half.1} parent=1 // pred_region
      _
    $region49: #{esm_decoder_half.1} parent=1 // pred_fallthru
      _
    // Predicated region
    $region50: #{esm_decoder_half.1} parent=1 // pred_check
      _
    $region51: #{esm_decoder_half.1} parent=1 // pred_check_branch
      %3410 = sbr.rel (0) target = $region53
    $region52: #{esm_decoder_half.1} parent=1 // pred_region
      _
    $region53: #{esm_decoder_half.1} parent=1 // pred_fallthru
      _
    %3411 = vsyncpa [#allocation4], 1
    %3412 = vsyncpa [#allocation6], 1

</llo_original>
